<compile_context>
chip_gen: v5e
topology: v5e:2x2
jax: 0.10.0
libtpu: 0.0.40
codegen_flags: <defaults>
</compile_context>

<pallas_src>
import functools
import math

import jax
import jax.numpy as jnp
from jax import lax
from jax.experimental import pallas as pl
from jax.experimental.pallas import tpu as pltpu

# ----------------------------- small config ---------------------------------
D_MODEL = 32          # d_model (512 in the original)
N_LAYERS = 2          # N       (3   in the original)
HEADS = 4
FEAT_SIZE = 16        # mat2vec feature size (200 in the original)
DIM_FF = 64           # dim_feedforward (2048 in the original)
OUT_DIMS = 3
OUT_HIDDEN = [64, 32, 16, 8]   # ([1024, 512, 256, 128] in the original)
RESOLUTION = 5000
VOCAB = 12            # number of elements (row 0 of cbfv is the zero pad row)
LEAKY_SLOPE = 0.01
LN_EPS = 1e-5


# ------------------------------ Pallas kernel --------------------------------
def _ln(x, g, b):
    mu = jnp.mean(x, axis=-1, keepdims=True)
    xc = x - mu
    var = jnp.mean(xc * xc, axis=-1, keepdims=True)
    return xc * lax.rsqrt(var + LN_EPS) * g + b


def _crabnet_kernel(*refs, batch, seq, heads, n_layers, n_res, attn_scale):
    """Whole CrabNet forward (embedder -> encoder -> masked ResidualNetwork)
    for a (batch*seq, ·) slab, fully VMEM-resident, statically unrolled."""
    it = iter(refs)
    scale_ref = next(it)                 # SMEM (1,1): 2**emb_scaler
    emb_ref = next(it)                   # (M, feat)  gathered cbfv rows
    pe_ref = next(it)                    # (M, d)     pe + ple (already scaled)
    bias_ref = next(it)                  # (B, 1, T)  0 / -1e30 key bias
    hmask_ref = next(it)                 # (M, 1)     hidden mask
    wemb_ref = next(it)                  # (feat, d)
    bemb_ref = next(it)                  # (1, d)
    wq_ref = next(it)                    # (L*H, d, dh)
    wk_ref = next(it)
    wv_ref = next(it)
    bq_ref = next(it)                    # (L*H, 1, dh)
    bk_ref = next(it)
    bv_ref = next(it)
    wo_ref = next(it)                    # (L*H, dh, d)
    bo_ref = next(it)                    # (L, 1, d)
    ln1g_ref = next(it)                  # (L, 1, d)
    ln1b_ref = next(it)
    ff1w_ref = next(it)                  # (L, d, ff)
    ff1b_ref = next(it)                  # (L, 1, ff)
    ff2w_ref = next(it)                  # (L, ff, d)
    ff2b_ref = next(it)                  # (L, 1, d)
    ln2g_ref = next(it)
    ln2b_ref = next(it)
    res_refs = [(next(it), next(it), next(it)) for _ in range(n_res)]
    wout_ref = next(it)                  # (h_last, out_dims)
    bout_ref = next(it)                  # (1, out_dims)
    o_ref = next(it)                     # output (M, out_dims)
    attn_ref = next(it)                  # VMEM scratch (M, d)

    # 1) Embedder epilogue: (cbfv_emb @ W + b) * 2**emb_scaler + (pe + ple)
    x = jnp.dot(emb_ref[...], wemb_ref[...], preferred_element_type=jnp.float32)
    x = (x + bemb_ref[...]) * scale_ref[0, 0] + pe_ref[...]          # (M, d)

    # 2) transformer encoder (post-norm, relu FF), layers/batch/heads unrolled
    for l in range(n_layers):
        for b in range(batch):
            xb = x[b * seq:(b + 1) * seq, :]                          # (T, d)
            bias_b = bias_ref[b]                                      # (1, T)
            acc = None
            for h in range(heads):
                i = l * heads + h
                qh = jnp.dot(xb, wq_ref[i], preferred_element_type=jnp.float32) + bq_ref[i]
                kh = jnp.dot(xb, wk_ref[i], preferred_element_type=jnp.float32) + bk_ref[i]
                vh = jnp.dot(xb, wv_ref[i], preferred_element_type=jnp.float32) + bv_ref[i]
                s = lax.dot_general(qh, kh, (((1,), (1,)), ((), ())),
                                    preferred_element_type=jnp.float32)
                s = s * attn_scale + bias_b                           # (T, T)
                m = jnp.max(s, axis=-1, keepdims=True)
                p = jnp.exp(s - m)
                p = p * pl.reciprocal(jnp.sum(p, axis=-1, keepdims=True), approx=True)
                oh = jnp.dot(p, vh, preferred_element_type=jnp.float32)
                contrib = jnp.dot(oh, wo_ref[i], preferred_element_type=jnp.float32)
                acc = contrib if acc is None else acc + contrib
            attn_ref[pl.ds(b * seq, seq), :] = acc
        attn = attn_ref[...] + bo_ref[l]                              # (M, d)
        h1 = _ln(x + attn, ln1g_ref[l], ln1b_ref[l])
        ff = jnp.dot(h1, ff1w_ref[l], preferred_element_type=jnp.float32) + ff1b_ref[l]
        ff = jnp.maximum(ff, 0.0)
        ff = jnp.dot(ff, ff2w_ref[l], preferred_element_type=jnp.float32) + ff2b_ref[l]
        x = _ln(h1 + ff, ln2g_ref[l], ln2b_ref[l])

    # 3) hidden mask + ResidualNetwork + fc_out
    fea = jnp.where(hmask_ref[...] == 0.0, 0.0, x)
    for (w_ref, b_ref, r_ref) in res_refs:
        y = jnp.dot(fea, w_ref[...], preferred_element_type=jnp.float32) + b_ref[...]
        y = jnp.where(y >= 0.0, y, LEAKY_SLOPE * y)
        fea = y + jnp.dot(fea, r_ref[...], preferred_element_type=jnp.float32)
    out = jnp.dot(fea, wout_ref[...], preferred_element_type=jnp.float32) + bout_ref[...]
    o_ref[...] = out.astype(o_ref.dtype)


# ------------------------------ Pallas wrapper --------------------------------
def _pack_encoder_weights(layers):
    """Stack per-layer encoder weights and split Q/K/V/O per head so the
    kernel never lane-slices activations."""
    d, H = D_MODEL, HEADS
    dh = d // H
    L = len(layers)

    def stack(key):
        return jnp.stack([lp[key] for lp in layers])

    in_w = stack('in_proj_w')              # (L, d, 3d)
    in_b = stack('in_proj_b')              # (L, 3d)

    def per_head_w(w):                     # (L, d, d) -> (L*H, d, dh)
        return w.reshape(L, d, H, dh).transpose(0, 2, 1, 3).reshape(L * H, d, dh)

    def per_head_b(b):                     # (L, d) -> (L*H, 1, dh)
        return b.reshape(L, H, dh).reshape(L * H, 1, dh)

    return {
        'wq': per_head_w(in_w[:, :, 0:d]),
        'wk': per_head_w(in_w[:, :, d:2 * d]),
        'wv': per_head_w(in_w[:, :, 2 * d:3 * d]),
        'bq': per_head_b(in_b[:, 0:d]),
        'bk': per_head_b(in_b[:, d:2 * d]),
        'bv': per_head_b(in_b[:, 2 * d:3 * d]),
        'wo': stack('out_proj_w').reshape(L, H, dh, d).reshape(L * H, dh, d),
        'bo': stack('out_proj_b').reshape(L, 1, d),
        'ln1g': stack('ln1_g').reshape(L, 1, d),
        'ln1b': stack('ln1_b').reshape(L, 1, d),
        'ff1w': stack('ff1_w'),
        'ff1b': stack('ff1_b').reshape(L, 1, DIM_FF),
        'ff2w': stack('ff2_w'),
        'ff2b': stack('ff2_b').reshape(L, 1, d),
        'ln2g': stack('ln2_g').reshape(L, 1, d),
        'ln2b': stack('ln2_b').reshape(L, 1, d),
    }


def crabnet_fused(emb2d, pe2d, key_bias, hmask2d, emb_scale, params):
    """Single fused pallas_call for the whole CrabNet forward (per-token part)."""
    M, _ = emb2d.shape
    B = key_bias.shape[0]
    T = M // B
    d = D_MODEL
    dh = d // HEADS
    n_res = len(params['res_layers'])

    packed = _pack_encoder_weights(params['layers'])

    args = [emb_scale, emb2d, pe2d, key_bias, hmask2d,
            params['fc_mat2vec_w'], params['fc_mat2vec_b'].reshape(1, d),
            packed['wq'], packed['wk'], packed['wv'],
            packed['bq'], packed['bk'], packed['bv'],
            packed['wo'], packed['bo'],
            packed['ln1g'], packed['ln1b'],
            packed['ff1w'], packed['ff1b'],
            packed['ff2w'], packed['ff2b'],
            packed['ln2g'], packed['ln2b']]
    for rp in params['res_layers']:
        ko = rp['fc_w'].shape[1]
        args += [rp['fc_w'], rp['fc_b'].reshape(1, ko), rp['res_w']]
    args += [params['fc_out_w'], params['fc_out_b'].reshape(1, OUT_DIMS)]

    vmem = pl.BlockSpec(memory_space=pltpu.MemorySpace.VMEM)
    smem = pl.BlockSpec(memory_space=pltpu.MemorySpace.SMEM)
    in_specs = [smem] + [vmem] * (len(args) - 1)

    kern = functools.partial(
        _crabnet_kernel, batch=B, seq=T, heads=HEADS,
        n_layers=N_LAYERS, n_res=n_res, attn_scale=1.0 / math.sqrt(dh))

    # TODO(synk): at original CrabNet dims, cast weights/activations to bf16 at
    # this boundary and single-buffer invariant weights (pl.Buffered(1)).
    return pl.pallas_call(
        kern,
        out_shape=jax.ShapeDtypeStruct((M, OUT_DIMS), jnp.float32),
        in_specs=in_specs,
        out_specs=vmem,
        scratch_shapes=[pltpu.VMEM((M, d), jnp.float32)],
        compiler_params=pltpu.CompilerParams(vmem_limit_bytes=32 * 1024 * 1024),
    )(*args)


# ------------------------------ parameters -----------------------------------
def init_params(key):
    keys = iter(jax.random.split(key, 64))

    def nrm(shape, scale=0.05):
        return (scale * jax.random.normal(next(keys), shape)).astype(jnp.float32)

    p = {}
    # Embedder (cbfv row 0 is the zero pad row, as in Embedder.__init__)
    cbfv = nrm((VOCAB, FEAT_SIZE), 1.0)
    p['cbfv'] = jnp.concatenate([jnp.zeros((1, FEAT_SIZE), jnp.float32), cbfv], axis=0)
    p['fc_mat2vec_w'] = nrm((FEAT_SIZE, D_MODEL))
    p['fc_mat2vec_b'] = nrm((D_MODEL,))
    # scalers
    p['emb_scaler'] = jnp.array(1.0, jnp.float32)
    p['pos_scaler'] = jnp.array(1.0, jnp.float32)
    p['pos_scaler_log'] = jnp.array(1.0, jnp.float32)
    # FractionalEncoder table (same construction for pe and ple)
    half = D_MODEL // 2
    pos = jnp.arange(RESOLUTION, dtype=jnp.float32)[:, None]
    col = jnp.arange(half, dtype=jnp.float32)[None, :]
    ang = pos / jnp.power(50.0, 2.0 * col / half)
    even = (jnp.arange(half) % 2 == 0)[None, :]
    pe_tab = jnp.where(even, jnp.sin(ang), jnp.cos(ang)).astype(jnp.float32)
    p['pe_tab'] = pe_tab
    p['ple_tab'] = pe_tab
    # transformer encoder layers (post-norm, relu, dim_feedforward=DIM_FF)
    layers = []
    for _ in range(N_LAYERS):
        layers.append({
            'in_proj_w': nrm((D_MODEL, 3 * D_MODEL)),
            'in_proj_b': nrm((3 * D_MODEL,)),
            'out_proj_w': nrm((D_MODEL, D_MODEL)),
            'out_proj_b': nrm((D_MODEL,)),
            'ln1_g': jnp.ones((D_MODEL,), jnp.float32),
            'ln1_b': jnp.zeros((D_MODEL,), jnp.float32),
            'ff1_w': nrm((D_MODEL, DIM_FF)),
            'ff1_b': nrm((DIM_FF,)),
            'ff2_w': nrm((DIM_FF, D_MODEL)),
            'ff2_b': nrm((D_MODEL,)),
            'ln2_g': jnp.ones((D_MODEL,), jnp.float32),
            'ln2_b': jnp.zeros((D_MODEL,), jnp.float32),
        })
    p['layers'] = layers
    # ResidualNetwork (all adjacent dims differ -> all res_fcs are bias-free Linear)
    dims = [D_MODEL] + OUT_HIDDEN
    res = []
    for i in range(len(dims) - 1):
        res.append({'fc_w': nrm((dims[i], dims[i + 1])),
                    'fc_b': nrm((dims[i + 1],)),
                    'res_w': nrm((dims[i], dims[i + 1]))})
    p['res_layers'] = res
    p['fc_out_w'] = nrm((dims[-1], OUT_DIMS))
    p['fc_out_b'] = nrm((OUT_DIMS,))
    return p


# ------------------------------ forward pass ---------------------------------
def crabnet_forward(params, src, frac):
    B, T = src.shape
    d = D_MODEL
    res = float(RESOLUTION)

    # Embedder gather + fractional-encoding table gathers (JAX glue, fused by jit)
    emb = params['cbfv'][src]                                        # (B,T,feat)

    pe_scaler = 2.0 ** ((1.0 - params['pos_scaler']) ** 2)
    ple_scaler = 2.0 ** ((1.0 - params['pos_scaler_log']) ** 2)
    f1 = jnp.where(frac < 1.0 / res, 1.0 / res, frac)
    pe_idx = (jnp.round(f1 * res) - 1).astype(jnp.int32)
    pe_half = params['pe_tab'][pe_idx] * pe_scaler                   # (B,T,d/2)
    f2 = 0.0025 * jnp.log2(frac) ** 2
    f2 = jnp.where(f2 > 1.0, 1.0, f2)
    f2 = jnp.where(f2 < 1.0 / res, 1.0 / res, f2)
    ple_idx = (jnp.round(f2 * res) - 1).astype(jnp.int32)
    ple_half = params['ple_tab'][ple_idx] * ple_scaler               # (B,T,d/2)
    pe_ple = jnp.concatenate([pe_half, ple_half], axis=-1)           # (B,T,d)

    emb_scale = (2.0 ** params['emb_scaler']).astype(jnp.float32).reshape(1, 1)

    # mask = (frac outer frac) != 0
    mask = frac[:, :, None] * frac[:, None, :]                       # (B,T,T)
    mask = jnp.where(mask != 0.0, 1.0, 0.0)
    src_mask = mask[:, 0, :] != 1.0                                  # (B,T) True = padded key
    # -1e30 instead of -inf: a fully-padded row yields a uniform softmax here
    # instead of NaN as in the PyTorch reference.
    key_bias = jnp.where(src_mask, -1e30, 0.0).astype(jnp.float32).reshape(B, 1, T)
    hmask = mask[:, :, 0:1]                                          # (B,T,1)

    # single fused Pallas kernel: embedder + encoder layers + masked resnet
    out2d = crabnet_fused(
        emb.reshape(B * T, FEAT_SIZE).astype(jnp.float32),
        pe_ple.reshape(B * T, d).astype(jnp.float32),
        key_bias,
        hmask.reshape(B * T, 1).astype(jnp.float32),
        emb_scale,
        params)
    out = out2d.reshape(B, T, OUT_DIMS)

    # masked average over tokens, then chunk/sigmoid gating
    pad = jnp.broadcast_to((src == 0)[:, :, None], (B, T, OUT_DIMS))
    out = jnp.where(pad, 0.0, out)
    denom = jnp.sum(~pad, axis=1).astype(jnp.float32)                # (B, OUT_DIMS)
    denom = jnp.maximum(denom, 1.0)   # guard: all-padded row would be NaN in the reference
    out = out.sum(axis=1) / denom
    split = (OUT_DIMS + 1) // 2                                      # torch.chunk(2): sizes [2,1]
    main, logits = out[:, :split], out[:, split:]
    prob = jnp.ones_like(main)
    prob = prob.at[:, :logits.shape[-1]].set(jax.nn.sigmoid(logits))
    return main * prob


crabnet_forward_jit = jax.jit(crabnet_forward)


# ---------------------------------- main --------------------------------------
if __name__ == "__main__":
    params = init_params(jax.random.PRNGKey(42))

    key = jax.random.PRNGKey(0)
    k1, k2 = jax.random.split(key)
    B, T = 2, 8
    src = jax.random.randint(k1, (B, T), 1, VOCAB + 1)
    n_real = jnp.array([5, 3])                         # number of real elements per row
    valid = jnp.arange(T)[None, :] < n_real[:, None]
    src = jnp.where(valid, src, 0).astype(jnp.int32)
    frac_raw = jax.random.uniform(k2, (B, T), minval=0.1, maxval=1.0)
    frac_raw = jnp.where(valid, frac_raw, 0.0)
    frac = (frac_raw / frac_raw.sum(axis=1, keepdims=True)).astype(jnp.float32)

    out = crabnet_forward_jit(params, src, frac)
    out = jax.block_until_ready(out)
    assert out.shape == (B, (OUT_DIMS + 1) // 2)
    assert bool(jnp.all(jnp.isfinite(out)))
    print("KERNEL_OK")
</pallas_src>

<mosaic_0001>
module attributes {stable_mosaic.version = 11 : i64} {
  func.func @_crabnet_kernel(%arg0: memref<1x1xf32, #tpu.memory_space<smem>>, %arg1: memref<16x16xf32, #tpu.memory_space<vmem>>, %arg2: memref<16x32xf32, #tpu.memory_space<vmem>>, %arg3: memref<2x1x8xf32, #tpu.memory_space<vmem>>, %arg4: memref<16x1xf32, #tpu.memory_space<vmem>>, %arg5: memref<16x32xf32, #tpu.memory_space<vmem>>, %arg6: memref<1x32xf32, #tpu.memory_space<vmem>>, %arg7: memref<8x32x8xf32, #tpu.memory_space<vmem>>, %arg8: memref<8x32x8xf32, #tpu.memory_space<vmem>>, %arg9: memref<8x32x8xf32, #tpu.memory_space<vmem>>, %arg10: memref<8x1x8xf32, #tpu.memory_space<vmem>>, %arg11: memref<8x1x8xf32, #tpu.memory_space<vmem>>, %arg12: memref<8x1x8xf32, #tpu.memory_space<vmem>>, %arg13: memref<8x8x32xf32, #tpu.memory_space<vmem>>, %arg14: memref<2x1x32xf32, #tpu.memory_space<vmem>>, %arg15: memref<2x1x32xf32, #tpu.memory_space<vmem>>, %arg16: memref<2x1x32xf32, #tpu.memory_space<vmem>>, %arg17: memref<2x32x64xf32, #tpu.memory_space<vmem>>, %arg18: memref<2x1x64xf32, #tpu.memory_space<vmem>>, %arg19: memref<2x64x32xf32, #tpu.memory_space<vmem>>, %arg20: memref<2x1x32xf32, #tpu.memory_space<vmem>>, %arg21: memref<2x1x32xf32, #tpu.memory_space<vmem>>, %arg22: memref<2x1x32xf32, #tpu.memory_space<vmem>>, %arg23: memref<32x64xf32, #tpu.memory_space<vmem>>, %arg24: memref<1x64xf32, #tpu.memory_space<vmem>>, %arg25: memref<32x64xf32, #tpu.memory_space<vmem>>, %arg26: memref<64x32xf32, #tpu.memory_space<vmem>>, %arg27: memref<1x32xf32, #tpu.memory_space<vmem>>, %arg28: memref<64x32xf32, #tpu.memory_space<vmem>>, %arg29: memref<32x16xf32, #tpu.memory_space<vmem>>, %arg30: memref<1x16xf32, #tpu.memory_space<vmem>>, %arg31: memref<32x16xf32, #tpu.memory_space<vmem>>, %arg32: memref<16x8xf32, #tpu.memory_space<vmem>>, %arg33: memref<1x8xf32, #tpu.memory_space<vmem>>, %arg34: memref<16x8xf32, #tpu.memory_space<vmem>>, %arg35: memref<8x3xf32, #tpu.memory_space<vmem>>, %arg36: memref<1x3xf32, #tpu.memory_space<vmem>>, %arg37: memref<16x3xf32, #tpu.memory_space<vmem>>, %arg38: memref<16x32xf32, #tpu.memory_space<vmem>>) attributes {dimension_semantics = [], scalar_prefetch = 0 : i64, scratch_operands = 1 : i64, tpu.core_type = #tpu.core_type<tc>} {
    %c0 = arith.constant 0 : index
    %c0_0 = arith.constant 0 : index
    %0 = vector.load %arg1[%c0, %c0_0] : memref<16x16xf32, #tpu.memory_space<vmem>>, vector<16x16xf32>
    %c0_1 = arith.constant 0 : index
    %c0_2 = arith.constant 0 : index
    %1 = vector.load %arg5[%c0_1, %c0_2] : memref<16x32xf32, #tpu.memory_space<vmem>>, vector<16x32xf32>
    %cst = arith.constant dense<0.000000e+00> : vector<16x32xf32>
    %2 = tpu.matmul %0, %1, %cst {dimension_numbers = #tpu.dot_dimension_numbers<[1], [0], [0], [1], [0, 0, 1, 1], [], []>} : vector<16x16xf32>, vector<16x32xf32>, vector<16x32xf32> -> vector<16x32xf32>
    %c0_3 = arith.constant 0 : index
    %c0_4 = arith.constant 0 : index
    %3 = vector.load %arg6[%c0_3, %c0_4] : memref<1x32xf32, #tpu.memory_space<vmem>>, vector<1x32xf32>
    %4 = vector.broadcast %3 : vector<1x32xf32> to vector<16x32xf32>
    %5 = arith.addf %2, %4 : vector<16x32xf32>
    %c0_5 = arith.constant 0 : index
    %c0_6 = arith.constant 0 : index
    %6 = memref.load %arg0[%c0_5, %c0_6] : memref<1x1xf32, #tpu.memory_space<smem>>
    %7 = vector.broadcast %6 : f32 to vector<16x32xf32>
    %8 = arith.mulf %5, %7 : vector<16x32xf32>
    %c0_7 = arith.constant 0 : index
    %c0_8 = arith.constant 0 : index
    %9 = vector.load %arg2[%c0_7, %c0_8] : memref<16x32xf32, #tpu.memory_space<vmem>>, vector<16x32xf32>
    %10 = arith.addf %8, %9 : vector<16x32xf32>
    %11 = vector.extract_strided_slice %10 {offsets = [0, 0], sizes = [8, 32], strides = [1, 1]} : vector<16x32xf32> to vector<8x32xf32>
    %c0_9 = arith.constant 0 : index
    %c0_10 = arith.constant 0 : index
    %c0_11 = arith.constant 0 : index
    %12 = vector.load %arg3[%c0_9, %c0_10, %c0_11] : memref<2x1x8xf32, #tpu.memory_space<vmem>>, vector<1x1x8xf32>
    %13 = vector.shape_cast %12 : vector<1x1x8xf32> to vector<1x8xf32>
    %c0_12 = arith.constant 0 : index
    %c0_13 = arith.constant 0 : index
    %c0_14 = arith.constant 0 : index
    %14 = vector.load %arg7[%c0_12, %c0_13, %c0_14] : memref<8x32x8xf32, #tpu.memory_space<vmem>>, vector<1x32x8xf32>
    %15 = vector.shape_cast %14 : vector<1x32x8xf32> to vector<32x8xf32>
    %cst_15 = arith.constant dense<0.000000e+00> : vector<8x8xf32>
    %16 = tpu.matmul %11, %15, %cst_15 {dimension_numbers = #tpu.dot_dimension_numbers<[1], [0], [0], [1], [0, 0, 1, 1], [], []>} : vector<8x32xf32>, vector<32x8xf32>, vector<8x8xf32> -> vector<8x8xf32>
    %c0_16 = arith.constant 0 : index
    %c0_17 = arith.constant 0 : index
    %c0_18 = arith.constant 0 : index
    %17 = vector.load %arg10[%c0_16, %c0_17, %c0_18] : memref<8x1x8xf32, #tpu.memory_space<vmem>>, vector<1x1x8xf32>
    %18 = vector.shape_cast %17 : vector<1x1x8xf32> to vector<1x8xf32>
    %19 = vector.broadcast %18 : vector<1x8xf32> to vector<8x8xf32>
    %20 = arith.addf %16, %19 : vector<8x8xf32>
    %c0_19 = arith.constant 0 : index
    %c0_20 = arith.constant 0 : index
    %c0_21 = arith.constant 0 : index
    %21 = vector.load %arg8[%c0_19, %c0_20, %c0_21] : memref<8x32x8xf32, #tpu.memory_space<vmem>>, vector<1x32x8xf32>
    %22 = vector.shape_cast %21 : vector<1x32x8xf32> to vector<32x8xf32>
    %cst_22 = arith.constant dense<0.000000e+00> : vector<8x8xf32>
    %23 = tpu.matmul %11, %22, %cst_22 {dimension_numbers = #tpu.dot_dimension_numbers<[1], [0], [0], [1], [0, 0, 1, 1], [], []>} : vector<8x32xf32>, vector<32x8xf32>, vector<8x8xf32> -> vector<8x8xf32>
    %c0_23 = arith.constant 0 : index
    %c0_24 = arith.constant 0 : index
    %c0_25 = arith.constant 0 : index
    %24 = vector.load %arg11[%c0_23, %c0_24, %c0_25] : memref<8x1x8xf32, #tpu.memory_space<vmem>>, vector<1x1x8xf32>
    %25 = vector.shape_cast %24 : vector<1x1x8xf32> to vector<1x8xf32>
    %26 = vector.broadcast %25 : vector<1x8xf32> to vector<8x8xf32>
    %27 = arith.addf %23, %26 : vector<8x8xf32>
    %c0_26 = arith.constant 0 : index
    %c0_27 = arith.constant 0 : index
    %c0_28 = arith.constant 0 : index
    %28 = vector.load %arg9[%c0_26, %c0_27, %c0_28] : memref<8x32x8xf32, #tpu.memory_space<vmem>>, vector<1x32x8xf32>
    %29 = vector.shape_cast %28 : vector<1x32x8xf32> to vector<32x8xf32>
    %cst_29 = arith.constant dense<0.000000e+00> : vector<8x8xf32>
    %30 = tpu.matmul %11, %29, %cst_29 {dimension_numbers = #tpu.dot_dimension_numbers<[1], [0], [0], [1], [0, 0, 1, 1], [], []>} : vector<8x32xf32>, vector<32x8xf32>, vector<8x8xf32> -> vector<8x8xf32>
    %c0_30 = arith.constant 0 : index
    %c0_31 = arith.constant 0 : index
    %c0_32 = arith.constant 0 : index
    %31 = vector.load %arg12[%c0_30, %c0_31, %c0_32] : memref<8x1x8xf32, #tpu.memory_space<vmem>>, vector<1x1x8xf32>
    %32 = vector.shape_cast %31 : vector<1x1x8xf32> to vector<1x8xf32>
    %33 = vector.broadcast %32 : vector<1x8xf32> to vector<8x8xf32>
    %34 = arith.addf %30, %33 : vector<8x8xf32>
    %cst_33 = arith.constant dense<0.000000e+00> : vector<8x8xf32>
    %35 = tpu.matmul %20, %27, %cst_33 {dimension_numbers = #tpu.dot_dimension_numbers<[1], [1], [0], [0], [0, 0, 1, 0], [], []>} : vector<8x8xf32>, vector<8x8xf32>, vector<8x8xf32> -> vector<8x8xf32>
    %cst_34 = arith.constant 0.353553385 : f32
    %36 = vector.broadcast %cst_34 : f32 to vector<8x8xf32>
    %37 = arith.mulf %35, %36 : vector<8x8xf32>
    %38 = vector.broadcast %13 : vector<1x8xf32> to vector<8x8xf32>
    %39 = arith.addf %37, %38 : vector<8x8xf32>
    %cst_35 = arith.constant dense<0xFF800000> : vector<8xf32>
    %40 = vector.multi_reduction <maximumf>, %39, %cst_35 [1] : vector<8x8xf32> to vector<8xf32>
    %41 = vector.shape_cast %40 : vector<8xf32> to vector<8x1xf32>
    %42 = vector.broadcast %41 : vector<8x1xf32> to vector<8x8xf32>
    %43 = arith.subf %39, %42 : vector<8x8xf32>
    %44 = math.exp %43 : vector<8x8xf32>
    %cst_36 = arith.constant dense<0.000000e+00> : vector<8xf32>
    %45 = vector.multi_reduction <add>, %44, %cst_36 [1] : vector<8x8xf32> to vector<8xf32>
    %46 = vector.shape_cast %45 : vector<8xf32> to vector<8x1xf32>
    %47 = tpu.reciprocal %46 {approx = true} : vector<8x1xf32> -> vector<8x1xf32>
    %48 = vector.broadcast %47 : vector<8x1xf32> to vector<8x8xf32>
    %49 = arith.mulf %44, %48 : vector<8x8xf32>
    %cst_37 = arith.constant dense<0.000000e+00> : vector<8x8xf32>
    %50 = tpu.matmul %49, %34, %cst_37 {dimension_numbers = #tpu.dot_dimension_numbers<[1], [0], [0], [1], [0, 0, 1, 1], [], []>} : vector<8x8xf32>, vector<8x8xf32>, vector<8x8xf32> -> vector<8x8xf32>
    %c0_38 = arith.constant 0 : index
    %c0_39 = arith.constant 0 : index
    %c0_40 = arith.constant 0 : index
    %51 = vector.load %arg13[%c0_38, %c0_39, %c0_40] : memref<8x8x32xf32, #tpu.memory_space<vmem>>, vector<1x8x32xf32>
    %52 = vector.shape_cast %51 : vector<1x8x32xf32> to vector<8x32xf32>
    %cst_41 = arith.constant dense<0.000000e+00> : vector<8x32xf32>
    %53 = tpu.matmul %50, %52, %cst_41 {dimension_numbers = #tpu.dot_dimension_numbers<[1], [0], [0], [1], [0, 0, 1, 1], [], []>} : vector<8x8xf32>, vector<8x32xf32>, vector<8x32xf32> -> vector<8x32xf32>
    %c1 = arith.constant 1 : index
    %c0_42 = arith.constant 0 : index
    %c0_43 = arith.constant 0 : index
    %54 = vector.load %arg7[%c1, %c0_42, %c0_43] : memref<8x32x8xf32, #tpu.memory_space<vmem>>, vector<1x32x8xf32>
    %55 = vector.shape_cast %54 : vector<1x32x8xf32> to vector<32x8xf32>
    %cst_44 = arith.constant dense<0.000000e+00> : vector<8x8xf32>
    %56 = tpu.matmul %11, %55, %cst_44 {dimension_numbers = #tpu.dot_dimension_numbers<[1], [0], [0], [1], [0, 0, 1, 1], [], []>} : vector<8x32xf32>, vector<32x8xf32>, vector<8x8xf32> -> vector<8x8xf32>
    %c1_45 = arith.constant 1 : index
    %c0_46 = arith.constant 0 : index
    %c0_47 = arith.constant 0 : index
    %57 = vector.load %arg10[%c1_45, %c0_46, %c0_47] : memref<8x1x8xf32, #tpu.memory_space<vmem>>, vector<1x1x8xf32>
    %58 = vector.shape_cast %57 : vector<1x1x8xf32> to vector<1x8xf32>
    %59 = vector.broadcast %58 : vector<1x8xf32> to vector<8x8xf32>
    %60 = arith.addf %56, %59 : vector<8x8xf32>
    %c1_48 = arith.constant 1 : index
    %c0_49 = arith.constant 0 : index
    %c0_50 = arith.constant 0 : index
    %61 = vector.load %arg8[%c1_48, %c0_49, %c0_50] : memref<8x32x8xf32, #tpu.memory_space<vmem>>, vector<1x32x8xf32>
    %62 = vector.shape_cast %61 : vector<1x32x8xf32> to vector<32x8xf32>
    %cst_51 = arith.constant dense<0.000000e+00> : vector<8x8xf32>
    %63 = tpu.matmul %11, %62, %cst_51 {dimension_numbers = #tpu.dot_dimension_numbers<[1], [0], [0], [1], [0, 0, 1, 1], [], []>} : vector<8x32xf32>, vector<32x8xf32>, vector<8x8xf32> -> vector<8x8xf32>
    %c1_52 = arith.constant 1 : index
    %c0_53 = arith.constant 0 : index
    %c0_54 = arith.constant 0 : index
    %64 = vector.load %arg11[%c1_52, %c0_53, %c0_54] : memref<8x1x8xf32, #tpu.memory_space<vmem>>, vector<1x1x8xf32>
    %65 = vector.shape_cast %64 : vector<1x1x8xf32> to vector<1x8xf32>
    %66 = vector.broadcast %65 : vector<1x8xf32> to vector<8x8xf32>
    %67 = arith.addf %63, %66 : vector<8x8xf32>
    %c1_55 = arith.constant 1 : index
    %c0_56 = arith.constant 0 : index
    %c0_57 = arith.constant 0 : index
    %68 = vector.load %arg9[%c1_55, %c0_56, %c0_57] : memref<8x32x8xf32, #tpu.memory_space<vmem>>, vector<1x32x8xf32>
    %69 = vector.shape_cast %68 : vector<1x32x8xf32> to vector<32x8xf32>
    %cst_58 = arith.constant dense<0.000000e+00> : vector<8x8xf32>
    %70 = tpu.matmul %11, %69, %cst_58 {dimension_numbers = #tpu.dot_dimension_numbers<[1], [0], [0], [1], [0, 0, 1, 1], [], []>} : vector<8x32xf32>, vector<32x8xf32>, vector<8x8xf32> -> vector<8x8xf32>
    %c1_59 = arith.constant 1 : index
    %c0_60 = arith.constant 0 : index
    %c0_61 = arith.constant 0 : index
    %71 = vector.load %arg12[%c1_59, %c0_60, %c0_61] : memref<8x1x8xf32, #tpu.memory_space<vmem>>, vector<1x1x8xf32>
    %72 = vector.shape_cast %71 : vector<1x1x8xf32> to vector<1x8xf32>
    %73 = vector.broadcast %72 : vector<1x8xf32> to vector<8x8xf32>
    %74 = arith.addf %70, %73 : vector<8x8xf32>
    %cst_62 = arith.constant dense<0.000000e+00> : vector<8x8xf32>
    %75 = tpu.matmul %60, %67, %cst_62 {dimension_numbers = #tpu.dot_dimension_numbers<[1], [1], [0], [0], [0, 0, 1, 0], [], []>} : vector<8x8xf32>, vector<8x8xf32>, vector<8x8xf32> -> vector<8x8xf32>
    %cst_63 = arith.constant 0.353553385 : f32
    %76 = vector.broadcast %cst_63 : f32 to vector<8x8xf32>
    %77 = arith.mulf %75, %76 : vector<8x8xf32>
    %78 = vector.broadcast %13 : vector<1x8xf32> to vector<8x8xf32>
    %79 = arith.addf %77, %78 : vector<8x8xf32>
    %cst_64 = arith.constant dense<0xFF800000> : vector<8xf32>
    %80 = vector.multi_reduction <maximumf>, %79, %cst_64 [1] : vector<8x8xf32> to vector<8xf32>
    %81 = vector.shape_cast %80 : vector<8xf32> to vector<8x1xf32>
    %82 = vector.broadcast %81 : vector<8x1xf32> to vector<8x8xf32>
    %83 = arith.subf %79, %82 : vector<8x8xf32>
    %84 = math.exp %83 : vector<8x8xf32>
    %cst_65 = arith.constant dense<0.000000e+00> : vector<8xf32>
    %85 = vector.multi_reduction <add>, %84, %cst_65 [1] : vector<8x8xf32> to vector<8xf32>
    %86 = vector.shape_cast %85 : vector<8xf32> to vector<8x1xf32>
    %87 = tpu.reciprocal %86 {approx = true} : vector<8x1xf32> -> vector<8x1xf32>
    %88 = vector.broadcast %87 : vector<8x1xf32> to vector<8x8xf32>
    %89 = arith.mulf %84, %88 : vector<8x8xf32>
    %cst_66 = arith.constant dense<0.000000e+00> : vector<8x8xf32>
    %90 = tpu.matmul %89, %74, %cst_66 {dimension_numbers = #tpu.dot_dimension_numbers<[1], [0], [0], [1], [0, 0, 1, 1], [], []>} : vector<8x8xf32>, vector<8x8xf32>, vector<8x8xf32> -> vector<8x8xf32>
    %c1_67 = arith.constant 1 : index
    %c0_68 = arith.constant 0 : index
    %c0_69 = arith.constant 0 : index
    %91 = vector.load %arg13[%c1_67, %c0_68, %c0_69] : memref<8x8x32xf32, #tpu.memory_space<vmem>>, vector<1x8x32xf32>
    %92 = vector.shape_cast %91 : vector<1x8x32xf32> to vector<8x32xf32>
    %cst_70 = arith.constant dense<0.000000e+00> : vector<8x32xf32>
    %93 = tpu.matmul %90, %92, %cst_70 {dimension_numbers = #tpu.dot_dimension_numbers<[1], [0], [0], [1], [0, 0, 1, 1], [], []>} : vector<8x8xf32>, vector<8x32xf32>, vector<8x32xf32> -> vector<8x32xf32>
    %94 = arith.addf %53, %93 : vector<8x32xf32>
    %c2 = arith.constant 2 : index
    %c0_71 = arith.constant 0 : index
    %c0_72 = arith.constant 0 : index
    %95 = vector.load %arg7[%c2, %c0_71, %c0_72] : memref<8x32x8xf32, #tpu.memory_space<vmem>>, vector<1x32x8xf32>
    %96 = vector.shape_cast %95 : vector<1x32x8xf32> to vector<32x8xf32>
    %cst_73 = arith.constant dense<0.000000e+00> : vector<8x8xf32>
    %97 = tpu.matmul %11, %96, %cst_73 {dimension_numbers = #tpu.dot_dimension_numbers<[1], [0], [0], [1], [0, 0, 1, 1], [], []>} : vector<8x32xf32>, vector<32x8xf32>, vector<8x8xf32> -> vector<8x8xf32>
    %c2_74 = arith.constant 2 : index
    %c0_75 = arith.constant 0 : index
    %c0_76 = arith.constant 0 : index
    %98 = vector.load %arg10[%c2_74, %c0_75, %c0_76] : memref<8x1x8xf32, #tpu.memory_space<vmem>>, vector<1x1x8xf32>
    %99 = vector.shape_cast %98 : vector<1x1x8xf32> to vector<1x8xf32>
    %100 = vector.broadcast %99 : vector<1x8xf32> to vector<8x8xf32>
    %101 = arith.addf %97, %100 : vector<8x8xf32>
    %c2_77 = arith.constant 2 : index
    %c0_78 = arith.constant 0 : index
    %c0_79 = arith.constant 0 : index
    %102 = vector.load %arg8[%c2_77, %c0_78, %c0_79] : memref<8x32x8xf32, #tpu.memory_space<vmem>>, vector<1x32x8xf32>
    %103 = vector.shape_cast %102 : vector<1x32x8xf32> to vector<32x8xf32>
    %cst_80 = arith.constant dense<0.000000e+00> : vector<8x8xf32>
    %104 = tpu.matmul %11, %103, %cst_80 {dimension_numbers = #tpu.dot_dimension_numbers<[1], [0], [0], [1], [0, 0, 1, 1], [], []>} : vector<8x32xf32>, vector<32x8xf32>, vector<8x8xf32> -> vector<8x8xf32>
    %c2_81 = arith.constant 2 : index
    %c0_82 = arith.constant 0 : index
    %c0_83 = arith.constant 0 : index
    %105 = vector.load %arg11[%c2_81, %c0_82, %c0_83] : memref<8x1x8xf32, #tpu.memory_space<vmem>>, vector<1x1x8xf32>
    %106 = vector.shape_cast %105 : vector<1x1x8xf32> to vector<1x8xf32>
    %107 = vector.broadcast %106 : vector<1x8xf32> to vector<8x8xf32>
    %108 = arith.addf %104, %107 : vector<8x8xf32>
    %c2_84 = arith.constant 2 : index
    %c0_85 = arith.constant 0 : index
    %c0_86 = arith.constant 0 : index
    %109 = vector.load %arg9[%c2_84, %c0_85, %c0_86] : memref<8x32x8xf32, #tpu.memory_space<vmem>>, vector<1x32x8xf32>
    %110 = vector.shape_cast %109 : vector<1x32x8xf32> to vector<32x8xf32>
    %cst_87 = arith.constant dense<0.000000e+00> : vector<8x8xf32>
    %111 = tpu.matmul %11, %110, %cst_87 {dimension_numbers = #tpu.dot_dimension_numbers<[1], [0], [0], [1], [0, 0, 1, 1], [], []>} : vector<8x32xf32>, vector<32x8xf32>, vector<8x8xf32> -> vector<8x8xf32>
    %c2_88 = arith.constant 2 : index
    %c0_89 = arith.constant 0 : index
    %c0_90 = arith.constant 0 : index
    %112 = vector.load %arg12[%c2_88, %c0_89, %c0_90] : memref<8x1x8xf32, #tpu.memory_space<vmem>>, vector<1x1x8xf32>
    %113 = vector.shape_cast %112 : vector<1x1x8xf32> to vector<1x8xf32>
    %114 = vector.broadcast %113 : vector<1x8xf32> to vector<8x8xf32>
    %115 = arith.addf %111, %114 : vector<8x8xf32>
    %cst_91 = arith.constant dense<0.000000e+00> : vector<8x8xf32>
    %116 = tpu.matmul %101, %108, %cst_91 {dimension_numbers = #tpu.dot_dimension_numbers<[1], [1], [0], [0], [0, 0, 1, 0], [], []>} : vector<8x8xf32>, vector<8x8xf32>, vector<8x8xf32> -> vector<8x8xf32>
    %cst_92 = arith.constant 0.353553385 : f32
    %117 = vector.broadcast %cst_92 : f32 to vector<8x8xf32>
    %118 = arith.mulf %116, %117 : vector<8x8xf32>
    %119 = vector.broadcast %13 : vector<1x8xf32> to vector<8x8xf32>
    %120 = arith.addf %118, %119 : vector<8x8xf32>
    %cst_93 = arith.constant dense<0xFF800000> : vector<8xf32>
    %121 = vector.multi_reduction <maximumf>, %120, %cst_93 [1] : vector<8x8xf32> to vector<8xf32>
    %122 = vector.shape_cast %121 : vector<8xf32> to vector<8x1xf32>
    %123 = vector.broadcast %122 : vector<8x1xf32> to vector<8x8xf32>
    %124 = arith.subf %120, %123 : vector<8x8xf32>
    %125 = math.exp %124 : vector<8x8xf32>
    %cst_94 = arith.constant dense<0.000000e+00> : vector<8xf32>
    %126 = vector.multi_reduction <add>, %125, %cst_94 [1] : vector<8x8xf32> to vector<8xf32>
    %127 = vector.shape_cast %126 : vector<8xf32> to vector<8x1xf32>
    %128 = tpu.reciprocal %127 {approx = true} : vector<8x1xf32> -> vector<8x1xf32>
    %129 = vector.broadcast %128 : vector<8x1xf32> to vector<8x8xf32>
    %130 = arith.mulf %125, %129 : vector<8x8xf32>
    %cst_95 = arith.constant dense<0.000000e+00> : vector<8x8xf32>
    %131 = tpu.matmul %130, %115, %cst_95 {dimension_numbers = #tpu.dot_dimension_numbers<[1], [0], [0], [1], [0, 0, 1, 1], [], []>} : vector<8x8xf32>, vector<8x8xf32>, vector<8x8xf32> -> vector<8x8xf32>
    %c2_96 = arith.constant 2 : index
    %c0_97 = arith.constant 0 : index
    %c0_98 = arith.constant 0 : index
    %132 = vector.load %arg13[%c2_96, %c0_97, %c0_98] : memref<8x8x32xf32, #tpu.memory_space<vmem>>, vector<1x8x32xf32>
    %133 = vector.shape_cast %132 : vector<1x8x32xf32> to vector<8x32xf32>
    %cst_99 = arith.constant dense<0.000000e+00> : vector<8x32xf32>
    %134 = tpu.matmul %131, %133, %cst_99 {dimension_numbers = #tpu.dot_dimension_numbers<[1], [0], [0], [1], [0, 0, 1, 1], [], []>} : vector<8x8xf32>, vector<8x32xf32>, vector<8x32xf32> -> vector<8x32xf32>
    %135 = arith.addf %94, %134 : vector<8x32xf32>
    %c3 = arith.constant 3 : index
    %c0_100 = arith.constant 0 : index
    %c0_101 = arith.constant 0 : index
    %136 = vector.load %arg7[%c3, %c0_100, %c0_101] : memref<8x32x8xf32, #tpu.memory_space<vmem>>, vector<1x32x8xf32>
    %137 = vector.shape_cast %136 : vector<1x32x8xf32> to vector<32x8xf32>
    %cst_102 = arith.constant dense<0.000000e+00> : vector<8x8xf32>
    %138 = tpu.matmul %11, %137, %cst_102 {dimension_numbers = #tpu.dot_dimension_numbers<[1], [0], [0], [1], [0, 0, 1, 1], [], []>} : vector<8x32xf32>, vector<32x8xf32>, vector<8x8xf32> -> vector<8x8xf32>
    %c3_103 = arith.constant 3 : index
    %c0_104 = arith.constant 0 : index
    %c0_105 = arith.constant 0 : index
    %139 = vector.load %arg10[%c3_103, %c0_104, %c0_105] : memref<8x1x8xf32, #tpu.memory_space<vmem>>, vector<1x1x8xf32>
    %140 = vector.shape_cast %139 : vector<1x1x8xf32> to vector<1x8xf32>
    %141 = vector.broadcast %140 : vector<1x8xf32> to vector<8x8xf32>
    %142 = arith.addf %138, %141 : vector<8x8xf32>
    %c3_106 = arith.constant 3 : index
    %c0_107 = arith.constant 0 : index
    %c0_108 = arith.constant 0 : index
    %143 = vector.load %arg8[%c3_106, %c0_107, %c0_108] : memref<8x32x8xf32, #tpu.memory_space<vmem>>, vector<1x32x8xf32>
    %144 = vector.shape_cast %143 : vector<1x32x8xf32> to vector<32x8xf32>
    %cst_109 = arith.constant dense<0.000000e+00> : vector<8x8xf32>
    %145 = tpu.matmul %11, %144, %cst_109 {dimension_numbers = #tpu.dot_dimension_numbers<[1], [0], [0], [1], [0, 0, 1, 1], [], []>} : vector<8x32xf32>, vector<32x8xf32>, vector<8x8xf32> -> vector<8x8xf32>
    %c3_110 = arith.constant 3 : index
    %c0_111 = arith.constant 0 : index
    %c0_112 = arith.constant 0 : index
    %146 = vector.load %arg11[%c3_110, %c0_111, %c0_112] : memref<8x1x8xf32, #tpu.memory_space<vmem>>, vector<1x1x8xf32>
    %147 = vector.shape_cast %146 : vector<1x1x8xf32> to vector<1x8xf32>
    %148 = vector.broadcast %147 : vector<1x8xf32> to vector<8x8xf32>
    %149 = arith.addf %145, %148 : vector<8x8xf32>
    %c3_113 = arith.constant 3 : index
    %c0_114 = arith.constant 0 : index
    %c0_115 = arith.constant 0 : index
    %150 = vector.load %arg9[%c3_113, %c0_114, %c0_115] : memref<8x32x8xf32, #tpu.memory_space<vmem>>, vector<1x32x8xf32>
    %151 = vector.shape_cast %150 : vector<1x32x8xf32> to vector<32x8xf32>
    %cst_116 = arith.constant dense<0.000000e+00> : vector<8x8xf32>
    %152 = tpu.matmul %11, %151, %cst_116 {dimension_numbers = #tpu.dot_dimension_numbers<[1], [0], [0], [1], [0, 0, 1, 1], [], []>} : vector<8x32xf32>, vector<32x8xf32>, vector<8x8xf32> -> vector<8x8xf32>
    %c3_117 = arith.constant 3 : index
    %c0_118 = arith.constant 0 : index
    %c0_119 = arith.constant 0 : index
    %153 = vector.load %arg12[%c3_117, %c0_118, %c0_119] : memref<8x1x8xf32, #tpu.memory_space<vmem>>, vector<1x1x8xf32>
    %154 = vector.shape_cast %153 : vector<1x1x8xf32> to vector<1x8xf32>
    %155 = vector.broadcast %154 : vector<1x8xf32> to vector<8x8xf32>
    %156 = arith.addf %152, %155 : vector<8x8xf32>
    %cst_120 = arith.constant dense<0.000000e+00> : vector<8x8xf32>
    %157 = tpu.matmul %142, %149, %cst_120 {dimension_numbers = #tpu.dot_dimension_numbers<[1], [1], [0], [0], [0, 0, 1, 0], [], []>} : vector<8x8xf32>, vector<8x8xf32>, vector<8x8xf32> -> vector<8x8xf32>
    %cst_121 = arith.constant 0.353553385 : f32
    %158 = vector.broadcast %cst_121 : f32 to vector<8x8xf32>
    %159 = arith.mulf %157, %158 : vector<8x8xf32>
    %160 = vector.broadcast %13 : vector<1x8xf32> to vector<8x8xf32>
    %161 = arith.addf %159, %160 : vector<8x8xf32>
    %cst_122 = arith.constant dense<0xFF800000> : vector<8xf32>
    %162 = vector.multi_reduction <maximumf>, %161, %cst_122 [1] : vector<8x8xf32> to vector<8xf32>
    %163 = vector.shape_cast %162 : vector<8xf32> to vector<8x1xf32>
    %164 = vector.broadcast %163 : vector<8x1xf32> to vector<8x8xf32>
    %165 = arith.subf %161, %164 : vector<8x8xf32>
    %166 = math.exp %165 : vector<8x8xf32>
    %cst_123 = arith.constant dense<0.000000e+00> : vector<8xf32>
    %167 = vector.multi_reduction <add>, %166, %cst_123 [1] : vector<8x8xf32> to vector<8xf32>
    %168 = vector.shape_cast %167 : vector<8xf32> to vector<8x1xf32>
    %169 = tpu.reciprocal %168 {approx = true} : vector<8x1xf32> -> vector<8x1xf32>
    %170 = vector.broadcast %169 : vector<8x1xf32> to vector<8x8xf32>
    %171 = arith.mulf %166, %170 : vector<8x8xf32>
    %cst_124 = arith.constant dense<0.000000e+00> : vector<8x8xf32>
    %172 = tpu.matmul %171, %156, %cst_124 {dimension_numbers = #tpu.dot_dimension_numbers<[1], [0], [0], [1], [0, 0, 1, 1], [], []>} : vector<8x8xf32>, vector<8x8xf32>, vector<8x8xf32> -> vector<8x8xf32>
    %c3_125 = arith.constant 3 : index
    %c0_126 = arith.constant 0 : index
    %c0_127 = arith.constant 0 : index
    %173 = vector.load %arg13[%c3_125, %c0_126, %c0_127] : memref<8x8x32xf32, #tpu.memory_space<vmem>>, vector<1x8x32xf32>
    %174 = vector.shape_cast %173 : vector<1x8x32xf32> to vector<8x32xf32>
    %cst_128 = arith.constant dense<0.000000e+00> : vector<8x32xf32>
    %175 = tpu.matmul %172, %174, %cst_128 {dimension_numbers = #tpu.dot_dimension_numbers<[1], [0], [0], [1], [0, 0, 1, 1], [], []>} : vector<8x8xf32>, vector<8x32xf32>, vector<8x32xf32> -> vector<8x32xf32>
    %176 = arith.addf %135, %175 : vector<8x32xf32>
    %c0_129 = arith.constant 0 : index
    %c0_130 = arith.constant 0 : index
    %177 = vector.load %arg38[%c0_129, %c0_130] : memref<16x32xf32, #tpu.memory_space<vmem>>, vector<8x32xf32>
    tpu.vector_store %arg38[%c0_129, %c0_130], %176 {strides = array<i32>} : memref<16x32xf32, #tpu.memory_space<vmem>>, vector<8x32xf32>,
    %178 = vector.extract_strided_slice %10 {offsets = [8, 0], sizes = [8, 32], strides = [1, 1]} : vector<16x32xf32> to vector<8x32xf32>
    %c1_131 = arith.constant 1 : index
    %c0_132 = arith.constant 0 : index
    %c0_133 = arith.constant 0 : index
    %179 = vector.load %arg3[%c1_131, %c0_132, %c0_133] : memref<2x1x8xf32, #tpu.memory_space<vmem>>, vector<1x1x8xf32>
    %180 = vector.shape_cast %179 : vector<1x1x8xf32> to vector<1x8xf32>
    %c0_134 = arith.constant 0 : index
    %c0_135 = arith.constant 0 : index
    %c0_136 = arith.constant 0 : index
    %181 = vector.load %arg7[%c0_134, %c0_135, %c0_136] : memref<8x32x8xf32, #tpu.memory_space<vmem>>, vector<1x32x8xf32>
    %182 = vector.shape_cast %181 : vector<1x32x8xf32> to vector<32x8xf32>
    %cst_137 = arith.constant dense<0.000000e+00> : vector<8x8xf32>
    %183 = tpu.matmul %178, %182, %cst_137 {dimension_numbers = #tpu.dot_dimension_numbers<[1], [0], [0], [1], [0, 0, 1, 1], [], []>} : vector<8x32xf32>, vector<32x8xf32>, vector<8x8xf32> -> vector<8x8xf32>
    %c0_138 = arith.constant 0 : index
    %c0_139 = arith.constant 0 : index
    %c0_140 = arith.constant 0 : index
    %184 = vector.load %arg10[%c0_138, %c0_139, %c0_140] : memref<8x1x8xf32, #tpu.memory_space<vmem>>, vector<1x1x8xf32>
    %185 = vector.shape_cast %184 : vector<1x1x8xf32> to vector<1x8xf32>
    %186 = vector.broadcast %185 : vector<1x8xf32> to vector<8x8xf32>
    %187 = arith.addf %183, %186 : vector<8x8xf32>
    %c0_141 = arith.constant 0 : index
    %c0_142 = arith.constant 0 : index
    %c0_143 = arith.constant 0 : index
    %188 = vector.load %arg8[%c0_141, %c0_142, %c0_143] : memref<8x32x8xf32, #tpu.memory_space<vmem>>, vector<1x32x8xf32>
    %189 = vector.shape_cast %188 : vector<1x32x8xf32> to vector<32x8xf32>
    %cst_144 = arith.constant dense<0.000000e+00> : vector<8x8xf32>
    %190 = tpu.matmul %178, %189, %cst_144 {dimension_numbers = #tpu.dot_dimension_numbers<[1], [0], [0], [1], [0, 0, 1, 1], [], []>} : vector<8x32xf32>, vector<32x8xf32>, vector<8x8xf32> -> vector<8x8xf32>
    %c0_145 = arith.constant 0 : index
    %c0_146 = arith.constant 0 : index
    %c0_147 = arith.constant 0 : index
    %191 = vector.load %arg11[%c0_145, %c0_146, %c0_147] : memref<8x1x8xf32, #tpu.memory_space<vmem>>, vector<1x1x8xf32>
    %192 = vector.shape_cast %191 : vector<1x1x8xf32> to vector<1x8xf32>
    %193 = vector.broadcast %192 : vector<1x8xf32> to vector<8x8xf32>
    %194 = arith.addf %190, %193 : vector<8x8xf32>
    %c0_148 = arith.constant 0 : index
    %c0_149 = arith.constant 0 : index
    %c0_150 = arith.constant 0 : index
    %195 = vector.load %arg9[%c0_148, %c0_149, %c0_150] : memref<8x32x8xf32, #tpu.memory_space<vmem>>, vector<1x32x8xf32>
    %196 = vector.shape_cast %195 : vector<1x32x8xf32> to vector<32x8xf32>
    %cst_151 = arith.constant dense<0.000000e+00> : vector<8x8xf32>
    %197 = tpu.matmul %178, %196, %cst_151 {dimension_numbers = #tpu.dot_dimension_numbers<[1], [0], [0], [1], [0, 0, 1, 1], [], []>} : vector<8x32xf32>, vector<32x8xf32>, vector<8x8xf32> -> vector<8x8xf32>
    %c0_152 = arith.constant 0 : index
    %c0_153 = arith.constant 0 : index
    %c0_154 = arith.constant 0 : index
    %198 = vector.load %arg12[%c0_152, %c0_153, %c0_154] : memref<8x1x8xf32, #tpu.memory_space<vmem>>, vector<1x1x8xf32>
    %199 = vector.shape_cast %198 : vector<1x1x8xf32> to vector<1x8xf32>
    %200 = vector.broadcast %199 : vector<1x8xf32> to vector<8x8xf32>
    %201 = arith.addf %197, %200 : vector<8x8xf32>
    %cst_155 = arith.constant dense<0.000000e+00> : vector<8x8xf32>
    %202 = tpu.matmul %187, %194, %cst_155 {dimension_numbers = #tpu.dot_dimension_numbers<[1], [1], [0], [0], [0, 0, 1, 0], [], []>} : vector<8x8xf32>, vector<8x8xf32>, vector<8x8xf32> -> vector<8x8xf32>
    %cst_156 = arith.constant 0.353553385 : f32
    %203 = vector.broadcast %cst_156 : f32 to vector<8x8xf32>
    %204 = arith.mulf %202, %203 : vector<8x8xf32>
    %205 = vector.broadcast %180 : vector<1x8xf32> to vector<8x8xf32>
    %206 = arith.addf %204, %205 : vector<8x8xf32>
    %cst_157 = arith.constant dense<0xFF800000> : vector<8xf32>
    %207 = vector.multi_reduction <maximumf>, %206, %cst_157 [1] : vector<8x8xf32> to vector<8xf32>
    %208 = vector.shape_cast %207 : vector<8xf32> to vector<8x1xf32>
    %209 = vector.broadcast %208 : vector<8x1xf32> to vector<8x8xf32>
    %210 = arith.subf %206, %209 : vector<8x8xf32>
    %211 = math.exp %210 : vector<8x8xf32>
    %cst_158 = arith.constant dense<0.000000e+00> : vector<8xf32>
    %212 = vector.multi_reduction <add>, %211, %cst_158 [1] : vector<8x8xf32> to vector<8xf32>
    %213 = vector.shape_cast %212 : vector<8xf32> to vector<8x1xf32>
    %214 = tpu.reciprocal %213 {approx = true} : vector<8x1xf32> -> vector<8x1xf32>
    %215 = vector.broadcast %214 : vector<8x1xf32> to vector<8x8xf32>
    %216 = arith.mulf %211, %215 : vector<8x8xf32>
    %cst_159 = arith.constant dense<0.000000e+00> : vector<8x8xf32>
    %217 = tpu.matmul %216, %201, %cst_159 {dimension_numbers = #tpu.dot_dimension_numbers<[1], [0], [0], [1], [0, 0, 1, 1], [], []>} : vector<8x8xf32>, vector<8x8xf32>, vector<8x8xf32> -> vector<8x8xf32>
    %c0_160 = arith.constant 0 : index
    %c0_161 = arith.constant 0 : index
    %c0_162 = arith.constant 0 : index
    %218 = vector.load %arg13[%c0_160, %c0_161, %c0_162] : memref<8x8x32xf32, #tpu.memory_space<vmem>>, vector<1x8x32xf32>
    %219 = vector.shape_cast %218 : vector<1x8x32xf32> to vector<8x32xf32>
    %cst_163 = arith.constant dense<0.000000e+00> : vector<8x32xf32>
    %220 = tpu.matmul %217, %219, %cst_163 {dimension_numbers = #tpu.dot_dimension_numbers<[1], [0], [0], [1], [0, 0, 1, 1], [], []>} : vector<8x8xf32>, vector<8x32xf32>, vector<8x32xf32> -> vector<8x32xf32>
    %c1_164 = arith.constant 1 : index
    %c0_165 = arith.constant 0 : index
    %c0_166 = arith.constant 0 : index
    %221 = vector.load %arg7[%c1_164, %c0_165, %c0_166] : memref<8x32x8xf32, #tpu.memory_space<vmem>>, vector<1x32x8xf32>
    %222 = vector.shape_cast %221 : vector<1x32x8xf32> to vector<32x8xf32>
    %cst_167 = arith.constant dense<0.000000e+00> : vector<8x8xf32>
    %223 = tpu.matmul %178, %222, %cst_167 {dimension_numbers = #tpu.dot_dimension_numbers<[1], [0], [0], [1], [0, 0, 1, 1], [], []>} : vector<8x32xf32>, vector<32x8xf32>, vector<8x8xf32> -> vector<8x8xf32>
    %c1_168 = arith.constant 1 : index
    %c0_169 = arith.constant 0 : index
    %c0_170 = arith.constant 0 : index
    %224 = vector.load %arg10[%c1_168, %c0_169, %c0_170] : memref<8x1x8xf32, #tpu.memory_space<vmem>>, vector<1x1x8xf32>
    %225 = vector.shape_cast %224 : vector<1x1x8xf32> to vector<1x8xf32>
    %226 = vector.broadcast %225 : vector<1x8xf32> to vector<8x8xf32>
    %227 = arith.addf %223, %226 : vector<8x8xf32>
    %c1_171 = arith.constant 1 : index
    %c0_172 = arith.constant 0 : index
    %c0_173 = arith.constant 0 : index
    %228 = vector.load %arg8[%c1_171, %c0_172, %c0_173] : memref<8x32x8xf32, #tpu.memory_space<vmem>>, vector<1x32x8xf32>
    %229 = vector.shape_cast %228 : vector<1x32x8xf32> to vector<32x8xf32>
    %cst_174 = arith.constant dense<0.000000e+00> : vector<8x8xf32>
    %230 = tpu.matmul %178, %229, %cst_174 {dimension_numbers = #tpu.dot_dimension_numbers<[1], [0], [0], [1], [0, 0, 1, 1], [], []>} : vector<8x32xf32>, vector<32x8xf32>, vector<8x8xf32> -> vector<8x8xf32>
    %c1_175 = arith.constant 1 : index
    %c0_176 = arith.constant 0 : index
    %c0_177 = arith.constant 0 : index
    %231 = vector.load %arg11[%c1_175, %c0_176, %c0_177] : memref<8x1x8xf32, #tpu.memory_space<vmem>>, vector<1x1x8xf32>
    %232 = vector.shape_cast %231 : vector<1x1x8xf32> to vector<1x8xf32>
    %233 = vector.broadcast %232 : vector<1x8xf32> to vector<8x8xf32>
    %234 = arith.addf %230, %233 : vector<8x8xf32>
    %c1_178 = arith.constant 1 : index
    %c0_179 = arith.constant 0 : index
    %c0_180 = arith.constant 0 : index
    %235 = vector.load %arg9[%c1_178, %c0_179, %c0_180] : memref<8x32x8xf32, #tpu.memory_space<vmem>>, vector<1x32x8xf32>
    %236 = vector.shape_cast %235 : vector<1x32x8xf32> to vector<32x8xf32>
    %cst_181 = arith.constant dense<0.000000e+00> : vector<8x8xf32>
    %237 = tpu.matmul %178, %236, %cst_181 {dimension_numbers = #tpu.dot_dimension_numbers<[1], [0], [0], [1], [0, 0, 1, 1], [], []>} : vector<8x32xf32>, vector<32x8xf32>, vector<8x8xf32> -> vector<8x8xf32>
    %c1_182 = arith.constant 1 : index
    %c0_183 = arith.constant 0 : index
    %c0_184 = arith.constant 0 : index
    %238 = vector.load %arg12[%c1_182, %c0_183, %c0_184] : memref<8x1x8xf32, #tpu.memory_space<vmem>>, vector<1x1x8xf32>
    %239 = vector.shape_cast %238 : vector<1x1x8xf32> to vector<1x8xf32>
    %240 = vector.broadcast %239 : vector<1x8xf32> to vector<8x8xf32>
    %241 = arith.addf %237, %240 : vector<8x8xf32>
    %cst_185 = arith.constant dense<0.000000e+00> : vector<8x8xf32>
    %242 = tpu.matmul %227, %234, %cst_185 {dimension_numbers = #tpu.dot_dimension_numbers<[1], [1], [0], [0], [0, 0, 1, 0], [], []>} : vector<8x8xf32>, vector<8x8xf32>, vector<8x8xf32> -> vector<8x8xf32>
    %cst_186 = arith.constant 0.353553385 : f32
    %243 = vector.broadcast %cst_186 : f32 to vector<8x8xf32>
    %244 = arith.mulf %242, %243 : vector<8x8xf32>
    %245 = vector.broadcast %180 : vector<1x8xf32> to vector<8x8xf32>
    %246 = arith.addf %244, %245 : vector<8x8xf32>
    %cst_187 = arith.constant dense<0xFF800000> : vector<8xf32>
    %247 = vector.multi_reduction <maximumf>, %246, %cst_187 [1] : vector<8x8xf32> to vector<8xf32>
    %248 = vector.shape_cast %247 : vector<8xf32> to vector<8x1xf32>
    %249 = vector.broadcast %248 : vector<8x1xf32> to vector<8x8xf32>
    %250 = arith.subf %246, %249 : vector<8x8xf32>
    %251 = math.exp %250 : vector<8x8xf32>
    %cst_188 = arith.constant dense<0.000000e+00> : vector<8xf32>
    %252 = vector.multi_reduction <add>, %251, %cst_188 [1] : vector<8x8xf32> to vector<8xf32>
    %253 = vector.shape_cast %252 : vector<8xf32> to vector<8x1xf32>
    %254 = tpu.reciprocal %253 {approx = true} : vector<8x1xf32> -> vector<8x1xf32>
    %255 = vector.broadcast %254 : vector<8x1xf32> to vector<8x8xf32>
    %256 = arith.mulf %251, %255 : vector<8x8xf32>
    %cst_189 = arith.constant dense<0.000000e+00> : vector<8x8xf32>
    %257 = tpu.matmul %256, %241, %cst_189 {dimension_numbers = #tpu.dot_dimension_numbers<[1], [0], [0], [1], [0, 0, 1, 1], [], []>} : vector<8x8xf32>, vector<8x8xf32>, vector<8x8xf32> -> vector<8x8xf32>
    %c1_190 = arith.constant 1 : index
    %c0_191 = arith.constant 0 : index
    %c0_192 = arith.constant 0 : index
    %258 = vector.load %arg13[%c1_190, %c0_191, %c0_192] : memref<8x8x32xf32, #tpu.memory_space<vmem>>, vector<1x8x32xf32>
    %259 = vector.shape_cast %258 : vector<1x8x32xf32> to vector<8x32xf32>
    %cst_193 = arith.constant dense<0.000000e+00> : vector<8x32xf32>
    %260 = tpu.matmul %257, %259, %cst_193 {dimension_numbers = #tpu.dot_dimension_numbers<[1], [0], [0], [1], [0, 0, 1, 1], [], []>} : vector<8x8xf32>, vector<8x32xf32>, vector<8x32xf32> -> vector<8x32xf32>
    %261 = arith.addf %220, %260 : vector<8x32xf32>
    %c2_194 = arith.constant 2 : index
    %c0_195 = arith.constant 0 : index
    %c0_196 = arith.constant 0 : index
    %262 = vector.load %arg7[%c2_194, %c0_195, %c0_196] : memref<8x32x8xf32, #tpu.memory_space<vmem>>, vector<1x32x8xf32>
    %263 = vector.shape_cast %262 : vector<1x32x8xf32> to vector<32x8xf32>
    %cst_197 = arith.constant dense<0.000000e+00> : vector<8x8xf32>
    %264 = tpu.matmul %178, %263, %cst_197 {dimension_numbers = #tpu.dot_dimension_numbers<[1], [0], [0], [1], [0, 0, 1, 1], [], []>} : vector<8x32xf32>, vector<32x8xf32>, vector<8x8xf32> -> vector<8x8xf32>
    %c2_198 = arith.constant 2 : index
    %c0_199 = arith.constant 0 : index
    %c0_200 = arith.constant 0 : index
    %265 = vector.load %arg10[%c2_198, %c0_199, %c0_200] : memref<8x1x8xf32, #tpu.memory_space<vmem>>, vector<1x1x8xf32>
    %266 = vector.shape_cast %265 : vector<1x1x8xf32> to vector<1x8xf32>
    %267 = vector.broadcast %266 : vector<1x8xf32> to vector<8x8xf32>
    %268 = arith.addf %264, %267 : vector<8x8xf32>
    %c2_201 = arith.constant 2 : index
    %c0_202 = arith.constant 0 : index
    %c0_203 = arith.constant 0 : index
    %269 = vector.load %arg8[%c2_201, %c0_202, %c0_203] : memref<8x32x8xf32, #tpu.memory_space<vmem>>, vector<1x32x8xf32>
    %270 = vector.shape_cast %269 : vector<1x32x8xf32> to vector<32x8xf32>
    %cst_204 = arith.constant dense<0.000000e+00> : vector<8x8xf32>
    %271 = tpu.matmul %178, %270, %cst_204 {dimension_numbers = #tpu.dot_dimension_numbers<[1], [0], [0], [1], [0, 0, 1, 1], [], []>} : vector<8x32xf32>, vector<32x8xf32>, vector<8x8xf32> -> vector<8x8xf32>
    %c2_205 = arith.constant 2 : index
    %c0_206 = arith.constant 0 : index
    %c0_207 = arith.constant 0 : index
    %272 = vector.load %arg11[%c2_205, %c0_206, %c0_207] : memref<8x1x8xf32, #tpu.memory_space<vmem>>, vector<1x1x8xf32>
    %273 = vector.shape_cast %272 : vector<1x1x8xf32> to vector<1x8xf32>
    %274 = vector.broadcast %273 : vector<1x8xf32> to vector<8x8xf32>
    %275 = arith.addf %271, %274 : vector<8x8xf32>
    %c2_208 = arith.constant 2 : index
    %c0_209 = arith.constant 0 : index
    %c0_210 = arith.constant 0 : index
    %276 = vector.load %arg9[%c2_208, %c0_209, %c0_210] : memref<8x32x8xf32, #tpu.memory_space<vmem>>, vector<1x32x8xf32>
    %277 = vector.shape_cast %276 : vector<1x32x8xf32> to vector<32x8xf32>
    %cst_211 = arith.constant dense<0.000000e+00> : vector<8x8xf32>
    %278 = tpu.matmul %178, %277, %cst_211 {dimension_numbers = #tpu.dot_dimension_numbers<[1], [0], [0], [1], [0, 0, 1, 1], [], []>} : vector<8x32xf32>, vector<32x8xf32>, vector<8x8xf32> -> vector<8x8xf32>
    %c2_212 = arith.constant 2 : index
    %c0_213 = arith.constant 0 : index
    %c0_214 = arith.constant 0 : index
    %279 = vector.load %arg12[%c2_212, %c0_213, %c0_214] : memref<8x1x8xf32, #tpu.memory_space<vmem>>, vector<1x1x8xf32>
    %280 = vector.shape_cast %279 : vector<1x1x8xf32> to vector<1x8xf32>
    %281 = vector.broadcast %280 : vector<1x8xf32> to vector<8x8xf32>
    %282 = arith.addf %278, %281 : vector<8x8xf32>
    %cst_215 = arith.constant dense<0.000000e+00> : vector<8x8xf32>
    %283 = tpu.matmul %268, %275, %cst_215 {dimension_numbers = #tpu.dot_dimension_numbers<[1], [1], [0], [0], [0, 0, 1, 0], [], []>} : vector<8x8xf32>, vector<8x8xf32>, vector<8x8xf32> -> vector<8x8xf32>
    %cst_216 = arith.constant 0.353553385 : f32
    %284 = vector.broadcast %cst_216 : f32 to vector<8x8xf32>
    %285 = arith.mulf %283, %284 : vector<8x8xf32>
    %286 = vector.broadcast %180 : vector<1x8xf32> to vector<8x8xf32>
    %287 = arith.addf %285, %286 : vector<8x8xf32>
    %cst_217 = arith.constant dense<0xFF800000> : vector<8xf32>
    %288 = vector.multi_reduction <maximumf>, %287, %cst_217 [1] : vector<8x8xf32> to vector<8xf32>
    %289 = vector.shape_cast %288 : vector<8xf32> to vector<8x1xf32>
    %290 = vector.broadcast %289 : vector<8x1xf32> to vector<8x8xf32>
    %291 = arith.subf %287, %290 : vector<8x8xf32>
    %292 = math.exp %291 : vector<8x8xf32>
    %cst_218 = arith.constant dense<0.000000e+00> : vector<8xf32>
    %293 = vector.multi_reduction <add>, %292, %cst_218 [1] : vector<8x8xf32> to vector<8xf32>
    %294 = vector.shape_cast %293 : vector<8xf32> to vector<8x1xf32>
    %295 = tpu.reciprocal %294 {approx = true} : vector<8x1xf32> -> vector<8x1xf32>
    %296 = vector.broadcast %295 : vector<8x1xf32> to vector<8x8xf32>
    %297 = arith.mulf %292, %296 : vector<8x8xf32>
    %cst_219 = arith.constant dense<0.000000e+00> : vector<8x8xf32>
    %298 = tpu.matmul %297, %282, %cst_219 {dimension_numbers = #tpu.dot_dimension_numbers<[1], [0], [0], [1], [0, 0, 1, 1], [], []>} : vector<8x8xf32>, vector<8x8xf32>, vector<8x8xf32> -> vector<8x8xf32>
    %c2_220 = arith.constant 2 : index
    %c0_221 = arith.constant 0 : index
    %c0_222 = arith.constant 0 : index
    %299 = vector.load %arg13[%c2_220, %c0_221, %c0_222] : memref<8x8x32xf32, #tpu.memory_space<vmem>>, vector<1x8x32xf32>
    %300 = vector.shape_cast %299 : vector<1x8x32xf32> to vector<8x32xf32>
    %cst_223 = arith.constant dense<0.000000e+00> : vector<8x32xf32>
    %301 = tpu.matmul %298, %300, %cst_223 {dimension_numbers = #tpu.dot_dimension_numbers<[1], [0], [0], [1], [0, 0, 1, 1], [], []>} : vector<8x8xf32>, vector<8x32xf32>, vector<8x32xf32> -> vector<8x32xf32>
    %302 = arith.addf %261, %301 : vector<8x32xf32>
    %c3_224 = arith.constant 3 : index
    %c0_225 = arith.constant 0 : index
    %c0_226 = arith.constant 0 : index
    %303 = vector.load %arg7[%c3_224, %c0_225, %c0_226] : memref<8x32x8xf32, #tpu.memory_space<vmem>>, vector<1x32x8xf32>
    %304 = vector.shape_cast %303 : vector<1x32x8xf32> to vector<32x8xf32>
    %cst_227 = arith.constant dense<0.000000e+00> : vector<8x8xf32>
    %305 = tpu.matmul %178, %304, %cst_227 {dimension_numbers = #tpu.dot_dimension_numbers<[1], [0], [0], [1], [0, 0, 1, 1], [], []>} : vector<8x32xf32>, vector<32x8xf32>, vector<8x8xf32> -> vector<8x8xf32>
    %c3_228 = arith.constant 3 : index
    %c0_229 = arith.constant 0 : index
    %c0_230 = arith.constant 0 : index
    %306 = vector.load %arg10[%c3_228, %c0_229, %c0_230] : memref<8x1x8xf32, #tpu.memory_space<vmem>>, vector<1x1x8xf32>
    %307 = vector.shape_cast %306 : vector<1x1x8xf32> to vector<1x8xf32>
    %308 = vector.broadcast %307 : vector<1x8xf32> to vector<8x8xf32>
    %309 = arith.addf %305, %308 : vector<8x8xf32>
    %c3_231 = arith.constant 3 : index
    %c0_232 = arith.constant 0 : index
    %c0_233 = arith.constant 0 : index
    %310 = vector.load %arg8[%c3_231, %c0_232, %c0_233] : memref<8x32x8xf32, #tpu.memory_space<vmem>>, vector<1x32x8xf32>
    %311 = vector.shape_cast %310 : vector<1x32x8xf32> to vector<32x8xf32>
    %cst_234 = arith.constant dense<0.000000e+00> : vector<8x8xf32>
    %312 = tpu.matmul %178, %311, %cst_234 {dimension_numbers = #tpu.dot_dimension_numbers<[1], [0], [0], [1], [0, 0, 1, 1], [], []>} : vector<8x32xf32>, vector<32x8xf32>, vector<8x8xf32> -> vector<8x8xf32>
    %c3_235 = arith.constant 3 : index
    %c0_236 = arith.constant 0 : index
    %c0_237 = arith.constant 0 : index
    %313 = vector.load %arg11[%c3_235, %c0_236, %c0_237] : memref<8x1x8xf32, #tpu.memory_space<vmem>>, vector<1x1x8xf32>
    %314 = vector.shape_cast %313 : vector<1x1x8xf32> to vector<1x8xf32>
    %315 = vector.broadcast %314 : vector<1x8xf32> to vector<8x8xf32>
    %316 = arith.addf %312, %315 : vector<8x8xf32>
    %c3_238 = arith.constant 3 : index
    %c0_239 = arith.constant 0 : index
    %c0_240 = arith.constant 0 : index
    %317 = vector.load %arg9[%c3_238, %c0_239, %c0_240] : memref<8x32x8xf32, #tpu.memory_space<vmem>>, vector<1x32x8xf32>
    %318 = vector.shape_cast %317 : vector<1x32x8xf32> to vector<32x8xf32>
    %cst_241 = arith.constant dense<0.000000e+00> : vector<8x8xf32>
    %319 = tpu.matmul %178, %318, %cst_241 {dimension_numbers = #tpu.dot_dimension_numbers<[1], [0], [0], [1], [0, 0, 1, 1], [], []>} : vector<8x32xf32>, vector<32x8xf32>, vector<8x8xf32> -> vector<8x8xf32>
    %c3_242 = arith.constant 3 : index
    %c0_243 = arith.constant 0 : index
    %c0_244 = arith.constant 0 : index
    %320 = vector.load %arg12[%c3_242, %c0_243, %c0_244] : memref<8x1x8xf32, #tpu.memory_space<vmem>>, vector<1x1x8xf32>
    %321 = vector.shape_cast %320 : vector<1x1x8xf32> to vector<1x8xf32>
    %322 = vector.broadcast %321 : vector<1x8xf32> to vector<8x8xf32>
    %323 = arith.addf %319, %322 : vector<8x8xf32>
    %cst_245 = arith.constant dense<0.000000e+00> : vector<8x8xf32>
    %324 = tpu.matmul %309, %316, %cst_245 {dimension_numbers = #tpu.dot_dimension_numbers<[1], [1], [0], [0], [0, 0, 1, 0], [], []>} : vector<8x8xf32>, vector<8x8xf32>, vector<8x8xf32> -> vector<8x8xf32>
    %cst_246 = arith.constant 0.353553385 : f32
    %325 = vector.broadcast %cst_246 : f32 to vector<8x8xf32>
    %326 = arith.mulf %324, %325 : vector<8x8xf32>
    %327 = vector.broadcast %180 : vector<1x8xf32> to vector<8x8xf32>
    %328 = arith.addf %326, %327 : vector<8x8xf32>
    %cst_247 = arith.constant dense<0xFF800000> : vector<8xf32>
    %329 = vector.multi_reduction <maximumf>, %328, %cst_247 [1] : vector<8x8xf32> to vector<8xf32>
    %330 = vector.shape_cast %329 : vector<8xf32> to vector<8x1xf32>
    %331 = vector.broadcast %330 : vector<8x1xf32> to vector<8x8xf32>
    %332 = arith.subf %328, %331 : vector<8x8xf32>
    %333 = math.exp %332 : vector<8x8xf32>
    %cst_248 = arith.constant dense<0.000000e+00> : vector<8xf32>
    %334 = vector.multi_reduction <add>, %333, %cst_248 [1] : vector<8x8xf32> to vector<8xf32>
    %335 = vector.shape_cast %334 : vector<8xf32> to vector<8x1xf32>
    %336 = tpu.reciprocal %335 {approx = true} : vector<8x1xf32> -> vector<8x1xf32>
    %337 = vector.broadcast %336 : vector<8x1xf32> to vector<8x8xf32>
    %338 = arith.mulf %333, %337 : vector<8x8xf32>
    %cst_249 = arith.constant dense<0.000000e+00> : vector<8x8xf32>
    %339 = tpu.matmul %338, %323, %cst_249 {dimension_numbers = #tpu.dot_dimension_numbers<[1], [0], [0], [1], [0, 0, 1, 1], [], []>} : vector<8x8xf32>, vector<8x8xf32>, vector<8x8xf32> -> vector<8x8xf32>
    %c3_250 = arith.constant 3 : index
    %c0_251 = arith.constant 0 : index
    %c0_252 = arith.constant 0 : index
    %340 = vector.load %arg13[%c3_250, %c0_251, %c0_252] : memref<8x8x32xf32, #tpu.memory_space<vmem>>, vector<1x8x32xf32>
    %341 = vector.shape_cast %340 : vector<1x8x32xf32> to vector<8x32xf32>
    %cst_253 = arith.constant dense<0.000000e+00> : vector<8x32xf32>
    %342 = tpu.matmul %339, %341, %cst_253 {dimension_numbers = #tpu.dot_dimension_numbers<[1], [0], [0], [1], [0, 0, 1, 1], [], []>} : vector<8x8xf32>, vector<8x32xf32>, vector<8x32xf32> -> vector<8x32xf32>
    %343 = arith.addf %302, %342 : vector<8x32xf32>
    %c8 = arith.constant 8 : index
    %c0_254 = arith.constant 0 : index
    %344 = vector.load %arg38[%c8, %c0_254] : memref<16x32xf32, #tpu.memory_space<vmem>>, vector<8x32xf32>
    tpu.vector_store %arg38[%c8, %c0_254], %343 {strides = array<i32>} : memref<16x32xf32, #tpu.memory_space<vmem>>, vector<8x32xf32>,
    %c0_255 = arith.constant 0 : index
    %c0_256 = arith.constant 0 : index
    %345 = vector.load %arg38[%c0_255, %c0_256] : memref<16x32xf32, #tpu.memory_space<vmem>>, vector<16x32xf32>
    %c0_257 = arith.constant 0 : index
    %c0_258 = arith.constant 0 : index
    %c0_259 = arith.constant 0 : index
    %346 = vector.load %arg14[%c0_257, %c0_258, %c0_259] : memref<2x1x32xf32, #tpu.memory_space<vmem>>, vector<1x1x32xf32>
    %347 = vector.shape_cast %346 : vector<1x1x32xf32> to vector<1x32xf32>
    %348 = vector.broadcast %347 : vector<1x32xf32> to vector<16x32xf32>
    %349 = arith.addf %345, %348 : vector<16x32xf32>
    %350 = arith.addf %10, %349 : vector<16x32xf32>
    %c0_260 = arith.constant 0 : index
    %c0_261 = arith.constant 0 : index
    %c0_262 = arith.constant 0 : index
    %351 = vector.load %arg15[%c0_260, %c0_261, %c0_262] : memref<2x1x32xf32, #tpu.memory_space<vmem>>, vector<1x1x32xf32>
    %352 = vector.shape_cast %351 : vector<1x1x32xf32> to vector<1x32xf32>
    %c0_263 = arith.constant 0 : index
    %c0_264 = arith.constant 0 : index
    %c0_265 = arith.constant 0 : index
    %353 = vector.load %arg16[%c0_263, %c0_264, %c0_265] : memref<2x1x32xf32, #tpu.memory_space<vmem>>, vector<1x1x32xf32>
    %354 = vector.shape_cast %353 : vector<1x1x32xf32> to vector<1x32xf32>
    %cst_266 = arith.constant dense<0.000000e+00> : vector<16xf32>
    %355 = vector.multi_reduction <add>, %350, %cst_266 [1] : vector<16x32xf32> to vector<16xf32>
    %356 = vector.shape_cast %355 : vector<16xf32> to vector<16x1xf32>
    %cst_267 = arith.constant 3.200000e+01 : f32
    %357 = vector.broadcast %cst_267 : f32 to vector<16x1xf32>
    %358 = arith.divf %356, %357 : vector<16x1xf32>
    %359 = vector.broadcast %358 : vector<16x1xf32> to vector<16x32xf32>
    %360 = arith.subf %350, %359 : vector<16x32xf32>
    %361 = arith.mulf %360, %360 : vector<16x32xf32>
    %cst_268 = arith.constant dense<0.000000e+00> : vector<16xf32>
    %362 = vector.multi_reduction <add>, %361, %cst_268 [1] : vector<16x32xf32> to vector<16xf32>
    %363 = vector.shape_cast %362 : vector<16xf32> to vector<16x1xf32>
    %cst_269 = arith.constant 3.200000e+01 : f32
    %364 = vector.broadcast %cst_269 : f32 to vector<16x1xf32>
    %365 = arith.divf %363, %364 : vector<16x1xf32>
    %cst_270 = arith.constant 9.99999974E-6 : f32
    %366 = vector.broadcast %cst_270 : f32 to vector<16x1xf32>
    %367 = arith.addf %365, %366 : vector<16x1xf32>
    %368 = math.rsqrt %367 : vector<16x1xf32>
    %369 = vector.broadcast %368 : vector<16x1xf32> to vector<16x32xf32>
    %370 = arith.mulf %360, %369 : vector<16x32xf32>
    %371 = vector.broadcast %352 : vector<1x32xf32> to vector<16x32xf32>
    %372 = arith.mulf %370, %371 : vector<16x32xf32>
    %373 = vector.broadcast %354 : vector<1x32xf32> to vector<16x32xf32>
    %374 = arith.addf %372, %373 : vector<16x32xf32>
    %c0_271 = arith.constant 0 : index
    %c0_272 = arith.constant 0 : index
    %c0_273 = arith.constant 0 : index
    %375 = vector.load %arg17[%c0_271, %c0_272, %c0_273] : memref<2x32x64xf32, #tpu.memory_space<vmem>>, vector<1x32x64xf32>
    %376 = vector.shape_cast %375 : vector<1x32x64xf32> to vector<32x64xf32>
    %cst_274 = arith.constant dense<0.000000e+00> : vector<16x64xf32>
    %377 = tpu.matmul %374, %376, %cst_274 {dimension_numbers = #tpu.dot_dimension_numbers<[1], [0], [0], [1], [0, 0, 1, 1], [], []>} : vector<16x32xf32>, vector<32x64xf32>, vector<16x64xf32> -> vector<16x64xf32>
    %c0_275 = arith.constant 0 : index
    %c0_276 = arith.constant 0 : index
    %c0_277 = arith.constant 0 : index
    %378 = vector.load %arg18[%c0_275, %c0_276, %c0_277] : memref<2x1x64xf32, #tpu.memory_space<vmem>>, vector<1x1x64xf32>
    %379 = vector.shape_cast %378 : vector<1x1x64xf32> to vector<1x64xf32>
    %380 = vector.broadcast %379 : vector<1x64xf32> to vector<16x64xf32>
    %381 = arith.addf %377, %380 : vector<16x64xf32>
    %cst_278 = arith.constant 0.000000e+00 : f32
    %382 = vector.broadcast %cst_278 : f32 to vector<16x64xf32>
    %383 = arith.maximumf %381, %382 : vector<16x64xf32>
    %c0_279 = arith.constant 0 : index
    %c0_280 = arith.constant 0 : index
    %c0_281 = arith.constant 0 : index
    %384 = vector.load %arg19[%c0_279, %c0_280, %c0_281] : memref<2x64x32xf32, #tpu.memory_space<vmem>>, vector<1x64x32xf32>
    %385 = vector.shape_cast %384 : vector<1x64x32xf32> to vector<64x32xf32>
    %cst_282 = arith.constant dense<0.000000e+00> : vector<16x32xf32>
    %386 = tpu.matmul %383, %385, %cst_282 {dimension_numbers = #tpu.dot_dimension_numbers<[1], [0], [0], [1], [0, 0, 1, 1], [], []>} : vector<16x64xf32>, vector<64x32xf32>, vector<16x32xf32> -> vector<16x32xf32>
    %c0_283 = arith.constant 0 : index
    %c0_284 = arith.constant 0 : index
    %c0_285 = arith.constant 0 : index
    %387 = vector.load %arg20[%c0_283, %c0_284, %c0_285] : memref<2x1x32xf32, #tpu.memory_space<vmem>>, vector<1x1x32xf32>
    %388 = vector.shape_cast %387 : vector<1x1x32xf32> to vector<1x32xf32>
    %389 = vector.broadcast %388 : vector<1x32xf32> to vector<16x32xf32>
    %390 = arith.addf %386, %389 : vector<16x32xf32>
    %391 = arith.addf %374, %390 : vector<16x32xf32>
    %c0_286 = arith.constant 0 : index
    %c0_287 = arith.constant 0 : index
    %c0_288 = arith.constant 0 : index
    %392 = vector.load %arg21[%c0_286, %c0_287, %c0_288] : memref<2x1x32xf32, #tpu.memory_space<vmem>>, vector<1x1x32xf32>
    %393 = vector.shape_cast %392 : vector<1x1x32xf32> to vector<1x32xf32>
    %c0_289 = arith.constant 0 : index
    %c0_290 = arith.constant 0 : index
    %c0_291 = arith.constant 0 : index
    %394 = vector.load %arg22[%c0_289, %c0_290, %c0_291] : memref<2x1x32xf32, #tpu.memory_space<vmem>>, vector<1x1x32xf32>
    %395 = vector.shape_cast %394 : vector<1x1x32xf32> to vector<1x32xf32>
    %cst_292 = arith.constant dense<0.000000e+00> : vector<16xf32>
    %396 = vector.multi_reduction <add>, %391, %cst_292 [1] : vector<16x32xf32> to vector<16xf32>
    %397 = vector.shape_cast %396 : vector<16xf32> to vector<16x1xf32>
    %cst_293 = arith.constant 3.200000e+01 : f32
    %398 = vector.broadcast %cst_293 : f32 to vector<16x1xf32>
    %399 = arith.divf %397, %398 : vector<16x1xf32>
    %400 = vector.broadcast %399 : vector<16x1xf32> to vector<16x32xf32>
    %401 = arith.subf %391, %400 : vector<16x32xf32>
    %402 = arith.mulf %401, %401 : vector<16x32xf32>
    %cst_294 = arith.constant dense<0.000000e+00> : vector<16xf32>
    %403 = vector.multi_reduction <add>, %402, %cst_294 [1] : vector<16x32xf32> to vector<16xf32>
    %404 = vector.shape_cast %403 : vector<16xf32> to vector<16x1xf32>
    %cst_295 = arith.constant 3.200000e+01 : f32
    %405 = vector.broadcast %cst_295 : f32 to vector<16x1xf32>
    %406 = arith.divf %404, %405 : vector<16x1xf32>
    %cst_296 = arith.constant 9.99999974E-6 : f32
    %407 = vector.broadcast %cst_296 : f32 to vector<16x1xf32>
    %408 = arith.addf %406, %407 : vector<16x1xf32>
    %409 = math.rsqrt %408 : vector<16x1xf32>
    %410 = vector.broadcast %409 : vector<16x1xf32> to vector<16x32xf32>
    %411 = arith.mulf %401, %410 : vector<16x32xf32>
    %412 = vector.broadcast %393 : vector<1x32xf32> to vector<16x32xf32>
    %413 = arith.mulf %411, %412 : vector<16x32xf32>
    %414 = vector.broadcast %395 : vector<1x32xf32> to vector<16x32xf32>
    %415 = arith.addf %413, %414 : vector<16x32xf32>
    %416 = vector.extract_strided_slice %415 {offsets = [0, 0], sizes = [8, 32], strides = [1, 1]} : vector<16x32xf32> to vector<8x32xf32>
    %c0_297 = arith.constant 0 : index
    %c0_298 = arith.constant 0 : index
    %c0_299 = arith.constant 0 : index
    %417 = vector.load %arg3[%c0_297, %c0_298, %c0_299] : memref<2x1x8xf32, #tpu.memory_space<vmem>>, vector<1x1x8xf32>
    %418 = vector.shape_cast %417 : vector<1x1x8xf32> to vector<1x8xf32>
    %c4 = arith.constant 4 : index
    %c0_300 = arith.constant 0 : index
    %c0_301 = arith.constant 0 : index
    %419 = vector.load %arg7[%c4, %c0_300, %c0_301] : memref<8x32x8xf32, #tpu.memory_space<vmem>>, vector<1x32x8xf32>
    %420 = vector.shape_cast %419 : vector<1x32x8xf32> to vector<32x8xf32>
    %cst_302 = arith.constant dense<0.000000e+00> : vector<8x8xf32>
    %421 = tpu.matmul %416, %420, %cst_302 {dimension_numbers = #tpu.dot_dimension_numbers<[1], [0], [0], [1], [0, 0, 1, 1], [], []>} : vector<8x32xf32>, vector<32x8xf32>, vector<8x8xf32> -> vector<8x8xf32>
    %c4_303 = arith.constant 4 : index
    %c0_304 = arith.constant 0 : index
    %c0_305 = arith.constant 0 : index
    %422 = vector.load %arg10[%c4_303, %c0_304, %c0_305] : memref<8x1x8xf32, #tpu.memory_space<vmem>>, vector<1x1x8xf32>
    %423 = vector.shape_cast %422 : vector<1x1x8xf32> to vector<1x8xf32>
    %424 = vector.broadcast %423 : vector<1x8xf32> to vector<8x8xf32>
    %425 = arith.addf %421, %424 : vector<8x8xf32>
    %c4_306 = arith.constant 4 : index
    %c0_307 = arith.constant 0 : index
    %c0_308 = arith.constant 0 : index
    %426 = vector.load %arg8[%c4_306, %c0_307, %c0_308] : memref<8x32x8xf32, #tpu.memory_space<vmem>>, vector<1x32x8xf32>
    %427 = vector.shape_cast %426 : vector<1x32x8xf32> to vector<32x8xf32>
    %cst_309 = arith.constant dense<0.000000e+00> : vector<8x8xf32>
    %428 = tpu.matmul %416, %427, %cst_309 {dimension_numbers = #tpu.dot_dimension_numbers<[1], [0], [0], [1], [0, 0, 1, 1], [], []>} : vector<8x32xf32>, vector<32x8xf32>, vector<8x8xf32> -> vector<8x8xf32>
    %c4_310 = arith.constant 4 : index
    %c0_311 = arith.constant 0 : index
    %c0_312 = arith.constant 0 : index
    %429 = vector.load %arg11[%c4_310, %c0_311, %c0_312] : memref<8x1x8xf32, #tpu.memory_space<vmem>>, vector<1x1x8xf32>
    %430 = vector.shape_cast %429 : vector<1x1x8xf32> to vector<1x8xf32>
    %431 = vector.broadcast %430 : vector<1x8xf32> to vector<8x8xf32>
    %432 = arith.addf %428, %431 : vector<8x8xf32>
    %c4_313 = arith.constant 4 : index
    %c0_314 = arith.constant 0 : index
    %c0_315 = arith.constant 0 : index
    %433 = vector.load %arg9[%c4_313, %c0_314, %c0_315] : memref<8x32x8xf32, #tpu.memory_space<vmem>>, vector<1x32x8xf32>
    %434 = vector.shape_cast %433 : vector<1x32x8xf32> to vector<32x8xf32>
    %cst_316 = arith.constant dense<0.000000e+00> : vector<8x8xf32>
    %435 = tpu.matmul %416, %434, %cst_316 {dimension_numbers = #tpu.dot_dimension_numbers<[1], [0], [0], [1], [0, 0, 1, 1], [], []>} : vector<8x32xf32>, vector<32x8xf32>, vector<8x8xf32> -> vector<8x8xf32>
    %c4_317 = arith.constant 4 : index
    %c0_318 = arith.constant 0 : index
    %c0_319 = arith.constant 0 : index
    %436 = vector.load %arg12[%c4_317, %c0_318, %c0_319] : memref<8x1x8xf32, #tpu.memory_space<vmem>>, vector<1x1x8xf32>
    %437 = vector.shape_cast %436 : vector<1x1x8xf32> to vector<1x8xf32>
    %438 = vector.broadcast %437 : vector<1x8xf32> to vector<8x8xf32>
    %439 = arith.addf %435, %438 : vector<8x8xf32>
    %cst_320 = arith.constant dense<0.000000e+00> : vector<8x8xf32>
    %440 = tpu.matmul %425, %432, %cst_320 {dimension_numbers = #tpu.dot_dimension_numbers<[1], [1], [0], [0], [0, 0, 1, 0], [], []>} : vector<8x8xf32>, vector<8x8xf32>, vector<8x8xf32> -> vector<8x8xf32>
    %cst_321 = arith.constant 0.353553385 : f32
    %441 = vector.broadcast %cst_321 : f32 to vector<8x8xf32>
    %442 = arith.mulf %440, %441 : vector<8x8xf32>
    %443 = vector.broadcast %418 : vector<1x8xf32> to vector<8x8xf32>
    %444 = arith.addf %442, %443 : vector<8x8xf32>
    %cst_322 = arith.constant dense<0xFF800000> : vector<8xf32>
    %445 = vector.multi_reduction <maximumf>, %444, %cst_322 [1] : vector<8x8xf32> to vector<8xf32>
    %446 = vector.shape_cast %445 : vector<8xf32> to vector<8x1xf32>
    %447 = vector.broadcast %446 : vector<8x1xf32> to vector<8x8xf32>
    %448 = arith.subf %444, %447 : vector<8x8xf32>
    %449 = math.exp %448 : vector<8x8xf32>
    %cst_323 = arith.constant dense<0.000000e+00> : vector<8xf32>
    %450 = vector.multi_reduction <add>, %449, %cst_323 [1] : vector<8x8xf32> to vector<8xf32>
    %451 = vector.shape_cast %450 : vector<8xf32> to vector<8x1xf32>
    %452 = tpu.reciprocal %451 {approx = true} : vector<8x1xf32> -> vector<8x1xf32>
    %453 = vector.broadcast %452 : vector<8x1xf32> to vector<8x8xf32>
    %454 = arith.mulf %449, %453 : vector<8x8xf32>
    %cst_324 = arith.constant dense<0.000000e+00> : vector<8x8xf32>
    %455 = tpu.matmul %454, %439, %cst_324 {dimension_numbers = #tpu.dot_dimension_numbers<[1], [0], [0], [1], [0, 0, 1, 1], [], []>} : vector<8x8xf32>, vector<8x8xf32>, vector<8x8xf32> -> vector<8x8xf32>
    %c4_325 = arith.constant 4 : index
    %c0_326 = arith.constant 0 : index
    %c0_327 = arith.constant 0 : index
    %456 = vector.load %arg13[%c4_325, %c0_326, %c0_327] : memref<8x8x32xf32, #tpu.memory_space<vmem>>, vector<1x8x32xf32>
    %457 = vector.shape_cast %456 : vector<1x8x32xf32> to vector<8x32xf32>
    %cst_328 = arith.constant dense<0.000000e+00> : vector<8x32xf32>
    %458 = tpu.matmul %455, %457, %cst_328 {dimension_numbers = #tpu.dot_dimension_numbers<[1], [0], [0], [1], [0, 0, 1, 1], [], []>} : vector<8x8xf32>, vector<8x32xf32>, vector<8x32xf32> -> vector<8x32xf32>
    %c5 = arith.constant 5 : index
    %c0_329 = arith.constant 0 : index
    %c0_330 = arith.constant 0 : index
    %459 = vector.load %arg7[%c5, %c0_329, %c0_330] : memref<8x32x8xf32, #tpu.memory_space<vmem>>, vector<1x32x8xf32>
    %460 = vector.shape_cast %459 : vector<1x32x8xf32> to vector<32x8xf32>
    %cst_331 = arith.constant dense<0.000000e+00> : vector<8x8xf32>
    %461 = tpu.matmul %416, %460, %cst_331 {dimension_numbers = #tpu.dot_dimension_numbers<[1], [0], [0], [1], [0, 0, 1, 1], [], []>} : vector<8x32xf32>, vector<32x8xf32>, vector<8x8xf32> -> vector<8x8xf32>
    %c5_332 = arith.constant 5 : index
    %c0_333 = arith.constant 0 : index
    %c0_334 = arith.constant 0 : index
    %462 = vector.load %arg10[%c5_332, %c0_333, %c0_334] : memref<8x1x8xf32, #tpu.memory_space<vmem>>, vector<1x1x8xf32>
    %463 = vector.shape_cast %462 : vector<1x1x8xf32> to vector<1x8xf32>
    %464 = vector.broadcast %463 : vector<1x8xf32> to vector<8x8xf32>
    %465 = arith.addf %461, %464 : vector<8x8xf32>
    %c5_335 = arith.constant 5 : index
    %c0_336 = arith.constant 0 : index
    %c0_337 = arith.constant 0 : index
    %466 = vector.load %arg8[%c5_335, %c0_336, %c0_337] : memref<8x32x8xf32, #tpu.memory_space<vmem>>, vector<1x32x8xf32>
    %467 = vector.shape_cast %466 : vector<1x32x8xf32> to vector<32x8xf32>
    %cst_338 = arith.constant dense<0.000000e+00> : vector<8x8xf32>
    %468 = tpu.matmul %416, %467, %cst_338 {dimension_numbers = #tpu.dot_dimension_numbers<[1], [0], [0], [1], [0, 0, 1, 1], [], []>} : vector<8x32xf32>, vector<32x8xf32>, vector<8x8xf32> -> vector<8x8xf32>
    %c5_339 = arith.constant 5 : index
    %c0_340 = arith.constant 0 : index
    %c0_341 = arith.constant 0 : index
    %469 = vector.load %arg11[%c5_339, %c0_340, %c0_341] : memref<8x1x8xf32, #tpu.memory_space<vmem>>, vector<1x1x8xf32>
    %470 = vector.shape_cast %469 : vector<1x1x8xf32> to vector<1x8xf32>
    %471 = vector.broadcast %470 : vector<1x8xf32> to vector<8x8xf32>
    %472 = arith.addf %468, %471 : vector<8x8xf32>
    %c5_342 = arith.constant 5 : index
    %c0_343 = arith.constant 0 : index
    %c0_344 = arith.constant 0 : index
    %473 = vector.load %arg9[%c5_342, %c0_343, %c0_344] : memref<8x32x8xf32, #tpu.memory_space<vmem>>, vector<1x32x8xf32>
    %474 = vector.shape_cast %473 : vector<1x32x8xf32> to vector<32x8xf32>
    %cst_345 = arith.constant dense<0.000000e+00> : vector<8x8xf32>
    %475 = tpu.matmul %416, %474, %cst_345 {dimension_numbers = #tpu.dot_dimension_numbers<[1], [0], [0], [1], [0, 0, 1, 1], [], []>} : vector<8x32xf32>, vector<32x8xf32>, vector<8x8xf32> -> vector<8x8xf32>
    %c5_346 = arith.constant 5 : index
    %c0_347 = arith.constant 0 : index
    %c0_348 = arith.constant 0 : index
    %476 = vector.load %arg12[%c5_346, %c0_347, %c0_348] : memref<8x1x8xf32, #tpu.memory_space<vmem>>, vector<1x1x8xf32>
    %477 = vector.shape_cast %476 : vector<1x1x8xf32> to vector<1x8xf32>
    %478 = vector.broadcast %477 : vector<1x8xf32> to vector<8x8xf32>
    %479 = arith.addf %475, %478 : vector<8x8xf32>
    %cst_349 = arith.constant dense<0.000000e+00> : vector<8x8xf32>
    %480 = tpu.matmul %465, %472, %cst_349 {dimension_numbers = #tpu.dot_dimension_numbers<[1], [1], [0], [0], [0, 0, 1, 0], [], []>} : vector<8x8xf32>, vector<8x8xf32>, vector<8x8xf32> -> vector<8x8xf32>
    %cst_350 = arith.constant 0.353553385 : f32
    %481 = vector.broadcast %cst_350 : f32 to vector<8x8xf32>
    %482 = arith.mulf %480, %481 : vector<8x8xf32>
    %483 = vector.broadcast %418 : vector<1x8xf32> to vector<8x8xf32>
    %484 = arith.addf %482, %483 : vector<8x8xf32>
    %cst_351 = arith.constant dense<0xFF800000> : vector<8xf32>
    %485 = vector.multi_reduction <maximumf>, %484, %cst_351 [1] : vector<8x8xf32> to vector<8xf32>
    %486 = vector.shape_cast %485 : vector<8xf32> to vector<8x1xf32>
    %487 = vector.broadcast %486 : vector<8x1xf32> to vector<8x8xf32>
    %488 = arith.subf %484, %487 : vector<8x8xf32>
    %489 = math.exp %488 : vector<8x8xf32>
    %cst_352 = arith.constant dense<0.000000e+00> : vector<8xf32>
    %490 = vector.multi_reduction <add>, %489, %cst_352 [1] : vector<8x8xf32> to vector<8xf32>
    %491 = vector.shape_cast %490 : vector<8xf32> to vector<8x1xf32>
    %492 = tpu.reciprocal %491 {approx = true} : vector<8x1xf32> -> vector<8x1xf32>
    %493 = vector.broadcast %492 : vector<8x1xf32> to vector<8x8xf32>
    %494 = arith.mulf %489, %493 : vector<8x8xf32>
    %cst_353 = arith.constant dense<0.000000e+00> : vector<8x8xf32>
    %495 = tpu.matmul %494, %479, %cst_353 {dimension_numbers = #tpu.dot_dimension_numbers<[1], [0], [0], [1], [0, 0, 1, 1], [], []>} : vector<8x8xf32>, vector<8x8xf32>, vector<8x8xf32> -> vector<8x8xf32>
    %c5_354 = arith.constant 5 : index
    %c0_355 = arith.constant 0 : index
    %c0_356 = arith.constant 0 : index
    %496 = vector.load %arg13[%c5_354, %c0_355, %c0_356] : memref<8x8x32xf32, #tpu.memory_space<vmem>>, vector<1x8x32xf32>
    %497 = vector.shape_cast %496 : vector<1x8x32xf32> to vector<8x32xf32>
    %cst_357 = arith.constant dense<0.000000e+00> : vector<8x32xf32>
    %498 = tpu.matmul %495, %497, %cst_357 {dimension_numbers = #tpu.dot_dimension_numbers<[1], [0], [0], [1], [0, 0, 1, 1], [], []>} : vector<8x8xf32>, vector<8x32xf32>, vector<8x32xf32> -> vector<8x32xf32>
    %499 = arith.addf %458, %498 : vector<8x32xf32>
    %c6 = arith.constant 6 : index
    %c0_358 = arith.constant 0 : index
    %c0_359 = arith.constant 0 : index
    %500 = vector.load %arg7[%c6, %c0_358, %c0_359] : memref<8x32x8xf32, #tpu.memory_space<vmem>>, vector<1x32x8xf32>
    %501 = vector.shape_cast %500 : vector<1x32x8xf32> to vector<32x8xf32>
    %cst_360 = arith.constant dense<0.000000e+00> : vector<8x8xf32>
    %502 = tpu.matmul %416, %501, %cst_360 {dimension_numbers = #tpu.dot_dimension_numbers<[1], [0], [0], [1], [0, 0, 1, 1], [], []>} : vector<8x32xf32>, vector<32x8xf32>, vector<8x8xf32> -> vector<8x8xf32>
    %c6_361 = arith.constant 6 : index
    %c0_362 = arith.constant 0 : index
    %c0_363 = arith.constant 0 : index
    %503 = vector.load %arg10[%c6_361, %c0_362, %c0_363] : memref<8x1x8xf32, #tpu.memory_space<vmem>>, vector<1x1x8xf32>
    %504 = vector.shape_cast %503 : vector<1x1x8xf32> to vector<1x8xf32>
    %505 = vector.broadcast %504 : vector<1x8xf32> to vector<8x8xf32>
    %506 = arith.addf %502, %505 : vector<8x8xf32>
    %c6_364 = arith.constant 6 : index
    %c0_365 = arith.constant 0 : index
    %c0_366 = arith.constant 0 : index
    %507 = vector.load %arg8[%c6_364, %c0_365, %c0_366] : memref<8x32x8xf32, #tpu.memory_space<vmem>>, vector<1x32x8xf32>
    %508 = vector.shape_cast %507 : vector<1x32x8xf32> to vector<32x8xf32>
    %cst_367 = arith.constant dense<0.000000e+00> : vector<8x8xf32>
    %509 = tpu.matmul %416, %508, %cst_367 {dimension_numbers = #tpu.dot_dimension_numbers<[1], [0], [0], [1], [0, 0, 1, 1], [], []>} : vector<8x32xf32>, vector<32x8xf32>, vector<8x8xf32> -> vector<8x8xf32>
    %c6_368 = arith.constant 6 : index
    %c0_369 = arith.constant 0 : index
    %c0_370 = arith.constant 0 : index
    %510 = vector.load %arg11[%c6_368, %c0_369, %c0_370] : memref<8x1x8xf32, #tpu.memory_space<vmem>>, vector<1x1x8xf32>
    %511 = vector.shape_cast %510 : vector<1x1x8xf32> to vector<1x8xf32>
    %512 = vector.broadcast %511 : vector<1x8xf32> to vector<8x8xf32>
    %513 = arith.addf %509, %512 : vector<8x8xf32>
    %c6_371 = arith.constant 6 : index
    %c0_372 = arith.constant 0 : index
    %c0_373 = arith.constant 0 : index
    %514 = vector.load %arg9[%c6_371, %c0_372, %c0_373] : memref<8x32x8xf32, #tpu.memory_space<vmem>>, vector<1x32x8xf32>
    %515 = vector.shape_cast %514 : vector<1x32x8xf32> to vector<32x8xf32>
    %cst_374 = arith.constant dense<0.000000e+00> : vector<8x8xf32>
    %516 = tpu.matmul %416, %515, %cst_374 {dimension_numbers = #tpu.dot_dimension_numbers<[1], [0], [0], [1], [0, 0, 1, 1], [], []>} : vector<8x32xf32>, vector<32x8xf32>, vector<8x8xf32> -> vector<8x8xf32>
    %c6_375 = arith.constant 6 : index
    %c0_376 = arith.constant 0 : index
    %c0_377 = arith.constant 0 : index
    %517 = vector.load %arg12[%c6_375, %c0_376, %c0_377] : memref<8x1x8xf32, #tpu.memory_space<vmem>>, vector<1x1x8xf32>
    %518 = vector.shape_cast %517 : vector<1x1x8xf32> to vector<1x8xf32>
    %519 = vector.broadcast %518 : vector<1x8xf32> to vector<8x8xf32>
    %520 = arith.addf %516, %519 : vector<8x8xf32>
    %cst_378 = arith.constant dense<0.000000e+00> : vector<8x8xf32>
    %521 = tpu.matmul %506, %513, %cst_378 {dimension_numbers = #tpu.dot_dimension_numbers<[1], [1], [0], [0], [0, 0, 1, 0], [], []>} : vector<8x8xf32>, vector<8x8xf32>, vector<8x8xf32> -> vector<8x8xf32>
    %cst_379 = arith.constant 0.353553385 : f32
    %522 = vector.broadcast %cst_379 : f32 to vector<8x8xf32>
    %523 = arith.mulf %521, %522 : vector<8x8xf32>
    %524 = vector.broadcast %418 : vector<1x8xf32> to vector<8x8xf32>
    %525 = arith.addf %523, %524 : vector<8x8xf32>
    %cst_380 = arith.constant dense<0xFF800000> : vector<8xf32>
    %526 = vector.multi_reduction <maximumf>, %525, %cst_380 [1] : vector<8x8xf32> to vector<8xf32>
    %527 = vector.shape_cast %526 : vector<8xf32> to vector<8x1xf32>
    %528 = vector.broadcast %527 : vector<8x1xf32> to vector<8x8xf32>
    %529 = arith.subf %525, %528 : vector<8x8xf32>
    %530 = math.exp %529 : vector<8x8xf32>
    %cst_381 = arith.constant dense<0.000000e+00> : vector<8xf32>
    %531 = vector.multi_reduction <add>, %530, %cst_381 [1] : vector<8x8xf32> to vector<8xf32>
    %532 = vector.shape_cast %531 : vector<8xf32> to vector<8x1xf32>
    %533 = tpu.reciprocal %532 {approx = true} : vector<8x1xf32> -> vector<8x1xf32>
    %534 = vector.broadcast %533 : vector<8x1xf32> to vector<8x8xf32>
    %535 = arith.mulf %530, %534 : vector<8x8xf32>
    %cst_382 = arith.constant dense<0.000000e+00> : vector<8x8xf32>
    %536 = tpu.matmul %535, %520, %cst_382 {dimension_numbers = #tpu.dot_dimension_numbers<[1], [0], [0], [1], [0, 0, 1, 1], [], []>} : vector<8x8xf32>, vector<8x8xf32>, vector<8x8xf32> -> vector<8x8xf32>
    %c6_383 = arith.constant 6 : index
    %c0_384 = arith.constant 0 : index
    %c0_385 = arith.constant 0 : index
    %537 = vector.load %arg13[%c6_383, %c0_384, %c0_385] : memref<8x8x32xf32, #tpu.memory_space<vmem>>, vector<1x8x32xf32>
    %538 = vector.shape_cast %537 : vector<1x8x32xf32> to vector<8x32xf32>
    %cst_386 = arith.constant dense<0.000000e+00> : vector<8x32xf32>
    %539 = tpu.matmul %536, %538, %cst_386 {dimension_numbers = #tpu.dot_dimension_numbers<[1], [0], [0], [1], [0, 0, 1, 1], [], []>} : vector<8x8xf32>, vector<8x32xf32>, vector<8x32xf32> -> vector<8x32xf32>
    %540 = arith.addf %499, %539 : vector<8x32xf32>
    %c7 = arith.constant 7 : index
    %c0_387 = arith.constant 0 : index
    %c0_388 = arith.constant 0 : index
    %541 = vector.load %arg7[%c7, %c0_387, %c0_388] : memref<8x32x8xf32, #tpu.memory_space<vmem>>, vector<1x32x8xf32>
    %542 = vector.shape_cast %541 : vector<1x32x8xf32> to vector<32x8xf32>
    %cst_389 = arith.constant dense<0.000000e+00> : vector<8x8xf32>
    %543 = tpu.matmul %416, %542, %cst_389 {dimension_numbers = #tpu.dot_dimension_numbers<[1], [0], [0], [1], [0, 0, 1, 1], [], []>} : vector<8x32xf32>, vector<32x8xf32>, vector<8x8xf32> -> vector<8x8xf32>
    %c7_390 = arith.constant 7 : index
    %c0_391 = arith.constant 0 : index
    %c0_392 = arith.constant 0 : index
    %544 = vector.load %arg10[%c7_390, %c0_391, %c0_392] : memref<8x1x8xf32, #tpu.memory_space<vmem>>, vector<1x1x8xf32>
    %545 = vector.shape_cast %544 : vector<1x1x8xf32> to vector<1x8xf32>
    %546 = vector.broadcast %545 : vector<1x8xf32> to vector<8x8xf32>
    %547 = arith.addf %543, %546 : vector<8x8xf32>
    %c7_393 = arith.constant 7 : index
    %c0_394 = arith.constant 0 : index
    %c0_395 = arith.constant 0 : index
    %548 = vector.load %arg8[%c7_393, %c0_394, %c0_395] : memref<8x32x8xf32, #tpu.memory_space<vmem>>, vector<1x32x8xf32>
    %549 = vector.shape_cast %548 : vector<1x32x8xf32> to vector<32x8xf32>
    %cst_396 = arith.constant dense<0.000000e+00> : vector<8x8xf32>
    %550 = tpu.matmul %416, %549, %cst_396 {dimension_numbers = #tpu.dot_dimension_numbers<[1], [0], [0], [1], [0, 0, 1, 1], [], []>} : vector<8x32xf32>, vector<32x8xf32>, vector<8x8xf32> -> vector<8x8xf32>
    %c7_397 = arith.constant 7 : index
    %c0_398 = arith.constant 0 : index
    %c0_399 = arith.constant 0 : index
    %551 = vector.load %arg11[%c7_397, %c0_398, %c0_399] : memref<8x1x8xf32, #tpu.memory_space<vmem>>, vector<1x1x8xf32>
    %552 = vector.shape_cast %551 : vector<1x1x8xf32> to vector<1x8xf32>
    %553 = vector.broadcast %552 : vector<1x8xf32> to vector<8x8xf32>
    %554 = arith.addf %550, %553 : vector<8x8xf32>
    %c7_400 = arith.constant 7 : index
    %c0_401 = arith.constant 0 : index
    %c0_402 = arith.constant 0 : index
    %555 = vector.load %arg9[%c7_400, %c0_401, %c0_402] : memref<8x32x8xf32, #tpu.memory_space<vmem>>, vector<1x32x8xf32>
    %556 = vector.shape_cast %555 : vector<1x32x8xf32> to vector<32x8xf32>
    %cst_403 = arith.constant dense<0.000000e+00> : vector<8x8xf32>
    %557 = tpu.matmul %416, %556, %cst_403 {dimension_numbers = #tpu.dot_dimension_numbers<[1], [0], [0], [1], [0, 0, 1, 1], [], []>} : vector<8x32xf32>, vector<32x8xf32>, vector<8x8xf32> -> vector<8x8xf32>
    %c7_404 = arith.constant 7 : index
    %c0_405 = arith.constant 0 : index
    %c0_406 = arith.constant 0 : index
    %558 = vector.load %arg12[%c7_404, %c0_405, %c0_406] : memref<8x1x8xf32, #tpu.memory_space<vmem>>, vector<1x1x8xf32>
    %559 = vector.shape_cast %558 : vector<1x1x8xf32> to vector<1x8xf32>
    %560 = vector.broadcast %559 : vector<1x8xf32> to vector<8x8xf32>
    %561 = arith.addf %557, %560 : vector<8x8xf32>
    %cst_407 = arith.constant dense<0.000000e+00> : vector<8x8xf32>
    %562 = tpu.matmul %547, %554, %cst_407 {dimension_numbers = #tpu.dot_dimension_numbers<[1], [1], [0], [0], [0, 0, 1, 0], [], []>} : vector<8x8xf32>, vector<8x8xf32>, vector<8x8xf32> -> vector<8x8xf32>
    %cst_408 = arith.constant 0.353553385 : f32
    %563 = vector.broadcast %cst_408 : f32 to vector<8x8xf32>
    %564 = arith.mulf %562, %563 : vector<8x8xf32>
    %565 = vector.broadcast %418 : vector<1x8xf32> to vector<8x8xf32>
    %566 = arith.addf %564, %565 : vector<8x8xf32>
    %cst_409 = arith.constant dense<0xFF800000> : vector<8xf32>
    %567 = vector.multi_reduction <maximumf>, %566, %cst_409 [1] : vector<8x8xf32> to vector<8xf32>
    %568 = vector.shape_cast %567 : vector<8xf32> to vector<8x1xf32>
    %569 = vector.broadcast %568 : vector<8x1xf32> to vector<8x8xf32>
    %570 = arith.subf %566, %569 : vector<8x8xf32>
    %571 = math.exp %570 : vector<8x8xf32>
    %cst_410 = arith.constant dense<0.000000e+00> : vector<8xf32>
    %572 = vector.multi_reduction <add>, %571, %cst_410 [1] : vector<8x8xf32> to vector<8xf32>
    %573 = vector.shape_cast %572 : vector<8xf32> to vector<8x1xf32>
    %574 = tpu.reciprocal %573 {approx = true} : vector<8x1xf32> -> vector<8x1xf32>
    %575 = vector.broadcast %574 : vector<8x1xf32> to vector<8x8xf32>
    %576 = arith.mulf %571, %575 : vector<8x8xf32>
    %cst_411 = arith.constant dense<0.000000e+00> : vector<8x8xf32>
    %577 = tpu.matmul %576, %561, %cst_411 {dimension_numbers = #tpu.dot_dimension_numbers<[1], [0], [0], [1], [0, 0, 1, 1], [], []>} : vector<8x8xf32>, vector<8x8xf32>, vector<8x8xf32> -> vector<8x8xf32>
    %c7_412 = arith.constant 7 : index
    %c0_413 = arith.constant 0 : index
    %c0_414 = arith.constant 0 : index
    %578 = vector.load %arg13[%c7_412, %c0_413, %c0_414] : memref<8x8x32xf32, #tpu.memory_space<vmem>>, vector<1x8x32xf32>
    %579 = vector.shape_cast %578 : vector<1x8x32xf32> to vector<8x32xf32>
    %cst_415 = arith.constant dense<0.000000e+00> : vector<8x32xf32>
    %580 = tpu.matmul %577, %579, %cst_415 {dimension_numbers = #tpu.dot_dimension_numbers<[1], [0], [0], [1], [0, 0, 1, 1], [], []>} : vector<8x8xf32>, vector<8x32xf32>, vector<8x32xf32> -> vector<8x32xf32>
    %581 = arith.addf %540, %580 : vector<8x32xf32>
    %c0_416 = arith.constant 0 : index
    %c0_417 = arith.constant 0 : index
    %582 = vector.load %arg38[%c0_416, %c0_417] : memref<16x32xf32, #tpu.memory_space<vmem>>, vector<8x32xf32>
    tpu.vector_store %arg38[%c0_416, %c0_417], %581 {strides = array<i32>} : memref<16x32xf32, #tpu.memory_space<vmem>>, vector<8x32xf32>,
    %583 = vector.extract_strided_slice %415 {offsets = [8, 0], sizes = [8, 32], strides = [1, 1]} : vector<16x32xf32> to vector<8x32xf32>
    %c1_418 = arith.constant 1 : index
    %c0_419 = arith.constant 0 : index
    %c0_420 = arith.constant 0 : index
    %584 = vector.load %arg3[%c1_418, %c0_419, %c0_420] : memref<2x1x8xf32, #tpu.memory_space<vmem>>, vector<1x1x8xf32>
    %585 = vector.shape_cast %584 : vector<1x1x8xf32> to vector<1x8xf32>
    %c4_421 = arith.constant 4 : index
    %c0_422 = arith.constant 0 : index
    %c0_423 = arith.constant 0 : index
    %586 = vector.load %arg7[%c4_421, %c0_422, %c0_423] : memref<8x32x8xf32, #tpu.memory_space<vmem>>, vector<1x32x8xf32>
    %587 = vector.shape_cast %586 : vector<1x32x8xf32> to vector<32x8xf32>
    %cst_424 = arith.constant dense<0.000000e+00> : vector<8x8xf32>
    %588 = tpu.matmul %583, %587, %cst_424 {dimension_numbers = #tpu.dot_dimension_numbers<[1], [0], [0], [1], [0, 0, 1, 1], [], []>} : vector<8x32xf32>, vector<32x8xf32>, vector<8x8xf32> -> vector<8x8xf32>
    %c4_425 = arith.constant 4 : index
    %c0_426 = arith.constant 0 : index
    %c0_427 = arith.constant 0 : index
    %589 = vector.load %arg10[%c4_425, %c0_426, %c0_427] : memref<8x1x8xf32, #tpu.memory_space<vmem>>, vector<1x1x8xf32>
    %590 = vector.shape_cast %589 : vector<1x1x8xf32> to vector<1x8xf32>
    %591 = vector.broadcast %590 : vector<1x8xf32> to vector<8x8xf32>
    %592 = arith.addf %588, %591 : vector<8x8xf32>
    %c4_428 = arith.constant 4 : index
    %c0_429 = arith.constant 0 : index
    %c0_430 = arith.constant 0 : index
    %593 = vector.load %arg8[%c4_428, %c0_429, %c0_430] : memref<8x32x8xf32, #tpu.memory_space<vmem>>, vector<1x32x8xf32>
    %594 = vector.shape_cast %593 : vector<1x32x8xf32> to vector<32x8xf32>
    %cst_431 = arith.constant dense<0.000000e+00> : vector<8x8xf32>
    %595 = tpu.matmul %583, %594, %cst_431 {dimension_numbers = #tpu.dot_dimension_numbers<[1], [0], [0], [1], [0, 0, 1, 1], [], []>} : vector<8x32xf32>, vector<32x8xf32>, vector<8x8xf32> -> vector<8x8xf32>
    %c4_432 = arith.constant 4 : index
    %c0_433 = arith.constant 0 : index
    %c0_434 = arith.constant 0 : index
    %596 = vector.load %arg11[%c4_432, %c0_433, %c0_434] : memref<8x1x8xf32, #tpu.memory_space<vmem>>, vector<1x1x8xf32>
    %597 = vector.shape_cast %596 : vector<1x1x8xf32> to vector<1x8xf32>
    %598 = vector.broadcast %597 : vector<1x8xf32> to vector<8x8xf32>
    %599 = arith.addf %595, %598 : vector<8x8xf32>
    %c4_435 = arith.constant 4 : index
    %c0_436 = arith.constant 0 : index
    %c0_437 = arith.constant 0 : index
    %600 = vector.load %arg9[%c4_435, %c0_436, %c0_437] : memref<8x32x8xf32, #tpu.memory_space<vmem>>, vector<1x32x8xf32>
    %601 = vector.shape_cast %600 : vector<1x32x8xf32> to vector<32x8xf32>
    %cst_438 = arith.constant dense<0.000000e+00> : vector<8x8xf32>
    %602 = tpu.matmul %583, %601, %cst_438 {dimension_numbers = #tpu.dot_dimension_numbers<[1], [0], [0], [1], [0, 0, 1, 1], [], []>} : vector<8x32xf32>, vector<32x8xf32>, vector<8x8xf32> -> vector<8x8xf32>
    %c4_439 = arith.constant 4 : index
    %c0_440 = arith.constant 0 : index
    %c0_441 = arith.constant 0 : index
    %603 = vector.load %arg12[%c4_439, %c0_440, %c0_441] : memref<8x1x8xf32, #tpu.memory_space<vmem>>, vector<1x1x8xf32>
    %604 = vector.shape_cast %603 : vector<1x1x8xf32> to vector<1x8xf32>
    %605 = vector.broadcast %604 : vector<1x8xf32> to vector<8x8xf32>
    %606 = arith.addf %602, %605 : vector<8x8xf32>
    %cst_442 = arith.constant dense<0.000000e+00> : vector<8x8xf32>
    %607 = tpu.matmul %592, %599, %cst_442 {dimension_numbers = #tpu.dot_dimension_numbers<[1], [1], [0], [0], [0, 0, 1, 0], [], []>} : vector<8x8xf32>, vector<8x8xf32>, vector<8x8xf32> -> vector<8x8xf32>
    %cst_443 = arith.constant 0.353553385 : f32
    %608 = vector.broadcast %cst_443 : f32 to vector<8x8xf32>
    %609 = arith.mulf %607, %608 : vector<8x8xf32>
    %610 = vector.broadcast %585 : vector<1x8xf32> to vector<8x8xf32>
    %611 = arith.addf %609, %610 : vector<8x8xf32>
    %cst_444 = arith.constant dense<0xFF800000> : vector<8xf32>
    %612 = vector.multi_reduction <maximumf>, %611, %cst_444 [1] : vector<8x8xf32> to vector<8xf32>
    %613 = vector.shape_cast %612 : vector<8xf32> to vector<8x1xf32>
    %614 = vector.broadcast %613 : vector<8x1xf32> to vector<8x8xf32>
    %615 = arith.subf %611, %614 : vector<8x8xf32>
    %616 = math.exp %615 : vector<8x8xf32>
    %cst_445 = arith.constant dense<0.000000e+00> : vector<8xf32>
    %617 = vector.multi_reduction <add>, %616, %cst_445 [1] : vector<8x8xf32> to vector<8xf32>
    %618 = vector.shape_cast %617 : vector<8xf32> to vector<8x1xf32>
    %619 = tpu.reciprocal %618 {approx = true} : vector<8x1xf32> -> vector<8x1xf32>
    %620 = vector.broadcast %619 : vector<8x1xf32> to vector<8x8xf32>
    %621 = arith.mulf %616, %620 : vector<8x8xf32>
    %cst_446 = arith.constant dense<0.000000e+00> : vector<8x8xf32>
    %622 = tpu.matmul %621, %606, %cst_446 {dimension_numbers = #tpu.dot_dimension_numbers<[1], [0], [0], [1], [0, 0, 1, 1], [], []>} : vector<8x8xf32>, vector<8x8xf32>, vector<8x8xf32> -> vector<8x8xf32>
    %c4_447 = arith.constant 4 : index
    %c0_448 = arith.constant 0 : index
    %c0_449 = arith.constant 0 : index
    %623 = vector.load %arg13[%c4_447, %c0_448, %c0_449] : memref<8x8x32xf32, #tpu.memory_space<vmem>>, vector<1x8x32xf32>
    %624 = vector.shape_cast %623 : vector<1x8x32xf32> to vector<8x32xf32>
    %cst_450 = arith.constant dense<0.000000e+00> : vector<8x32xf32>
    %625 = tpu.matmul %622, %624, %cst_450 {dimension_numbers = #tpu.dot_dimension_numbers<[1], [0], [0], [1], [0, 0, 1, 1], [], []>} : vector<8x8xf32>, vector<8x32xf32>, vector<8x32xf32> -> vector<8x32xf32>
    %c5_451 = arith.constant 5 : index
    %c0_452 = arith.constant 0 : index
    %c0_453 = arith.constant 0 : index
    %626 = vector.load %arg7[%c5_451, %c0_452, %c0_453] : memref<8x32x8xf32, #tpu.memory_space<vmem>>, vector<1x32x8xf32>
    %627 = vector.shape_cast %626 : vector<1x32x8xf32> to vector<32x8xf32>
    %cst_454 = arith.constant dense<0.000000e+00> : vector<8x8xf32>
    %628 = tpu.matmul %583, %627, %cst_454 {dimension_numbers = #tpu.dot_dimension_numbers<[1], [0], [0], [1], [0, 0, 1, 1], [], []>} : vector<8x32xf32>, vector<32x8xf32>, vector<8x8xf32> -> vector<8x8xf32>
    %c5_455 = arith.constant 5 : index
    %c0_456 = arith.constant 0 : index
    %c0_457 = arith.constant 0 : index
    %629 = vector.load %arg10[%c5_455, %c0_456, %c0_457] : memref<8x1x8xf32, #tpu.memory_space<vmem>>, vector<1x1x8xf32>
    %630 = vector.shape_cast %629 : vector<1x1x8xf32> to vector<1x8xf32>
    %631 = vector.broadcast %630 : vector<1x8xf32> to vector<8x8xf32>
    %632 = arith.addf %628, %631 : vector<8x8xf32>
    %c5_458 = arith.constant 5 : index
    %c0_459 = arith.constant 0 : index
    %c0_460 = arith.constant 0 : index
    %633 = vector.load %arg8[%c5_458, %c0_459, %c0_460] : memref<8x32x8xf32, #tpu.memory_space<vmem>>, vector<1x32x8xf32>
    %634 = vector.shape_cast %633 : vector<1x32x8xf32> to vector<32x8xf32>
    %cst_461 = arith.constant dense<0.000000e+00> : vector<8x8xf32>
    %635 = tpu.matmul %583, %634, %cst_461 {dimension_numbers = #tpu.dot_dimension_numbers<[1], [0], [0], [1], [0, 0, 1, 1], [], []>} : vector<8x32xf32>, vector<32x8xf32>, vector<8x8xf32> -> vector<8x8xf32>
    %c5_462 = arith.constant 5 : index
    %c0_463 = arith.constant 0 : index
    %c0_464 = arith.constant 0 : index
    %636 = vector.load %arg11[%c5_462, %c0_463, %c0_464] : memref<8x1x8xf32, #tpu.memory_space<vmem>>, vector<1x1x8xf32>
    %637 = vector.shape_cast %636 : vector<1x1x8xf32> to vector<1x8xf32>
    %638 = vector.broadcast %637 : vector<1x8xf32> to vector<8x8xf32>
    %639 = arith.addf %635, %638 : vector<8x8xf32>
    %c5_465 = arith.constant 5 : index
    %c0_466 = arith.constant 0 : index
    %c0_467 = arith.constant 0 : index
    %640 = vector.load %arg9[%c5_465, %c0_466, %c0_467] : memref<8x32x8xf32, #tpu.memory_space<vmem>>, vector<1x32x8xf32>
    %641 = vector.shape_cast %640 : vector<1x32x8xf32> to vector<32x8xf32>
    %cst_468 = arith.constant dense<0.000000e+00> : vector<8x8xf32>
    %642 = tpu.matmul %583, %641, %cst_468 {dimension_numbers = #tpu.dot_dimension_numbers<[1], [0], [0], [1], [0, 0, 1, 1], [], []>} : vector<8x32xf32>, vector<32x8xf32>, vector<8x8xf32> -> vector<8x8xf32>
    %c5_469 = arith.constant 5 : index
    %c0_470 = arith.constant 0 : index
    %c0_471 = arith.constant 0 : index
    %643 = vector.load %arg12[%c5_469, %c0_470, %c0_471] : memref<8x1x8xf32, #tpu.memory_space<vmem>>, vector<1x1x8xf32>
    %644 = vector.shape_cast %643 : vector<1x1x8xf32> to vector<1x8xf32>
    %645 = vector.broadcast %644 : vector<1x8xf32> to vector<8x8xf32>
    %646 = arith.addf %642, %645 : vector<8x8xf32>
    %cst_472 = arith.constant dense<0.000000e+00> : vector<8x8xf32>
    %647 = tpu.matmul %632, %639, %cst_472 {dimension_numbers = #tpu.dot_dimension_numbers<[1], [1], [0], [0], [0, 0, 1, 0], [], []>} : vector<8x8xf32>, vector<8x8xf32>, vector<8x8xf32> -> vector<8x8xf32>
    %cst_473 = arith.constant 0.353553385 : f32
    %648 = vector.broadcast %cst_473 : f32 to vector<8x8xf32>
    %649 = arith.mulf %647, %648 : vector<8x8xf32>
    %650 = vector.broadcast %585 : vector<1x8xf32> to vector<8x8xf32>
    %651 = arith.addf %649, %650 : vector<8x8xf32>
    %cst_474 = arith.constant dense<0xFF800000> : vector<8xf32>
    %652 = vector.multi_reduction <maximumf>, %651, %cst_474 [1] : vector<8x8xf32> to vector<8xf32>
    %653 = vector.shape_cast %652 : vector<8xf32> to vector<8x1xf32>
    %654 = vector.broadcast %653 : vector<8x1xf32> to vector<8x8xf32>
    %655 = arith.subf %651, %654 : vector<8x8xf32>
    %656 = math.exp %655 : vector<8x8xf32>
    %cst_475 = arith.constant dense<0.000000e+00> : vector<8xf32>
    %657 = vector.multi_reduction <add>, %656, %cst_475 [1] : vector<8x8xf32> to vector<8xf32>
    %658 = vector.shape_cast %657 : vector<8xf32> to vector<8x1xf32>
    %659 = tpu.reciprocal %658 {approx = true} : vector<8x1xf32> -> vector<8x1xf32>
    %660 = vector.broadcast %659 : vector<8x1xf32> to vector<8x8xf32>
    %661 = arith.mulf %656, %660 : vector<8x8xf32>
    %cst_476 = arith.constant dense<0.000000e+00> : vector<8x8xf32>
    %662 = tpu.matmul %661, %646, %cst_476 {dimension_numbers = #tpu.dot_dimension_numbers<[1], [0], [0], [1], [0, 0, 1, 1], [], []>} : vector<8x8xf32>, vector<8x8xf32>, vector<8x8xf32> -> vector<8x8xf32>
    %c5_477 = arith.constant 5 : index
    %c0_478 = arith.constant 0 : index
    %c0_479 = arith.constant 0 : index
    %663 = vector.load %arg13[%c5_477, %c0_478, %c0_479] : memref<8x8x32xf32, #tpu.memory_space<vmem>>, vector<1x8x32xf32>
    %664 = vector.shape_cast %663 : vector<1x8x32xf32> to vector<8x32xf32>
    %cst_480 = arith.constant dense<0.000000e+00> : vector<8x32xf32>
    %665 = tpu.matmul %662, %664, %cst_480 {dimension_numbers = #tpu.dot_dimension_numbers<[1], [0], [0], [1], [0, 0, 1, 1], [], []>} : vector<8x8xf32>, vector<8x32xf32>, vector<8x32xf32> -> vector<8x32xf32>
    %666 = arith.addf %625, %665 : vector<8x32xf32>
    %c6_481 = arith.constant 6 : index
    %c0_482 = arith.constant 0 : index
    %c0_483 = arith.constant 0 : index
    %667 = vector.load %arg7[%c6_481, %c0_482, %c0_483] : memref<8x32x8xf32, #tpu.memory_space<vmem>>, vector<1x32x8xf32>
    %668 = vector.shape_cast %667 : vector<1x32x8xf32> to vector<32x8xf32>
    %cst_484 = arith.constant dense<0.000000e+00> : vector<8x8xf32>
    %669 = tpu.matmul %583, %668, %cst_484 {dimension_numbers = #tpu.dot_dimension_numbers<[1], [0], [0], [1], [0, 0, 1, 1], [], []>} : vector<8x32xf32>, vector<32x8xf32>, vector<8x8xf32> -> vector<8x8xf32>
    %c6_485 = arith.constant 6 : index
    %c0_486 = arith.constant 0 : index
    %c0_487 = arith.constant 0 : index
    %670 = vector.load %arg10[%c6_485, %c0_486, %c0_487] : memref<8x1x8xf32, #tpu.memory_space<vmem>>, vector<1x1x8xf32>
    %671 = vector.shape_cast %670 : vector<1x1x8xf32> to vector<1x8xf32>
    %672 = vector.broadcast %671 : vector<1x8xf32> to vector<8x8xf32>
    %673 = arith.addf %669, %672 : vector<8x8xf32>
    %c6_488 = arith.constant 6 : index
    %c0_489 = arith.constant 0 : index
    %c0_490 = arith.constant 0 : index
    %674 = vector.load %arg8[%c6_488, %c0_489, %c0_490] : memref<8x32x8xf32, #tpu.memory_space<vmem>>, vector<1x32x8xf32>
    %675 = vector.shape_cast %674 : vector<1x32x8xf32> to vector<32x8xf32>
    %cst_491 = arith.constant dense<0.000000e+00> : vector<8x8xf32>
    %676 = tpu.matmul %583, %675, %cst_491 {dimension_numbers = #tpu.dot_dimension_numbers<[1], [0], [0], [1], [0, 0, 1, 1], [], []>} : vector<8x32xf32>, vector<32x8xf32>, vector<8x8xf32> -> vector<8x8xf32>
    %c6_492 = arith.constant 6 : index
    %c0_493 = arith.constant 0 : index
    %c0_494 = arith.constant 0 : index
    %677 = vector.load %arg11[%c6_492, %c0_493, %c0_494] : memref<8x1x8xf32, #tpu.memory_space<vmem>>, vector<1x1x8xf32>
    %678 = vector.shape_cast %677 : vector<1x1x8xf32> to vector<1x8xf32>
    %679 = vector.broadcast %678 : vector<1x8xf32> to vector<8x8xf32>
    %680 = arith.addf %676, %679 : vector<8x8xf32>
    %c6_495 = arith.constant 6 : index
    %c0_496 = arith.constant 0 : index
    %c0_497 = arith.constant 0 : index
    %681 = vector.load %arg9[%c6_495, %c0_496, %c0_497] : memref<8x32x8xf32, #tpu.memory_space<vmem>>, vector<1x32x8xf32>
    %682 = vector.shape_cast %681 : vector<1x32x8xf32> to vector<32x8xf32>
    %cst_498 = arith.constant dense<0.000000e+00> : vector<8x8xf32>
    %683 = tpu.matmul %583, %682, %cst_498 {dimension_numbers = #tpu.dot_dimension_numbers<[1], [0], [0], [1], [0, 0, 1, 1], [], []>} : vector<8x32xf32>, vector<32x8xf32>, vector<8x8xf32> -> vector<8x8xf32>
    %c6_499 = arith.constant 6 : index
    %c0_500 = arith.constant 0 : index
    %c0_501 = arith.constant 0 : index
    %684 = vector.load %arg12[%c6_499, %c0_500, %c0_501] : memref<8x1x8xf32, #tpu.memory_space<vmem>>, vector<1x1x8xf32>
    %685 = vector.shape_cast %684 : vector<1x1x8xf32> to vector<1x8xf32>
    %686 = vector.broadcast %685 : vector<1x8xf32> to vector<8x8xf32>
    %687 = arith.addf %683, %686 : vector<8x8xf32>
    %cst_502 = arith.constant dense<0.000000e+00> : vector<8x8xf32>
    %688 = tpu.matmul %673, %680, %cst_502 {dimension_numbers = #tpu.dot_dimension_numbers<[1], [1], [0], [0], [0, 0, 1, 0], [], []>} : vector<8x8xf32>, vector<8x8xf32>, vector<8x8xf32> -> vector<8x8xf32>
    %cst_503 = arith.constant 0.353553385 : f32
    %689 = vector.broadcast %cst_503 : f32 to vector<8x8xf32>
    %690 = arith.mulf %688, %689 : vector<8x8xf32>
    %691 = vector.broadcast %585 : vector<1x8xf32> to vector<8x8xf32>
    %692 = arith.addf %690, %691 : vector<8x8xf32>
    %cst_504 = arith.constant dense<0xFF800000> : vector<8xf32>
    %693 = vector.multi_reduction <maximumf>, %692, %cst_504 [1] : vector<8x8xf32> to vector<8xf32>
    %694 = vector.shape_cast %693 : vector<8xf32> to vector<8x1xf32>
    %695 = vector.broadcast %694 : vector<8x1xf32> to vector<8x8xf32>
    %696 = arith.subf %692, %695 : vector<8x8xf32>
    %697 = math.exp %696 : vector<8x8xf32>
    %cst_505 = arith.constant dense<0.000000e+00> : vector<8xf32>
    %698 = vector.multi_reduction <add>, %697, %cst_505 [1] : vector<8x8xf32> to vector<8xf32>
    %699 = vector.shape_cast %698 : vector<8xf32> to vector<8x1xf32>
    %700 = tpu.reciprocal %699 {approx = true} : vector<8x1xf32> -> vector<8x1xf32>
    %701 = vector.broadcast %700 : vector<8x1xf32> to vector<8x8xf32>
    %702 = arith.mulf %697, %701 : vector<8x8xf32>
    %cst_506 = arith.constant dense<0.000000e+00> : vector<8x8xf32>
    %703 = tpu.matmul %702, %687, %cst_506 {dimension_numbers = #tpu.dot_dimension_numbers<[1], [0], [0], [1], [0, 0, 1, 1], [], []>} : vector<8x8xf32>, vector<8x8xf32>, vector<8x8xf32> -> vector<8x8xf32>
    %c6_507 = arith.constant 6 : index
    %c0_508 = arith.constant 0 : index
    %c0_509 = arith.constant 0 : index
    %704 = vector.load %arg13[%c6_507, %c0_508, %c0_509] : memref<8x8x32xf32, #tpu.memory_space<vmem>>, vector<1x8x32xf32>
    %705 = vector.shape_cast %704 : vector<1x8x32xf32> to vector<8x32xf32>
    %cst_510 = arith.constant dense<0.000000e+00> : vector<8x32xf32>
    %706 = tpu.matmul %703, %705, %cst_510 {dimension_numbers = #tpu.dot_dimension_numbers<[1], [0], [0], [1], [0, 0, 1, 1], [], []>} : vector<8x8xf32>, vector<8x32xf32>, vector<8x32xf32> -> vector<8x32xf32>
    %707 = arith.addf %666, %706 : vector<8x32xf32>
    %c7_511 = arith.constant 7 : index
    %c0_512 = arith.constant 0 : index
    %c0_513 = arith.constant 0 : index
    %708 = vector.load %arg7[%c7_511, %c0_512, %c0_513] : memref<8x32x8xf32, #tpu.memory_space<vmem>>, vector<1x32x8xf32>
    %709 = vector.shape_cast %708 : vector<1x32x8xf32> to vector<32x8xf32>
    %cst_514 = arith.constant dense<0.000000e+00> : vector<8x8xf32>
    %710 = tpu.matmul %583, %709, %cst_514 {dimension_numbers = #tpu.dot_dimension_numbers<[1], [0], [0], [1], [0, 0, 1, 1], [], []>} : vector<8x32xf32>, vector<32x8xf32>, vector<8x8xf32> -> vector<8x8xf32>
    %c7_515 = arith.constant 7 : index
    %c0_516 = arith.constant 0 : index
    %c0_517 = arith.constant 0 : index
    %711 = vector.load %arg10[%c7_515, %c0_516, %c0_517] : memref<8x1x8xf32, #tpu.memory_space<vmem>>, vector<1x1x8xf32>
    %712 = vector.shape_cast %711 : vector<1x1x8xf32> to vector<1x8xf32>
    %713 = vector.broadcast %712 : vector<1x8xf32> to vector<8x8xf32>
    %714 = arith.addf %710, %713 : vector<8x8xf32>
    %c7_518 = arith.constant 7 : index
    %c0_519 = arith.constant 0 : index
    %c0_520 = arith.constant 0 : index
    %715 = vector.load %arg8[%c7_518, %c0_519, %c0_520] : memref<8x32x8xf32, #tpu.memory_space<vmem>>, vector<1x32x8xf32>
    %716 = vector.shape_cast %715 : vector<1x32x8xf32> to vector<32x8xf32>
    %cst_521 = arith.constant dense<0.000000e+00> : vector<8x8xf32>
    %717 = tpu.matmul %583, %716, %cst_521 {dimension_numbers = #tpu.dot_dimension_numbers<[1], [0], [0], [1], [0, 0, 1, 1], [], []>} : vector<8x32xf32>, vector<32x8xf32>, vector<8x8xf32> -> vector<8x8xf32>
    %c7_522 = arith.constant 7 : index
    %c0_523 = arith.constant 0 : index
    %c0_524 = arith.constant 0 : index
    %718 = vector.load %arg11[%c7_522, %c0_523, %c0_524] : memref<8x1x8xf32, #tpu.memory_space<vmem>>, vector<1x1x8xf32>
    %719 = vector.shape_cast %718 : vector<1x1x8xf32> to vector<1x8xf32>
    %720 = vector.broadcast %719 : vector<1x8xf32> to vector<8x8xf32>
    %721 = arith.addf %717, %720 : vector<8x8xf32>
    %c7_525 = arith.constant 7 : index
    %c0_526 = arith.constant 0 : index
    %c0_527 = arith.constant 0 : index
    %722 = vector.load %arg9[%c7_525, %c0_526, %c0_527] : memref<8x32x8xf32, #tpu.memory_space<vmem>>, vector<1x32x8xf32>
    %723 = vector.shape_cast %722 : vector<1x32x8xf32> to vector<32x8xf32>
    %cst_528 = arith.constant dense<0.000000e+00> : vector<8x8xf32>
    %724 = tpu.matmul %583, %723, %cst_528 {dimension_numbers = #tpu.dot_dimension_numbers<[1], [0], [0], [1], [0, 0, 1, 1], [], []>} : vector<8x32xf32>, vector<32x8xf32>, vector<8x8xf32> -> vector<8x8xf32>
    %c7_529 = arith.constant 7 : index
    %c0_530 = arith.constant 0 : index
    %c0_531 = arith.constant 0 : index
    %725 = vector.load %arg12[%c7_529, %c0_530, %c0_531] : memref<8x1x8xf32, #tpu.memory_space<vmem>>, vector<1x1x8xf32>
    %726 = vector.shape_cast %725 : vector<1x1x8xf32> to vector<1x8xf32>
    %727 = vector.broadcast %726 : vector<1x8xf32> to vector<8x8xf32>
    %728 = arith.addf %724, %727 : vector<8x8xf32>
    %cst_532 = arith.constant dense<0.000000e+00> : vector<8x8xf32>
    %729 = tpu.matmul %714, %721, %cst_532 {dimension_numbers = #tpu.dot_dimension_numbers<[1], [1], [0], [0], [0, 0, 1, 0], [], []>} : vector<8x8xf32>, vector<8x8xf32>, vector<8x8xf32> -> vector<8x8xf32>
    %cst_533 = arith.constant 0.353553385 : f32
    %730 = vector.broadcast %cst_533 : f32 to vector<8x8xf32>
    %731 = arith.mulf %729, %730 : vector<8x8xf32>
    %732 = vector.broadcast %585 : vector<1x8xf32> to vector<8x8xf32>
    %733 = arith.addf %731, %732 : vector<8x8xf32>
    %cst_534 = arith.constant dense<0xFF800000> : vector<8xf32>
    %734 = vector.multi_reduction <maximumf>, %733, %cst_534 [1] : vector<8x8xf32> to vector<8xf32>
    %735 = vector.shape_cast %734 : vector<8xf32> to vector<8x1xf32>
    %736 = vector.broadcast %735 : vector<8x1xf32> to vector<8x8xf32>
    %737 = arith.subf %733, %736 : vector<8x8xf32>
    %738 = math.exp %737 : vector<8x8xf32>
    %cst_535 = arith.constant dense<0.000000e+00> : vector<8xf32>
    %739 = vector.multi_reduction <add>, %738, %cst_535 [1] : vector<8x8xf32> to vector<8xf32>
    %740 = vector.shape_cast %739 : vector<8xf32> to vector<8x1xf32>
    %741 = tpu.reciprocal %740 {approx = true} : vector<8x1xf32> -> vector<8x1xf32>
    %742 = vector.broadcast %741 : vector<8x1xf32> to vector<8x8xf32>
    %743 = arith.mulf %738, %742 : vector<8x8xf32>
    %cst_536 = arith.constant dense<0.000000e+00> : vector<8x8xf32>
    %744 = tpu.matmul %743, %728, %cst_536 {dimension_numbers = #tpu.dot_dimension_numbers<[1], [0], [0], [1], [0, 0, 1, 1], [], []>} : vector<8x8xf32>, vector<8x8xf32>, vector<8x8xf32> -> vector<8x8xf32>
    %c7_537 = arith.constant 7 : index
    %c0_538 = arith.constant 0 : index
    %c0_539 = arith.constant 0 : index
    %745 = vector.load %arg13[%c7_537, %c0_538, %c0_539] : memref<8x8x32xf32, #tpu.memory_space<vmem>>, vector<1x8x32xf32>
    %746 = vector.shape_cast %745 : vector<1x8x32xf32> to vector<8x32xf32>
    %cst_540 = arith.constant dense<0.000000e+00> : vector<8x32xf32>
    %747 = tpu.matmul %744, %746, %cst_540 {dimension_numbers = #tpu.dot_dimension_numbers<[1], [0], [0], [1], [0, 0, 1, 1], [], []>} : vector<8x8xf32>, vector<8x32xf32>, vector<8x32xf32> -> vector<8x32xf32>
    %748 = arith.addf %707, %747 : vector<8x32xf32>
    %c8_541 = arith.constant 8 : index
    %c0_542 = arith.constant 0 : index
    %749 = vector.load %arg38[%c8_541, %c0_542] : memref<16x32xf32, #tpu.memory_space<vmem>>, vector<8x32xf32>
    tpu.vector_store %arg38[%c8_541, %c0_542], %748 {strides = array<i32>} : memref<16x32xf32, #tpu.memory_space<vmem>>, vector<8x32xf32>,
    %c0_543 = arith.constant 0 : index
    %c0_544 = arith.constant 0 : index
    %750 = vector.load %arg38[%c0_543, %c0_544] : memref<16x32xf32, #tpu.memory_space<vmem>>, vector<16x32xf32>
    %c1_545 = arith.constant 1 : index
    %c0_546 = arith.constant 0 : index
    %c0_547 = arith.constant 0 : index
    %751 = vector.load %arg14[%c1_545, %c0_546, %c0_547] : memref<2x1x32xf32, #tpu.memory_space<vmem>>, vector<1x1x32xf32>
    %752 = vector.shape_cast %751 : vector<1x1x32xf32> to vector<1x32xf32>
    %753 = vector.broadcast %752 : vector<1x32xf32> to vector<16x32xf32>
    %754 = arith.addf %750, %753 : vector<16x32xf32>
    %755 = arith.addf %415, %754 : vector<16x32xf32>
    %c1_548 = arith.constant 1 : index
    %c0_549 = arith.constant 0 : index
    %c0_550 = arith.constant 0 : index
    %756 = vector.load %arg15[%c1_548, %c0_549, %c0_550] : memref<2x1x32xf32, #tpu.memory_space<vmem>>, vector<1x1x32xf32>
    %757 = vector.shape_cast %756 : vector<1x1x32xf32> to vector<1x32xf32>
    %c1_551 = arith.constant 1 : index
    %c0_552 = arith.constant 0 : index
    %c0_553 = arith.constant 0 : index
    %758 = vector.load %arg16[%c1_551, %c0_552, %c0_553] : memref<2x1x32xf32, #tpu.memory_space<vmem>>, vector<1x1x32xf32>
    %759 = vector.shape_cast %758 : vector<1x1x32xf32> to vector<1x32xf32>
    %cst_554 = arith.constant dense<0.000000e+00> : vector<16xf32>
    %760 = vector.multi_reduction <add>, %755, %cst_554 [1] : vector<16x32xf32> to vector<16xf32>
    %761 = vector.shape_cast %760 : vector<16xf32> to vector<16x1xf32>
    %cst_555 = arith.constant 3.200000e+01 : f32
    %762 = vector.broadcast %cst_555 : f32 to vector<16x1xf32>
    %763 = arith.divf %761, %762 : vector<16x1xf32>
    %764 = vector.broadcast %763 : vector<16x1xf32> to vector<16x32xf32>
    %765 = arith.subf %755, %764 : vector<16x32xf32>
    %766 = arith.mulf %765, %765 : vector<16x32xf32>
    %cst_556 = arith.constant dense<0.000000e+00> : vector<16xf32>
    %767 = vector.multi_reduction <add>, %766, %cst_556 [1] : vector<16x32xf32> to vector<16xf32>
    %768 = vector.shape_cast %767 : vector<16xf32> to vector<16x1xf32>
    %cst_557 = arith.constant 3.200000e+01 : f32
    %769 = vector.broadcast %cst_557 : f32 to vector<16x1xf32>
    %770 = arith.divf %768, %769 : vector<16x1xf32>
    %cst_558 = arith.constant 9.99999974E-6 : f32
    %771 = vector.broadcast %cst_558 : f32 to vector<16x1xf32>
    %772 = arith.addf %770, %771 : vector<16x1xf32>
    %773 = math.rsqrt %772 : vector<16x1xf32>
    %774 = vector.broadcast %773 : vector<16x1xf32> to vector<16x32xf32>
    %775 = arith.mulf %765, %774 : vector<16x32xf32>
    %776 = vector.broadcast %757 : vector<1x32xf32> to vector<16x32xf32>
    %777 = arith.mulf %775, %776 : vector<16x32xf32>
    %778 = vector.broadcast %759 : vector<1x32xf32> to vector<16x32xf32>
    %779 = arith.addf %777, %778 : vector<16x32xf32>
    %c1_559 = arith.constant 1 : index
    %c0_560 = arith.constant 0 : index
    %c0_561 = arith.constant 0 : index
    %780 = vector.load %arg17[%c1_559, %c0_560, %c0_561] : memref<2x32x64xf32, #tpu.memory_space<vmem>>, vector<1x32x64xf32>
    %781 = vector.shape_cast %780 : vector<1x32x64xf32> to vector<32x64xf32>
    %cst_562 = arith.constant dense<0.000000e+00> : vector<16x64xf32>
    %782 = tpu.matmul %779, %781, %cst_562 {dimension_numbers = #tpu.dot_dimension_numbers<[1], [0], [0], [1], [0, 0, 1, 1], [], []>} : vector<16x32xf32>, vector<32x64xf32>, vector<16x64xf32> -> vector<16x64xf32>
    %c1_563 = arith.constant 1 : index
    %c0_564 = arith.constant 0 : index
    %c0_565 = arith.constant 0 : index
    %783 = vector.load %arg18[%c1_563, %c0_564, %c0_565] : memref<2x1x64xf32, #tpu.memory_space<vmem>>, vector<1x1x64xf32>
    %784 = vector.shape_cast %783 : vector<1x1x64xf32> to vector<1x64xf32>
    %785 = vector.broadcast %784 : vector<1x64xf32> to vector<16x64xf32>
    %786 = arith.addf %782, %785 : vector<16x64xf32>
    %cst_566 = arith.constant 0.000000e+00 : f32
    %787 = vector.broadcast %cst_566 : f32 to vector<16x64xf32>
    %788 = arith.maximumf %786, %787 : vector<16x64xf32>
    %c1_567 = arith.constant 1 : index
    %c0_568 = arith.constant 0 : index
    %c0_569 = arith.constant 0 : index
    %789 = vector.load %arg19[%c1_567, %c0_568, %c0_569] : memref<2x64x32xf32, #tpu.memory_space<vmem>>, vector<1x64x32xf32>
    %790 = vector.shape_cast %789 : vector<1x64x32xf32> to vector<64x32xf32>
    %cst_570 = arith.constant dense<0.000000e+00> : vector<16x32xf32>
    %791 = tpu.matmul %788, %790, %cst_570 {dimension_numbers = #tpu.dot_dimension_numbers<[1], [0], [0], [1], [0, 0, 1, 1], [], []>} : vector<16x64xf32>, vector<64x32xf32>, vector<16x32xf32> -> vector<16x32xf32>
    %c1_571 = arith.constant 1 : index
    %c0_572 = arith.constant 0 : index
    %c0_573 = arith.constant 0 : index
    %792 = vector.load %arg20[%c1_571, %c0_572, %c0_573] : memref<2x1x32xf32, #tpu.memory_space<vmem>>, vector<1x1x32xf32>
    %793 = vector.shape_cast %792 : vector<1x1x32xf32> to vector<1x32xf32>
    %794 = vector.broadcast %793 : vector<1x32xf32> to vector<16x32xf32>
    %795 = arith.addf %791, %794 : vector<16x32xf32>
    %796 = arith.addf %779, %795 : vector<16x32xf32>
    %c1_574 = arith.constant 1 : index
    %c0_575 = arith.constant 0 : index
    %c0_576 = arith.constant 0 : index
    %797 = vector.load %arg21[%c1_574, %c0_575, %c0_576] : memref<2x1x32xf32, #tpu.memory_space<vmem>>, vector<1x1x32xf32>
    %798 = vector.shape_cast %797 : vector<1x1x32xf32> to vector<1x32xf32>
    %c1_577 = arith.constant 1 : index
    %c0_578 = arith.constant 0 : index
    %c0_579 = arith.constant 0 : index
    %799 = vector.load %arg22[%c1_577, %c0_578, %c0_579] : memref<2x1x32xf32, #tpu.memory_space<vmem>>, vector<1x1x32xf32>
    %800 = vector.shape_cast %799 : vector<1x1x32xf32> to vector<1x32xf32>
    %cst_580 = arith.constant dense<0.000000e+00> : vector<16xf32>
    %801 = vector.multi_reduction <add>, %796, %cst_580 [1] : vector<16x32xf32> to vector<16xf32>
    %802 = vector.shape_cast %801 : vector<16xf32> to vector<16x1xf32>
    %cst_581 = arith.constant 3.200000e+01 : f32
    %803 = vector.broadcast %cst_581 : f32 to vector<16x1xf32>
    %804 = arith.divf %802, %803 : vector<16x1xf32>
    %805 = vector.broadcast %804 : vector<16x1xf32> to vector<16x32xf32>
    %806 = arith.subf %796, %805 : vector<16x32xf32>
    %807 = arith.mulf %806, %806 : vector<16x32xf32>
    %cst_582 = arith.constant dense<0.000000e+00> : vector<16xf32>
    %808 = vector.multi_reduction <add>, %807, %cst_582 [1] : vector<16x32xf32> to vector<16xf32>
    %809 = vector.shape_cast %808 : vector<16xf32> to vector<16x1xf32>
    %cst_583 = arith.constant 3.200000e+01 : f32
    %810 = vector.broadcast %cst_583 : f32 to vector<16x1xf32>
    %811 = arith.divf %809, %810 : vector<16x1xf32>
    %cst_584 = arith.constant 9.99999974E-6 : f32
    %812 = vector.broadcast %cst_584 : f32 to vector<16x1xf32>
    %813 = arith.addf %811, %812 : vector<16x1xf32>
    %814 = math.rsqrt %813 : vector<16x1xf32>
    %815 = vector.broadcast %814 : vector<16x1xf32> to vector<16x32xf32>
    %816 = arith.mulf %806, %815 : vector<16x32xf32>
    %817 = vector.broadcast %798 : vector<1x32xf32> to vector<16x32xf32>
    %818 = arith.mulf %816, %817 : vector<16x32xf32>
    %819 = vector.broadcast %800 : vector<1x32xf32> to vector<16x32xf32>
    %820 = arith.addf %818, %819 : vector<16x32xf32>
    %c0_585 = arith.constant 0 : index
    %c0_586 = arith.constant 0 : index
    %821 = vector.load %arg4[%c0_585, %c0_586] : memref<16x1xf32, #tpu.memory_space<vmem>>, vector<16x1xf32>
    %cst_587 = arith.constant 0.000000e+00 : f32
    %822 = vector.broadcast %cst_587 : f32 to vector<16x1xf32>
    %823 = arith.cmpf oeq, %821, %822 : vector<16x1xf32>
    %cst_588 = arith.constant 0.000000e+00 : f32
    %824 = vector.shape_cast %823 : vector<16x1xi1> to vector<16x1xi1>
    %825 = vector.broadcast %824 : vector<16x1xi1> to vector<16x32xi1>
    %826 = vector.broadcast %cst_588 : f32 to vector<16x32xf32>
    %827 = arith.select %825, %826, %820 : vector<16x32xi1>, vector<16x32xf32>
    %c0_589 = arith.constant 0 : index
    %c0_590 = arith.constant 0 : index
    %828 = vector.load %arg23[%c0_589, %c0_590] : memref<32x64xf32, #tpu.memory_space<vmem>>, vector<32x64xf32>
    %cst_591 = arith.constant dense<0.000000e+00> : vector<16x64xf32>
    %829 = tpu.matmul %827, %828, %cst_591 {dimension_numbers = #tpu.dot_dimension_numbers<[1], [0], [0], [1], [0, 0, 1, 1], [], []>} : vector<16x32xf32>, vector<32x64xf32>, vector<16x64xf32> -> vector<16x64xf32>
    %c0_592 = arith.constant 0 : index
    %c0_593 = arith.constant 0 : index
    %830 = vector.load %arg24[%c0_592, %c0_593] : memref<1x64xf32, #tpu.memory_space<vmem>>, vector<1x64xf32>
    %831 = vector.broadcast %830 : vector<1x64xf32> to vector<16x64xf32>
    %832 = arith.addf %829, %831 : vector<16x64xf32>
    %cst_594 = arith.constant 0.000000e+00 : f32
    %833 = vector.broadcast %cst_594 : f32 to vector<16x64xf32>
    %834 = arith.cmpf oge, %832, %833 : vector<16x64xf32>
    %cst_595 = arith.constant 0.00999999977 : f32
    %835 = vector.broadcast %cst_595 : f32 to vector<16x64xf32>
    %836 = arith.mulf %835, %832 : vector<16x64xf32>
    %837 = arith.select %834, %832, %836 : vector<16x64xi1>, vector<16x64xf32>
    %c0_596 = arith.constant 0 : index
    %c0_597 = arith.constant 0 : index
    %838 = vector.load %arg25[%c0_596, %c0_597] : memref<32x64xf32, #tpu.memory_space<vmem>>, vector<32x64xf32>
    %cst_598 = arith.constant dense<0.000000e+00> : vector<16x64xf32>
    %839 = tpu.matmul %827, %838, %cst_598 {dimension_numbers = #tpu.dot_dimension_numbers<[1], [0], [0], [1], [0, 0, 1, 1], [], []>} : vector<16x32xf32>, vector<32x64xf32>, vector<16x64xf32> -> vector<16x64xf32>
    %840 = arith.addf %837, %839 : vector<16x64xf32>
    %c0_599 = arith.constant 0 : index
    %c0_600 = arith.constant 0 : index
    %841 = vector.load %arg26[%c0_599, %c0_600] : memref<64x32xf32, #tpu.memory_space<vmem>>, vector<64x32xf32>
    %cst_601 = arith.constant dense<0.000000e+00> : vector<16x32xf32>
    %842 = tpu.matmul %840, %841, %cst_601 {dimension_numbers = #tpu.dot_dimension_numbers<[1], [0], [0], [1], [0, 0, 1, 1], [], []>} : vector<16x64xf32>, vector<64x32xf32>, vector<16x32xf32> -> vector<16x32xf32>
    %c0_602 = arith.constant 0 : index
    %c0_603 = arith.constant 0 : index
    %843 = vector.load %arg27[%c0_602, %c0_603] : memref<1x32xf32, #tpu.memory_space<vmem>>, vector<1x32xf32>
    %844 = vector.broadcast %843 : vector<1x32xf32> to vector<16x32xf32>
    %845 = arith.addf %842, %844 : vector<16x32xf32>
    %cst_604 = arith.constant 0.000000e+00 : f32
    %846 = vector.broadcast %cst_604 : f32 to vector<16x32xf32>
    %847 = arith.cmpf oge, %845, %846 : vector<16x32xf32>
    %cst_605 = arith.constant 0.00999999977 : f32
    %848 = vector.broadcast %cst_605 : f32 to vector<16x32xf32>
    %849 = arith.mulf %848, %845 : vector<16x32xf32>
    %850 = arith.select %847, %845, %849 : vector<16x32xi1>, vector<16x32xf32>
    %c0_606 = arith.constant 0 : index
    %c0_607 = arith.constant 0 : index
    %851 = vector.load %arg28[%c0_606, %c0_607] : memref<64x32xf32, #tpu.memory_space<vmem>>, vector<64x32xf32>
    %cst_608 = arith.constant dense<0.000000e+00> : vector<16x32xf32>
    %852 = tpu.matmul %840, %851, %cst_608 {dimension_numbers = #tpu.dot_dimension_numbers<[1], [0], [0], [1], [0, 0, 1, 1], [], []>} : vector<16x64xf32>, vector<64x32xf32>, vector<16x32xf32> -> vector<16x32xf32>
    %853 = arith.addf %850, %852 : vector<16x32xf32>
    %c0_609 = arith.constant 0 : index
    %c0_610 = arith.constant 0 : index
    %854 = vector.load %arg29[%c0_609, %c0_610] : memref<32x16xf32, #tpu.memory_space<vmem>>, vector<32x16xf32>
    %cst_611 = arith.constant dense<0.000000e+00> : vector<16x16xf32>
    %855 = tpu.matmul %853, %854, %cst_611 {dimension_numbers = #tpu.dot_dimension_numbers<[1], [0], [0], [1], [0, 0, 1, 1], [], []>} : vector<16x32xf32>, vector<32x16xf32>, vector<16x16xf32> -> vector<16x16xf32>
    %c0_612 = arith.constant 0 : index
    %c0_613 = arith.constant 0 : index
    %856 = vector.load %arg30[%c0_612, %c0_613] : memref<1x16xf32, #tpu.memory_space<vmem>>, vector<1x16xf32>
    %857 = vector.broadcast %856 : vector<1x16xf32> to vector<16x16xf32>
    %858 = arith.addf %855, %857 : vector<16x16xf32>
    %cst_614 = arith.constant 0.000000e+00 : f32
    %859 = vector.broadcast %cst_614 : f32 to vector<16x16xf32>
    %860 = arith.cmpf oge, %858, %859 : vector<16x16xf32>
    %cst_615 = arith.constant 0.00999999977 : f32
    %861 = vector.broadcast %cst_615 : f32 to vector<16x16xf32>
    %862 = arith.mulf %861, %858 : vector<16x16xf32>
    %863 = arith.select %860, %858, %862 : vector<16x16xi1>, vector<16x16xf32>
    %c0_616 = arith.constant 0 : index
    %c0_617 = arith.constant 0 : index
    %864 = vector.load %arg31[%c0_616, %c0_617] : memref<32x16xf32, #tpu.memory_space<vmem>>, vector<32x16xf32>
    %cst_618 = arith.constant dense<0.000000e+00> : vector<16x16xf32>
    %865 = tpu.matmul %853, %864, %cst_618 {dimension_numbers = #tpu.dot_dimension_numbers<[1], [0], [0], [1], [0, 0, 1, 1], [], []>} : vector<16x32xf32>, vector<32x16xf32>, vector<16x16xf32> -> vector<16x16xf32>
    %866 = arith.addf %863, %865 : vector<16x16xf32>
    %c0_619 = arith.constant 0 : index
    %c0_620 = arith.constant 0 : index
    %867 = vector.load %arg32[%c0_619, %c0_620] : memref<16x8xf32, #tpu.memory_space<vmem>>, vector<16x8xf32>
    %cst_621 = arith.constant dense<0.000000e+00> : vector<16x8xf32>
    %868 = tpu.matmul %866, %867, %cst_621 {dimension_numbers = #tpu.dot_dimension_numbers<[1], [0], [0], [1], [0, 0, 1, 1], [], []>} : vector<16x16xf32>, vector<16x8xf32>, vector<16x8xf32> -> vector<16x8xf32>
    %c0_622 = arith.constant 0 : index
    %c0_623 = arith.constant 0 : index
    %869 = vector.load %arg33[%c0_622, %c0_623] : memref<1x8xf32, #tpu.memory_space<vmem>>, vector<1x8xf32>
    %870 = vector.broadcast %869 : vector<1x8xf32> to vector<16x8xf32>
    %871 = arith.addf %868, %870 : vector<16x8xf32>
    %cst_624 = arith.constant 0.000000e+00 : f32
    %872 = vector.broadcast %cst_624 : f32 to vector<16x8xf32>
    %873 = arith.cmpf oge, %871, %872 : vector<16x8xf32>
    %cst_625 = arith.constant 0.00999999977 : f32
    %874 = vector.broadcast %cst_625 : f32 to vector<16x8xf32>
    %875 = arith.mulf %874, %871 : vector<16x8xf32>
    %876 = arith.select %873, %871, %875 : vector<16x8xi1>, vector<16x8xf32>
    %c0_626 = arith.constant 0 : index
    %c0_627 = arith.constant 0 : index
    %877 = vector.load %arg34[%c0_626, %c0_627] : memref<16x8xf32, #tpu.memory_space<vmem>>, vector<16x8xf32>
    %cst_628 = arith.constant dense<0.000000e+00> : vector<16x8xf32>
    %878 = tpu.matmul %866, %877, %cst_628 {dimension_numbers = #tpu.dot_dimension_numbers<[1], [0], [0], [1], [0, 0, 1, 1], [], []>} : vector<16x16xf32>, vector<16x8xf32>, vector<16x8xf32> -> vector<16x8xf32>
    %879 = arith.addf %876, %878 : vector<16x8xf32>
    %c0_629 = arith.constant 0 : index
    %c0_630 = arith.constant 0 : index
    %880 = vector.load %arg35[%c0_629, %c0_630] : memref<8x3xf32, #tpu.memory_space<vmem>>, vector<8x3xf32>
    %cst_631 = arith.constant dense<0.000000e+00> : vector<16x3xf32>
    %881 = tpu.matmul %879, %880, %cst_631 {dimension_numbers = #tpu.dot_dimension_numbers<[1], [0], [0], [1], [0, 0, 1, 1], [], []>} : vector<16x8xf32>, vector<8x3xf32>, vector<16x3xf32> -> vector<16x3xf32>
    %c0_632 = arith.constant 0 : index
    %c0_633 = arith.constant 0 : index
    %882 = vector.load %arg36[%c0_632, %c0_633] : memref<1x3xf32, #tpu.memory_space<vmem>>, vector<1x3xf32>
    %883 = vector.broadcast %882 : vector<1x3xf32> to vector<16x3xf32>
    %884 = arith.addf %881, %883 : vector<16x3xf32>
    %c0_634 = arith.constant 0 : index
    %c0_635 = arith.constant 0 : index
    %885 = vector.load %arg37[%c0_634, %c0_635] : memref<16x3xf32, #tpu.memory_space<vmem>>, vector<16x3xf32>
    tpu.vector_store %arg37[%c0_634, %c0_635], %884 {strides = array<i32>} : memref<16x3xf32, #tpu.memory_space<vmem>>, vector<16x3xf32>,
    return
  }
}

</mosaic_0001>

<llo_original>
// kernel: crabnet_forward.1
$region0: #{crabnet_forward.1}
  #allocation0 [shape = 'u32[]', space=smem, size = 0x4, offset = 0x4, fixed_abs, tag = 'smem constant byte address 0x4 - core index']
  #allocation1 [shape = 'u32[72,128]{1,0:T(1,128)}', space=vmem, size = 0x9000, scoped, tag = 'internal scratch']
  #allocation2 [shape = 'f32[16,32]{1,0:T(8,128)}', space=vmem, size = 0x2000, scoped, tag = 'scratch operand']
  #allocation3 [shape = 'f32[1,1]{1,0:T(1,128)S(6)}', space=smem, size = 0x200, scoped, tag = 'scoped memory for crabnet_forward.1']
  %s0 = inlined_call_operand.smem [shape: u32[38], index: -1, kind: input, shape index: {}]
  %s1 = sld [smem:[%s0]]
  %s2 = scalar_lea.smem %s0, 1
  %s3 = sld [smem:[%s2]]
  %s4 = scalar_lea.smem %s0, 2
  %s5 = sld [smem:[%s4]]
  %s6 = scalar_lea.smem %s0, 3
  %s7 = sld [smem:[%s6]]
  %s8 = scalar_lea.smem %s0, 4
  %s9 = sld [smem:[%s8]]
  %s10 = scalar_lea.smem %s0, 5
  %s11 = sld [smem:[%s10]]
  %s12 = scalar_lea.smem %s0, 6
  %s13 = sld [smem:[%s12]]
  %s14 = scalar_lea.smem %s0, 7
  %s15 = sld [smem:[%s14]]
  %s16 = scalar_lea.smem %s0, 8
  %s17 = sld [smem:[%s16]]
  %s18 = scalar_lea.smem %s0, 9
  %s19 = sld [smem:[%s18]]
  %s20 = scalar_lea.smem %s0, 10
  %s21 = sld [smem:[%s20]]
  %s22 = scalar_lea.smem %s0, 11
  %s23 = sld [smem:[%s22]]
  %s24 = scalar_lea.smem %s0, 12
  %s25 = sld [smem:[%s24]]
  %s26 = scalar_lea.smem %s0, 13
  %s27 = sld [smem:[%s26]]
  %s28 = scalar_lea.smem %s0, 14
  %s29 = sld [smem:[%s28]]
  %s30 = scalar_lea.smem %s0, 15
  %s31 = sld [smem:[%s30]]
  %s32 = scalar_lea.smem %s0, 16
  %s33 = sld [smem:[%s32]]
  %s34 = scalar_lea.smem %s0, 17
  %s35 = sld [smem:[%s34]]
  %s36 = scalar_lea.smem %s0, 18
  %s37 = sld [smem:[%s36]]
  %s38 = scalar_lea.smem %s0, 19
  %s39 = sld [smem:[%s38]]
  %s40 = scalar_lea.smem %s0, 20
  %s41 = sld [smem:[%s40]]
  %s42 = scalar_lea.smem %s0, 21
  %s43 = sld [smem:[%s42]]
  %s44 = scalar_lea.smem %s0, 22
  %s45 = sld [smem:[%s44]]
  %s46 = scalar_lea.smem %s0, 23
  %s47 = sld [smem:[%s46]]
  %s48 = scalar_lea.smem %s0, 24
  %s49 = sld [smem:[%s48]]
  %s50 = scalar_lea.smem %s0, 25
  %s51 = sld [smem:[%s50]]
  %s52 = scalar_lea.smem %s0, 26
  %s53 = sld [smem:[%s52]]
  %s54 = scalar_lea.smem %s0, 27
  %s55 = sld [smem:[%s54]]
  %s56 = scalar_lea.smem %s0, 28
  %s57 = sld [smem:[%s56]]
  %s58 = scalar_lea.smem %s0, 29
  %s59 = sld [smem:[%s58]]
  %s60 = scalar_lea.smem %s0, 30
  %s61 = sld [smem:[%s60]]
  %s62 = scalar_lea.smem %s0, 31
  %s63 = sld [smem:[%s62]]
  %s64 = scalar_lea.smem %s0, 32
  %s65 = sld [smem:[%s64]]
  %s66 = scalar_lea.smem %s0, 33
  %s67 = sld [smem:[%s66]]
  %s68 = scalar_lea.smem %s0, 34
  %s69 = sld [smem:[%s68]]
  %s70 = scalar_lea.smem %s0, 35
  %s71 = sld [smem:[%s70]]
  %s72 = scalar_lea.smem %s0, 36
  %s73 = sld [smem:[%s72]]
  %s74 = scalar_lea.smem %s0, 37
  %s75 = sld [smem:[%s74]]
  %s76 = sld [smem:[#allocation0]]
  $region166: #{crabnet_forward.1} parent=0
    _
  %s78 = ssub.s32 1, %s76
  %s79 = scalar_select 0, %s78, %s76
  %80 = sst [smem:[#allocation3]] %s1
  $region1: #{crabnet_forward.1} parent=0
    #allocation4 [shape = 'u8[512]{0}', space=vmem, size = 0x400, scoped, tag = 'input window, operand 33, single buffered']
    #allocation5 [shape = 's32[1]{0}', space=sflag, size = 0x4, scoped, tag = 'scoped memory for crabnet_forward.1']
    #allocation6 [shape = 'u8[512]{0}', space=vmem, size = 0x400, scoped, tag = 'input window, operand 36, single buffered']
    #allocation7 [shape = 's32[1]{0}', space=sflag, size = 0x4, scoped, tag = 'scoped memory for crabnet_forward.1']
    %81 = vsyncpa [#allocation5], 0
    %82 = vsyncpa [#allocation7], 0
    // Predicated region
    $region2: #{crabnet_forward.1} parent=1 // pred_check
      _
    $region3: #{crabnet_forward.1} parent=1 // pred_check_branch
      %84 = sbr.rel (0) target = $region5
    $region4: #{crabnet_forward.1} parent=1 // pred_region
      _
    $region5: #{crabnet_forward.1} parent=1 // pred_fallthru
      _
    // Predicated region
    $region6: #{crabnet_forward.1} parent=1 // pred_check
      _
    $region7: #{crabnet_forward.1} parent=1 // pred_check_branch
      %86 = sbr.rel (0) target = $region9
    $region8: #{crabnet_forward.1} parent=1 // pred_region
      _
    $region9: #{crabnet_forward.1} parent=1 // pred_fallthru
      _
    // Predicated region
    $region10: #{crabnet_forward.1} parent=1 // pred_check
      _
    $region11: #{crabnet_forward.1} parent=1 // pred_check_branch
      %88 = sbr.rel (0) target = $region13
    $region12: #{crabnet_forward.1} parent=1 // pred_region
      _
    $region13: #{crabnet_forward.1} parent=1 // pred_fallthru
      _
    // Predicated region
    $region14: #{crabnet_forward.1} parent=1 // pred_check
      _
    $region15: #{crabnet_forward.1} parent=1 // pred_check_branch
      %90 = sbr.rel (0) target = $region17
    $region16: #{crabnet_forward.1} parent=1 // pred_region
      _
    $region17: #{crabnet_forward.1} parent=1 // pred_fallthru
      _
    // Predicated region
    $region18: #{crabnet_forward.1} parent=1 // pred_check
      _
    $region19: #{crabnet_forward.1} parent=1 // pred_check_branch
      %92 = sbr.rel (0) target = $region21
    $region20: #{crabnet_forward.1} parent=1 // pred_region
      _
    $region21: #{crabnet_forward.1} parent=1 // pred_fallthru
      _
    // Predicated region
    $region22: #{crabnet_forward.1} parent=1 // pred_check
      _
    $region23: #{crabnet_forward.1} parent=1 // pred_check_branch
      %94 = sbr.rel (0) target = $region25
    $region24: #{crabnet_forward.1} parent=1 // pred_region
      _
    $region25: #{crabnet_forward.1} parent=1 // pred_fallthru
      _
    // Predicated region
    $region26: #{crabnet_forward.1} parent=1 // pred_check
      _
    $region27: #{crabnet_forward.1} parent=1 // pred_check_branch
      %96 = sbr.rel (0) target = $region29
    $region28: #{crabnet_forward.1} parent=1 // pred_region
      _
    $region29: #{crabnet_forward.1} parent=1 // pred_fallthru
      _
    // Predicated region
    $region30: #{crabnet_forward.1} parent=1 // pred_check
      _
    $region31: #{crabnet_forward.1} parent=1 // pred_check_branch
      %98 = sbr.rel (0) target = $region33
    $region32: #{crabnet_forward.1} parent=1 // pred_region
      _
    $region33: #{crabnet_forward.1} parent=1 // pred_fallthru
      _
    // Predicated region
    $region34: #{crabnet_forward.1} parent=1 // pred_check
      _
    $region35: #{crabnet_forward.1} parent=1 // pred_check_branch
      %100 = sbr.rel (0) target = $region37
    $region36: #{crabnet_forward.1} parent=1 // pred_region
      _
    $region37: #{crabnet_forward.1} parent=1 // pred_fallthru
      _
    // Predicated region
    $region38: #{crabnet_forward.1} parent=1 // pred_check
      _
    $region39: #{crabnet_forward.1} parent=1 // pred_check_branch
      %102 = sbr.rel (0) target = $region41
    $region40: #{crabnet_forward.1} parent=1 // pred_region
      _
    $region41: #{crabnet_forward.1} parent=1 // pred_fallthru
      _
    // Predicated region
    $region42: #{crabnet_forward.1} parent=1 // pred_check
      _
    $region43: #{crabnet_forward.1} parent=1 // pred_check_branch
      %104 = sbr.rel (0) target = $region45
    $region44: #{crabnet_forward.1} parent=1 // pred_region
      _
    $region45: #{crabnet_forward.1} parent=1 // pred_fallthru
      _
    // Predicated region
    $region46: #{crabnet_forward.1} parent=1 // pred_check
      _
    $region47: #{crabnet_forward.1} parent=1 // pred_check_branch
      %106 = sbr.rel (0) target = $region49
    $region48: #{crabnet_forward.1} parent=1 // pred_region
      _
    $region49: #{crabnet_forward.1} parent=1 // pred_fallthru
      _
    // Predicated region
    $region50: #{crabnet_forward.1} parent=1 // pred_check
      _
    $region51: #{crabnet_forward.1} parent=1 // pred_check_branch
      %108 = sbr.rel (0) target = $region53
    $region52: #{crabnet_forward.1} parent=1 // pred_region
      _
    $region53: #{crabnet_forward.1} parent=1 // pred_fallthru
      _
    // Predicated region
    $region54: #{crabnet_forward.1} parent=1 // pred_check
      _
    $region55: #{crabnet_forward.1} parent=1 // pred_check_branch
      %110 = sbr.rel (0) target = $region57
    $region56: #{crabnet_forward.1} parent=1 // pred_region
      _
    $region57: #{crabnet_forward.1} parent=1 // pred_fallthru
      _
    // Predicated region
    $region58: #{crabnet_forward.1} parent=1 // pred_check
      _
    $region59: #{crabnet_forward.1} parent=1 // pred_check_branch
      %112 = sbr.rel (0) target = $region61
    $region60: #{crabnet_forward.1} parent=1 // pred_region
      _
    $region61: #{crabnet_forward.1} parent=1 // pred_fallthru
      _
    // Predicated region
    $region62: #{crabnet_forward.1} parent=1 // pred_check
      _
    $region63: #{crabnet_forward.1} parent=1 // pred_check_branch
      %114 = sbr.rel (0) target = $region65
    $region64: #{crabnet_forward.1} parent=1 // pred_region
      _
    $region65: #{crabnet_forward.1} parent=1 // pred_fallthru
      _
    // Predicated region
    $region66: #{crabnet_forward.1} parent=1 // pred_check
      _
    $region67: #{crabnet_forward.1} parent=1 // pred_check_branch
      %116 = sbr.rel (0) target = $region69
    $region68: #{crabnet_forward.1} parent=1 // pred_region
      _
    $region69: #{crabnet_forward.1} parent=1 // pred_fallthru
      _
    // Predicated region
    $region70: #{crabnet_forward.1} parent=1 // pred_check
      _
    $region71: #{crabnet_forward.1} parent=1 // pred_check_branch
      %118 = sbr.rel (0) target = $region73
    $region72: #{crabnet_forward.1} parent=1 // pred_region
      _
    $region73: #{crabnet_forward.1} parent=1 // pred_fallthru
      _
    // Predicated region
    $region74: #{crabnet_forward.1} parent=1 // pred_check
      _
    $region75: #{crabnet_forward.1} parent=1 // pred_check_branch
      %120 = sbr.rel (0) target = $region77
    $region76: #{crabnet_forward.1} parent=1 // pred_region
      _
    $region77: #{crabnet_forward.1} parent=1 // pred_fallthru
      _
    // Predicated region
    $region78: #{crabnet_forward.1} parent=1 // pred_check
      _
    $region79: #{crabnet_forward.1} parent=1 // pred_check_branch
      %122 = sbr.rel (0) target = $region81
    $region80: #{crabnet_forward.1} parent=1 // pred_region
      _
    $region81: #{crabnet_forward.1} parent=1 // pred_fallthru
      _
    // Predicated region
    $region82: #{crabnet_forward.1} parent=1 // pred_check
      _
    $region83: #{crabnet_forward.1} parent=1 // pred_check_branch
      %124 = sbr.rel (0) target = $region85
    $region84: #{crabnet_forward.1} parent=1 // pred_region
      _
    $region85: #{crabnet_forward.1} parent=1 // pred_fallthru
      _
    // Predicated region
    $region86: #{crabnet_forward.1} parent=1 // pred_check
      _
    $region87: #{crabnet_forward.1} parent=1 // pred_check_branch
      %126 = sbr.rel (0) target = $region89
    $region88: #{crabnet_forward.1} parent=1 // pred_region
      _
    $region89: #{crabnet_forward.1} parent=1 // pred_fallthru
      _
    // Predicated region
    $region90: #{crabnet_forward.1} parent=1 // pred_check
      _
    $region91: #{crabnet_forward.1} parent=1 // pred_check_branch
      %128 = sbr.rel (0) target = $region93
    $region92: #{crabnet_forward.1} parent=1 // pred_region
      _
    $region93: #{crabnet_forward.1} parent=1 // pred_fallthru
      _
    // Predicated region
    $region94: #{crabnet_forward.1} parent=1 // pred_check
      _
    $region95: #{crabnet_forward.1} parent=1 // pred_check_branch
      %130 = sbr.rel (0) target = $region97
    $region96: #{crabnet_forward.1} parent=1 // pred_region
      _
    $region97: #{crabnet_forward.1} parent=1 // pred_fallthru
      _
    // Predicated region
    $region98: #{crabnet_forward.1} parent=1 // pred_check
      _
    $region99: #{crabnet_forward.1} parent=1 // pred_check_branch
      %132 = sbr.rel (0) target = $region101
    $region100: #{crabnet_forward.1} parent=1 // pred_region
      _
    $region101: #{crabnet_forward.1} parent=1 // pred_fallthru
      _
    // Predicated region
    $region102: #{crabnet_forward.1} parent=1 // pred_check
      _
    $region103: #{crabnet_forward.1} parent=1 // pred_check_branch
      %134 = sbr.rel (0) target = $region105
    $region104: #{crabnet_forward.1} parent=1 // pred_region
      _
    $region105: #{crabnet_forward.1} parent=1 // pred_fallthru
      _
    // Predicated region
    $region106: #{crabnet_forward.1} parent=1 // pred_check
      _
    $region107: #{crabnet_forward.1} parent=1 // pred_check_branch
      %136 = sbr.rel (0) target = $region109
    $region108: #{crabnet_forward.1} parent=1 // pred_region
      _
    $region109: #{crabnet_forward.1} parent=1 // pred_fallthru
      _
    // Predicated region
    $region110: #{crabnet_forward.1} parent=1 // pred_check
      _
    $region111: #{crabnet_forward.1} parent=1 // pred_check_branch
      %138 = sbr.rel (0) target = $region113
    $region112: #{crabnet_forward.1} parent=1 // pred_region
      _
    $region113: #{crabnet_forward.1} parent=1 // pred_fallthru
      _
    // Predicated region
    $region114: #{crabnet_forward.1} parent=1 // pred_check
      _
    $region115: #{crabnet_forward.1} parent=1 // pred_check_branch
      %140 = sbr.rel (0) target = $region117
    $region116: #{crabnet_forward.1} parent=1 // pred_region
      _
    $region117: #{crabnet_forward.1} parent=1 // pred_fallthru
      _
    // Predicated region
    $region118: #{crabnet_forward.1} parent=1 // pred_check
      _
    $region119: #{crabnet_forward.1} parent=1 // pred_check_branch
      %142 = sbr.rel (0) target = $region121
    $region120: #{crabnet_forward.1} parent=1 // pred_region
      _
    $region121: #{crabnet_forward.1} parent=1 // pred_fallthru
      _
    // Predicated region
    $region122: #{crabnet_forward.1} parent=1 // pred_check
      _
    $region123: #{crabnet_forward.1} parent=1 // pred_check_branch
      %144 = sbr.rel (0) target = $region125
    $region124: #{crabnet_forward.1} parent=1 // pred_region
      _
    $region125: #{crabnet_forward.1} parent=1 // pred_fallthru
      _
    // Predicated region
    $region126: #{crabnet_forward.1} parent=1 // pred_check
      _
    $region127: #{crabnet_forward.1} parent=1 // pred_check_branch
      %146 = sbr.rel (0) target = $region129
    $region128: #{crabnet_forward.1} parent=1 // pred_region
      _
    $region129: #{crabnet_forward.1} parent=1 // pred_fallthru
      _
    // Predicated region
    $region130: #{crabnet_forward.1} parent=1 // pred_check
      _
    $region131: #{crabnet_forward.1} parent=1 // pred_check_branch
      %148 = sbr.rel (0) target = $region133
    $region132: #{crabnet_forward.1} parent=1 // pred_region
      _
    $region133: #{crabnet_forward.1} parent=1 // pred_fallthru
      _
    // Predicated region
    $region134: #{crabnet_forward.1} parent=1 // pred_check
      _
    $region135: #{crabnet_forward.1} parent=1 // pred_check_branch
      %150 = sbr.rel (0) target = $region137
    $region136: #{crabnet_forward.1} parent=1 // pred_region
      %152 = vsyncadd [#allocation5], 0
      %s154 = sshll.u32 %s67, 4
      %s155 = int_to_ptr.hbm [resolvable:$true] %s154
      %s156 = sshll.u32 [#allocation4], 4
      %s157 = int_to_ptr.vmem [resolvable:$true] %s156
      %159 = dma.hbm_to_vmem [thread:$0]  %s155, 16, %s157, [#allocation5]
    $region137: #{crabnet_forward.1} parent=1 // pred_fallthru
      _
    // Predicated region
    $region138: #{crabnet_forward.1} parent=1 // pred_check
      _
    $region139: #{crabnet_forward.1} parent=1 // pred_check_branch
      %161 = sbr.rel (0) target = $region141
    $region140: #{crabnet_forward.1} parent=1 // pred_region
      _
    $region141: #{crabnet_forward.1} parent=1 // pred_fallthru
      _
    // Predicated region
    $region142: #{crabnet_forward.1} parent=1 // pred_check
      _
    $region143: #{crabnet_forward.1} parent=1 // pred_check_branch
      %163 = sbr.rel (0) target = $region145
    $region144: #{crabnet_forward.1} parent=1 // pred_region
      _
    $region145: #{crabnet_forward.1} parent=1 // pred_fallthru
      _
    // Predicated region
    $region146: #{crabnet_forward.1} parent=1 // pred_check
      _
    $region147: #{crabnet_forward.1} parent=1 // pred_check_branch
      %165 = sbr.rel (0) target = $region149
    $region148: #{crabnet_forward.1} parent=1 // pred_region
      %167 = vsyncadd [#allocation7], 0
      %s169 = sshll.u32 %s73, 4
      %s170 = int_to_ptr.hbm [resolvable:$true] %s169
      %s171 = sshll.u32 [#allocation6], 4
      %s172 = int_to_ptr.vmem [resolvable:$true] %s171
      %174 = dma.hbm_to_vmem [thread:$0]  %s170, 16, %s172, [#allocation7]
    $region149: #{crabnet_forward.1} parent=1 // pred_fallthru
      _
    // Predicated region
    $region150: #{crabnet_forward.1} parent=1 // pred_check
      _
    $region151: #{crabnet_forward.1} parent=1 // pred_check_branch
      %176 = sbr.rel (0) target = $region153
    $region152: #{crabnet_forward.1} parent=1 // pred_region
      %178 = dma.done [#allocation5], 16
    $region153: #{crabnet_forward.1} parent=1 // pred_fallthru
      _
    // Predicated region
    $region154: #{crabnet_forward.1} parent=1 // pred_check
      _
    $region155: #{crabnet_forward.1} parent=1 // pred_check_branch
      %180 = sbr.rel (0) target = $region157
    $region156: #{crabnet_forward.1} parent=1 // pred_region
      %182 = dma.done [#allocation7], 16
    $region157: #{crabnet_forward.1} parent=1 // pred_fallthru
      _
    %v183 = vld [vmem:[%s3] sm:$0xff]
    %v184 = vld [vmem:[%s3 + $0x8] sm:$0xff]
    %v185 = vld [vmem:[%s11] sm:$0xff]
    %v186 = vld [vmem:[%s11 + $0x8] sm:$0xff]
    %v187 = vld [vmem:[%s13] sm:$0x1]
    %v189 = vperm.slane %v187, 0
    %vm191 = vcmask 130048
    %v193 = vsel %vm191, %v183, 0
    %v196 = vsel %vm191, %v184, 0
    %198 = vmatpush.msra.mxu0 0.0
    %199 = vmatpush.msra.mxu0 0.0
    %200 = vmatpush.msra.mxu0 0.0
    %201 = vmatpush.msra.mxu0 0.0
    %202 = vmatpush.msra.mxu0 0.0
    %203 = vmatpush.msra.mxu0 0.0
    %204 = vmatpush.msra.mxu0 0.0
    %205 = vmatpush.msra.mxu0 0.0
    %206 = vmatpush.msra.mxu0 0.0
    %207 = vmatpush.msra.mxu0 0.0
    %208 = vmatpush.msra.mxu0 0.0
    %209 = vmatpush.msra.mxu0 0.0
    %210 = vmatpush.msra.mxu0 0.0
    %211 = vmatpush.msra.mxu0 0.0
    %212 = vmatpush.msra.mxu0 %v186
    %213 = vmatpush.msra.mxu0 %v185
    %214 = vmatmul.f32.gmra.mxu0 %v193
    %v215 = vpop.f32.mrf.mxu0
    %v216 = vadd.f32 %v189, %v215
    %217 = vmatmul.f32.gmra.mxu0 %v196
    %v218 = vpop.f32.mrf.mxu0
    %v219 = vadd.f32 %v189, %v218
    %220 = vdwg.mxu0
    %s221 = sld [smem:[#allocation3]]
    %v222 = vstv %s221
    %v223 = vmul.f32 %v216, %v222
    %v224 = vmul.f32 %v219, %v222
    %v225 = vld [vmem:[%s5] sm:$0xff]
    %v226 = vld [vmem:[%s5 + $0x8] sm:$0xff]
    %v227 = vadd.f32 %v223, %v225
    %v228 = vadd.f32 %v224, %v226
    %v229 = vld [vmem:[%s7] sm:$0x1]
    %v230 = vld [vmem:[%s15] sm:$0xff]
    %v231 = vld [vmem:[%s15 + $0x8] sm:$0xff]
    %v232 = vld [vmem:[%s15 + $0x10] sm:$0xff]
    %v233 = vld [vmem:[%s15 + $0x18] sm:$0xff]
    %v234 = vld [vmem:[%s21] sm:$0x1]
    %v236 = vperm.slane %v234, 0
    %vm238 = vcmask 261120
    %v240 = vsel %vm238, %v227, 0
    %242 = vmatpush.msra.mxu0 0.0
    %243 = vmatpush.msra.mxu0 0.0
    %244 = vmatpush.msra.mxu0 0.0
    %245 = vmatpush.msra.mxu0 0.0
    %246 = vmatpush.msra.mxu0 0.0
    %247 = vmatpush.msra.mxu0 0.0
    %248 = vmatpush.msra.mxu0 0.0
    %249 = vmatpush.msra.mxu0 0.0
    %250 = vmatpush.msra.mxu0 0.0
    %251 = vmatpush.msra.mxu0 0.0
    %252 = vmatpush.msra.mxu0 0.0
    %253 = vmatpush.msra.mxu0 0.0
    %254 = vmatpush.msra.mxu0 %v233
    %255 = vmatpush.msra.mxu0 %v232
    %256 = vmatpush.msra.mxu0 %v231
    %257 = vmatpush.msra.mxu0 %v230
    %258 = vmatmul.f32.gmra.mxu0 %v240
    %v259 = vpop.f32.mrf.mxu0
    %v260 = vadd.f32 %v236, %v259
    %261 = vdwg.mxu0
    %v262 = vld [vmem:[%s17] sm:$0xff]
    %v263 = vld [vmem:[%s17 + $0x8] sm:$0xff]
    %v264 = vld [vmem:[%s17 + $0x10] sm:$0xff]
    %v265 = vld [vmem:[%s17 + $0x18] sm:$0xff]
    %v266 = vld [vmem:[%s23] sm:$0x1]
    %v268 = vperm.slane %v266, 0
    %270 = vmatpush.msra.mxu0 0.0
    %271 = vmatpush.msra.mxu0 0.0
    %272 = vmatpush.msra.mxu0 0.0
    %273 = vmatpush.msra.mxu0 0.0
    %274 = vmatpush.msra.mxu0 0.0
    %275 = vmatpush.msra.mxu0 0.0
    %276 = vmatpush.msra.mxu0 0.0
    %277 = vmatpush.msra.mxu0 0.0
    %278 = vmatpush.msra.mxu0 0.0
    %279 = vmatpush.msra.mxu0 0.0
    %280 = vmatpush.msra.mxu0 0.0
    %281 = vmatpush.msra.mxu0 0.0
    %282 = vmatpush.msra.mxu0 %v265
    %283 = vmatpush.msra.mxu0 %v264
    %284 = vmatpush.msra.mxu0 %v263
    %285 = vmatpush.msra.mxu0 %v262
    %286 = vmatmul.f32.gmra.mxu0 %v240
    %v287 = vpop.f32.mrf.mxu0
    %v288 = vadd.f32 %v268, %v287
    %289 = vdwg.mxu0
    %v290 = vld [vmem:[%s19] sm:$0xff]
    %v291 = vld [vmem:[%s19 + $0x8] sm:$0xff]
    %v292 = vld [vmem:[%s19 + $0x10] sm:$0xff]
    %v293 = vld [vmem:[%s19 + $0x18] sm:$0xff]
    %v294 = vld [vmem:[%s25] sm:$0x1]
    %v296 = vperm.slane %v294, 0
    %298 = vmatpush.msra.mxu0 0.0
    %299 = vmatpush.msra.mxu0 0.0
    %300 = vmatpush.msra.mxu0 0.0
    %301 = vmatpush.msra.mxu0 0.0
    %302 = vmatpush.msra.mxu0 0.0
    %303 = vmatpush.msra.mxu0 0.0
    %304 = vmatpush.msra.mxu0 0.0
    %305 = vmatpush.msra.mxu0 0.0
    %306 = vmatpush.msra.mxu0 0.0
    %307 = vmatpush.msra.mxu0 0.0
    %308 = vmatpush.msra.mxu0 0.0
    %309 = vmatpush.msra.mxu0 0.0
    %310 = vmatpush.msra.mxu0 %v293
    %311 = vmatpush.msra.mxu0 %v292
    %312 = vmatpush.msra.mxu0 %v291
    %313 = vmatpush.msra.mxu0 %v290
    %314 = vmatmul.f32.gmra.mxu0 %v240
    %v315 = vpop.f32.mrf.mxu0
    %v316 = vadd.f32 %v296, %v315
    %317 = vdwg.mxu0
    %vm318 = vcmask 64512
    %v320 = vsel %vm318, %v260, 0
    %v323 = vsel %vm318, %v288, 0
    %325 = vmatpush.xpose.msra.mxu0 0.0
    %326 = vmatpush.xpose.msra.mxu0 0.0
    %327 = vmatpush.xpose.msra.mxu0 0.0
    %328 = vmatpush.xpose.msra.mxu0 0.0
    %329 = vmatpush.xpose.msra.mxu0 0.0
    %330 = vmatpush.xpose.msra.mxu0 0.0
    %331 = vmatpush.xpose.msra.mxu0 0.0
    %332 = vmatpush.xpose.msra.mxu0 0.0
    %333 = vmatpush.xpose.msra.mxu0 0.0
    %334 = vmatpush.xpose.msra.mxu0 0.0
    %335 = vmatpush.xpose.msra.mxu0 0.0
    %336 = vmatpush.xpose.msra.mxu0 0.0
    %337 = vmatpush.xpose.msra.mxu0 0.0
    %338 = vmatpush.xpose.msra.mxu0 0.0
    %339 = vmatpush.xpose.msra.mxu0 0.0
    %340 = vmatpush.xpose.msra.mxu0 %v323
    %341 = vmatmul.f32.gmra.mxu0 %v320
    %v342 = vpop.f32.mrf.mxu0
    %v343 = vadd.f32 0.0, %v342
    %344 = vdwg.mxu0
    %v345 = vmul.f32 %v343, 0.35355338
    %v347 = vperm.slane %v229, 0
    %v349 = vadd.f32 %v345, %v347
    %v350 = vsel %vm318, %v349, -inf
    %351 = vmax.xlane.f32.xlu0 %v350
    %v352 = vpop.xlane.xlu0 %351
    %v353 = vsub.f32 %v349, %v352
    %v354 = vmul.f32 %v353, 1.442695
    %v355 = vpow.pop %v354
    %v356 = vsel %vm318, %v355, 0.0
    %357 = vadd.xlane.f32.xlu0 %v356
    %v358 = vpop.xlane.xlu0 %357
    %v359 = vrcp.pop %v358
    %v360 = vmul.f32 %v355, %v359
    %v362 = vsel %vm318, %v360, 0
    %364 = vmatpush.msra.mxu0 0.0
    %365 = vmatpush.msra.mxu0 0.0
    %366 = vmatpush.msra.mxu0 0.0
    %367 = vmatpush.msra.mxu0 0.0
    %368 = vmatpush.msra.mxu0 0.0
    %369 = vmatpush.msra.mxu0 0.0
    %370 = vmatpush.msra.mxu0 0.0
    %371 = vmatpush.msra.mxu0 0.0
    %372 = vmatpush.msra.mxu0 0.0
    %373 = vmatpush.msra.mxu0 0.0
    %374 = vmatpush.msra.mxu0 0.0
    %375 = vmatpush.msra.mxu0 0.0
    %376 = vmatpush.msra.mxu0 0.0
    %377 = vmatpush.msra.mxu0 0.0
    %378 = vmatpush.msra.mxu0 0.0
    %379 = vmatpush.msra.mxu0 %v316
    %380 = vmatmul.f32.gmra.mxu0 %v362
    %v381 = vpop.f32.mrf.mxu0
    %v382 = vadd.f32 0.0, %v381
    %383 = vdwg.mxu0
    %v384 = vld [vmem:[%s27] sm:$0xff]
    %s385 = scalar_lea.vmem %s15, 32
    %v386 = vld [vmem:[%s385] sm:$0xff]
    %v387 = vld [vmem:[%s385 + $0x8] sm:$0xff]
    %v388 = vld [vmem:[%s385 + $0x10] sm:$0xff]
    %v389 = vld [vmem:[%s385 + $0x18] sm:$0xff]
    %s390 = scalar_lea.vmem %s21, 1
    %v391 = vld [vmem:[%s390] sm:$0x1]
    %v393 = vperm.slane %v391, 0
    %395 = vmatpush.msra.mxu0 0.0
    %396 = vmatpush.msra.mxu0 0.0
    %397 = vmatpush.msra.mxu0 0.0
    %398 = vmatpush.msra.mxu0 0.0
    %399 = vmatpush.msra.mxu0 0.0
    %400 = vmatpush.msra.mxu0 0.0
    %401 = vmatpush.msra.mxu0 0.0
    %402 = vmatpush.msra.mxu0 0.0
    %403 = vmatpush.msra.mxu0 0.0
    %404 = vmatpush.msra.mxu0 0.0
    %405 = vmatpush.msra.mxu0 0.0
    %406 = vmatpush.msra.mxu0 0.0
    %407 = vmatpush.msra.mxu0 %v389
    %408 = vmatpush.msra.mxu0 %v388
    %409 = vmatpush.msra.mxu0 %v387
    %410 = vmatpush.msra.mxu0 %v386
    %411 = vmatmul.f32.gmra.mxu0 %v240
    %v412 = vpop.f32.mrf.mxu0
    %v413 = vadd.f32 %v393, %v412
    %414 = vdwg.mxu0
    %s415 = scalar_lea.vmem %s17, 32
    %v416 = vld [vmem:[%s415] sm:$0xff]
    %v417 = vld [vmem:[%s415 + $0x8] sm:$0xff]
    %v418 = vld [vmem:[%s415 + $0x10] sm:$0xff]
    %v419 = vld [vmem:[%s415 + $0x18] sm:$0xff]
    %s420 = scalar_lea.vmem %s23, 1
    %v421 = vld [vmem:[%s420] sm:$0x1]
    %v423 = vperm.slane %v421, 0
    %425 = vmatpush.msra.mxu0 0.0
    %426 = vmatpush.msra.mxu0 0.0
    %427 = vmatpush.msra.mxu0 0.0
    %428 = vmatpush.msra.mxu0 0.0
    %429 = vmatpush.msra.mxu0 0.0
    %430 = vmatpush.msra.mxu0 0.0
    %431 = vmatpush.msra.mxu0 0.0
    %432 = vmatpush.msra.mxu0 0.0
    %433 = vmatpush.msra.mxu0 0.0
    %434 = vmatpush.msra.mxu0 0.0
    %435 = vmatpush.msra.mxu0 0.0
    %436 = vmatpush.msra.mxu0 0.0
    %437 = vmatpush.msra.mxu0 %v419
    %438 = vmatpush.msra.mxu0 %v418
    %439 = vmatpush.msra.mxu0 %v417
    %440 = vmatpush.msra.mxu0 %v416
    %441 = vmatmul.f32.gmra.mxu0 %v240
    %v442 = vpop.f32.mrf.mxu0
    %v443 = vadd.f32 %v423, %v442
    %444 = vdwg.mxu0
    %s445 = scalar_lea.vmem %s19, 32
    %v446 = vld [vmem:[%s445] sm:$0xff]
    %v447 = vld [vmem:[%s445 + $0x8] sm:$0xff]
    %v448 = vld [vmem:[%s445 + $0x10] sm:$0xff]
    %v449 = vld [vmem:[%s445 + $0x18] sm:$0xff]
    %s450 = scalar_lea.vmem %s25, 1
    %v451 = vld [vmem:[%s450] sm:$0x1]
    %v453 = vperm.slane %v451, 0
    %455 = vmatpush.msra.mxu0 0.0
    %456 = vmatpush.msra.mxu0 0.0
    %457 = vmatpush.msra.mxu0 0.0
    %458 = vmatpush.msra.mxu0 0.0
    %459 = vmatpush.msra.mxu0 0.0
    %460 = vmatpush.msra.mxu0 0.0
    %461 = vmatpush.msra.mxu0 0.0
    %462 = vmatpush.msra.mxu0 0.0
    %463 = vmatpush.msra.mxu0 0.0
    %464 = vmatpush.msra.mxu0 0.0
    %465 = vmatpush.msra.mxu0 0.0
    %466 = vmatpush.msra.mxu0 0.0
    %467 = vmatpush.msra.mxu0 %v449
    %468 = vmatpush.msra.mxu0 %v448
    %469 = vmatpush.msra.mxu0 %v447
    %470 = vmatpush.msra.mxu0 %v446
    %471 = vmatmul.f32.gmra.mxu0 %v240
    %v472 = vpop.f32.mrf.mxu0
    %v473 = vadd.f32 %v453, %v472
    %474 = vdwg.mxu0
    %v476 = vsel %vm318, %v413, 0
    %v479 = vsel %vm318, %v443, 0
    %481 = vmatpush.xpose.msra.mxu0 0.0
    %482 = vmatpush.xpose.msra.mxu0 0.0
    %483 = vmatpush.xpose.msra.mxu0 0.0
    %484 = vmatpush.xpose.msra.mxu0 0.0
    %485 = vmatpush.xpose.msra.mxu0 0.0
    %486 = vmatpush.xpose.msra.mxu0 0.0
    %487 = vmatpush.xpose.msra.mxu0 0.0
    %488 = vmatpush.xpose.msra.mxu0 0.0
    %489 = vmatpush.xpose.msra.mxu0 0.0
    %490 = vmatpush.xpose.msra.mxu0 0.0
    %491 = vmatpush.xpose.msra.mxu0 0.0
    %492 = vmatpush.xpose.msra.mxu0 0.0
    %493 = vmatpush.xpose.msra.mxu0 0.0
    %494 = vmatpush.xpose.msra.mxu0 0.0
    %495 = vmatpush.xpose.msra.mxu0 0.0
    %496 = vmatpush.xpose.msra.mxu0 %v479
    %497 = vmatmul.f32.gmra.mxu0 %v476
    %v498 = vpop.f32.mrf.mxu0
    %v499 = vadd.f32 0.0, %v498
    %500 = vdwg.mxu0
    %v501 = vmul.f32 %v499, 0.35355338
    %v502 = vadd.f32 %v501, %v347
    %v503 = vsel %vm318, %v502, -inf
    %504 = vmax.xlane.f32.xlu0 %v503
    %v505 = vpop.xlane.xlu0 %504
    %v506 = vsub.f32 %v502, %v505
    %v507 = vmul.f32 %v506, 1.442695
    %v508 = vpow.pop %v507
    %v509 = vsel %vm318, %v508, 0.0
    %510 = vadd.xlane.f32.xlu0 %v509
    %v511 = vpop.xlane.xlu0 %510
    %v512 = vrcp.pop %v511
    %v513 = vmul.f32 %v508, %v512
    %v515 = vsel %vm318, %v513, 0
    %517 = vmatpush.msra.mxu0 0.0
    %518 = vmatpush.msra.mxu0 0.0
    %519 = vmatpush.msra.mxu0 0.0
    %520 = vmatpush.msra.mxu0 0.0
    %521 = vmatpush.msra.mxu0 0.0
    %522 = vmatpush.msra.mxu0 0.0
    %523 = vmatpush.msra.mxu0 0.0
    %524 = vmatpush.msra.mxu0 0.0
    %525 = vmatpush.msra.mxu0 0.0
    %526 = vmatpush.msra.mxu0 0.0
    %527 = vmatpush.msra.mxu0 0.0
    %528 = vmatpush.msra.mxu0 0.0
    %529 = vmatpush.msra.mxu0 0.0
    %530 = vmatpush.msra.mxu0 0.0
    %531 = vmatpush.msra.mxu0 0.0
    %532 = vmatpush.msra.mxu0 %v473
    %533 = vmatmul.f32.gmra.mxu0 %v515
    %v534 = vpop.f32.mrf.mxu0
    %v535 = vadd.f32 0.0, %v534
    %536 = vdwg.mxu0
    %s537 = scalar_lea.vmem %s27, 8
    %v538 = vld [vmem:[%s537] sm:$0xff]
    %v540 = vsel %vm318, %v535, 0
    %542 = vmatpush.msra.mxu0 0.0
    %543 = vmatpush.msra.mxu0 0.0
    %544 = vmatpush.msra.mxu0 0.0
    %545 = vmatpush.msra.mxu0 0.0
    %546 = vmatpush.msra.mxu0 0.0
    %547 = vmatpush.msra.mxu0 0.0
    %548 = vmatpush.msra.mxu0 0.0
    %549 = vmatpush.msra.mxu0 0.0
    %550 = vmatpush.msra.mxu0 0.0
    %551 = vmatpush.msra.mxu0 0.0
    %552 = vmatpush.msra.mxu0 0.0
    %553 = vmatpush.msra.mxu0 0.0
    %554 = vmatpush.msra.mxu0 0.0
    %555 = vmatpush.msra.mxu0 0.0
    %556 = vmatpush.msra.mxu0 0.0
    %557 = vmatpush.msra.mxu0 %v538
    %558 = vmatmul.f32.gmra.mxu0 %v540
    %v559 = vpop.f32.mrf.mxu0
    %v560 = vadd.f32 0.0, %v559
    %561 = vdwg.mxu0
    %v563 = vsel %vm318, %v382, 0
    %565 = vmatpush.msra.mxu0 0.0
    %566 = vmatpush.msra.mxu0 0.0
    %567 = vmatpush.msra.mxu0 0.0
    %568 = vmatpush.msra.mxu0 0.0
    %569 = vmatpush.msra.mxu0 0.0
    %570 = vmatpush.msra.mxu0 0.0
    %571 = vmatpush.msra.mxu0 0.0
    %572 = vmatpush.msra.mxu0 0.0
    %573 = vmatpush.msra.mxu0 0.0
    %574 = vmatpush.msra.mxu0 0.0
    %575 = vmatpush.msra.mxu0 0.0
    %576 = vmatpush.msra.mxu0 0.0
    %577 = vmatpush.msra.mxu0 0.0
    %578 = vmatpush.msra.mxu0 0.0
    %579 = vmatpush.msra.mxu0 0.0
    %580 = vmatpush.msra.mxu0 %v384
    %581 = vmatmul.f32.gmra.mxu0 %v563
    %v582 = vpop.f32.mrf.mxu0
    %v583 = vadd.f32 %v560, %v582
    %584 = vdwg.mxu0
    %s585 = scalar_lea.vmem %s15, 64
    %v586 = vld [vmem:[%s585] sm:$0xff]
    %v587 = vld [vmem:[%s585 + $0x8] sm:$0xff]
    %v588 = vld [vmem:[%s585 + $0x10] sm:$0xff]
    %v589 = vld [vmem:[%s585 + $0x18] sm:$0xff]
    %s590 = scalar_lea.vmem %s21, 2
    %v591 = vld [vmem:[%s590] sm:$0x1]
    %v593 = vperm.slane %v591, 0
    %595 = vmatpush.msra.mxu0 0.0
    %596 = vmatpush.msra.mxu0 0.0
    %597 = vmatpush.msra.mxu0 0.0
    %598 = vmatpush.msra.mxu0 0.0
    %599 = vmatpush.msra.mxu0 0.0
    %600 = vmatpush.msra.mxu0 0.0
    %601 = vmatpush.msra.mxu0 0.0
    %602 = vmatpush.msra.mxu0 0.0
    %603 = vmatpush.msra.mxu0 0.0
    %604 = vmatpush.msra.mxu0 0.0
    %605 = vmatpush.msra.mxu0 0.0
    %606 = vmatpush.msra.mxu0 0.0
    %607 = vmatpush.msra.mxu0 %v589
    %608 = vmatpush.msra.mxu0 %v588
    %609 = vmatpush.msra.mxu0 %v587
    %610 = vmatpush.msra.mxu0 %v586
    %611 = vmatmul.f32.gmra.mxu0 %v240
    %v612 = vpop.f32.mrf.mxu0
    %v613 = vadd.f32 %v593, %v612
    %614 = vdwg.mxu0
    %s615 = scalar_lea.vmem %s17, 64
    %v616 = vld [vmem:[%s615] sm:$0xff]
    %v617 = vld [vmem:[%s615 + $0x8] sm:$0xff]
    %v618 = vld [vmem:[%s615 + $0x10] sm:$0xff]
    %v619 = vld [vmem:[%s615 + $0x18] sm:$0xff]
    %s620 = scalar_lea.vmem %s23, 2
    %v621 = vld [vmem:[%s620] sm:$0x1]
    %v623 = vperm.slane %v621, 0
    %625 = vmatpush.msra.mxu0 0.0
    %626 = vmatpush.msra.mxu0 0.0
    %627 = vmatpush.msra.mxu0 0.0
    %628 = vmatpush.msra.mxu0 0.0
    %629 = vmatpush.msra.mxu0 0.0
    %630 = vmatpush.msra.mxu0 0.0
    %631 = vmatpush.msra.mxu0 0.0
    %632 = vmatpush.msra.mxu0 0.0
    %633 = vmatpush.msra.mxu0 0.0
    %634 = vmatpush.msra.mxu0 0.0
    %635 = vmatpush.msra.mxu0 0.0
    %636 = vmatpush.msra.mxu0 0.0
    %637 = vmatpush.msra.mxu0 %v619
    %638 = vmatpush.msra.mxu0 %v618
    %639 = vmatpush.msra.mxu0 %v617
    %640 = vmatpush.msra.mxu0 %v616
    %641 = vmatmul.f32.gmra.mxu0 %v240
    %v642 = vpop.f32.mrf.mxu0
    %v643 = vadd.f32 %v623, %v642
    %644 = vdwg.mxu0
    %s645 = scalar_lea.vmem %s19, 64
    %v646 = vld [vmem:[%s645] sm:$0xff]
    %v647 = vld [vmem:[%s645 + $0x8] sm:$0xff]
    %v648 = vld [vmem:[%s645 + $0x10] sm:$0xff]
    %v649 = vld [vmem:[%s645 + $0x18] sm:$0xff]
    %s650 = scalar_lea.vmem %s25, 2
    %v651 = vld [vmem:[%s650] sm:$0x1]
    %v653 = vperm.slane %v651, 0
    %655 = vmatpush.msra.mxu0 0.0
    %656 = vmatpush.msra.mxu0 0.0
    %657 = vmatpush.msra.mxu0 0.0
    %658 = vmatpush.msra.mxu0 0.0
    %659 = vmatpush.msra.mxu0 0.0
    %660 = vmatpush.msra.mxu0 0.0
    %661 = vmatpush.msra.mxu0 0.0
    %662 = vmatpush.msra.mxu0 0.0
    %663 = vmatpush.msra.mxu0 0.0
    %664 = vmatpush.msra.mxu0 0.0
    %665 = vmatpush.msra.mxu0 0.0
    %666 = vmatpush.msra.mxu0 0.0
    %667 = vmatpush.msra.mxu0 %v649
    %668 = vmatpush.msra.mxu0 %v648
    %669 = vmatpush.msra.mxu0 %v647
    %670 = vmatpush.msra.mxu0 %v646
    %671 = vmatmul.f32.gmra.mxu0 %v240
    %v672 = vpop.f32.mrf.mxu0
    %v673 = vadd.f32 %v653, %v672
    %674 = vdwg.mxu0
    %v676 = vsel %vm318, %v613, 0
    %v679 = vsel %vm318, %v643, 0
    %681 = vmatpush.xpose.msra.mxu0 0.0
    %682 = vmatpush.xpose.msra.mxu0 0.0
    %683 = vmatpush.xpose.msra.mxu0 0.0
    %684 = vmatpush.xpose.msra.mxu0 0.0
    %685 = vmatpush.xpose.msra.mxu0 0.0
    %686 = vmatpush.xpose.msra.mxu0 0.0
    %687 = vmatpush.xpose.msra.mxu0 0.0
    %688 = vmatpush.xpose.msra.mxu0 0.0
    %689 = vmatpush.xpose.msra.mxu0 0.0
    %690 = vmatpush.xpose.msra.mxu0 0.0
    %691 = vmatpush.xpose.msra.mxu0 0.0
    %692 = vmatpush.xpose.msra.mxu0 0.0
    %693 = vmatpush.xpose.msra.mxu0 0.0
    %694 = vmatpush.xpose.msra.mxu0 0.0
    %695 = vmatpush.xpose.msra.mxu0 0.0
    %696 = vmatpush.xpose.msra.mxu0 %v679
    %697 = vmatmul.f32.gmra.mxu0 %v676
    %v698 = vpop.f32.mrf.mxu0
    %v699 = vadd.f32 0.0, %v698
    %700 = vdwg.mxu0
    %v701 = vmul.f32 %v699, 0.35355338
    %v702 = vadd.f32 %v701, %v347
    %v703 = vsel %vm318, %v702, -inf
    %704 = vmax.xlane.f32.xlu0 %v703
    %v705 = vpop.xlane.xlu0 %704
    %v706 = vsub.f32 %v702, %v705
    %v707 = vmul.f32 %v706, 1.442695
    %v708 = vpow.pop %v707
    %v709 = vsel %vm318, %v708, 0.0
    %710 = vadd.xlane.f32.xlu0 %v709
    %v711 = vpop.xlane.xlu0 %710
    %v712 = vrcp.pop %v711
    %v713 = vmul.f32 %v708, %v712
    %v715 = vsel %vm318, %v713, 0
    %717 = vmatpush.msra.mxu0 0.0
    %718 = vmatpush.msra.mxu0 0.0
    %719 = vmatpush.msra.mxu0 0.0
    %720 = vmatpush.msra.mxu0 0.0
    %721 = vmatpush.msra.mxu0 0.0
    %722 = vmatpush.msra.mxu0 0.0
    %723 = vmatpush.msra.mxu0 0.0
    %724 = vmatpush.msra.mxu0 0.0
    %725 = vmatpush.msra.mxu0 0.0
    %726 = vmatpush.msra.mxu0 0.0
    %727 = vmatpush.msra.mxu0 0.0
    %728 = vmatpush.msra.mxu0 0.0
    %729 = vmatpush.msra.mxu0 0.0
    %730 = vmatpush.msra.mxu0 0.0
    %731 = vmatpush.msra.mxu0 0.0
    %732 = vmatpush.msra.mxu0 %v673
    %733 = vmatmul.f32.gmra.mxu0 %v715
    %v734 = vpop.f32.mrf.mxu0
    %v735 = vadd.f32 0.0, %v734
    %736 = vdwg.mxu0
    %s737 = scalar_lea.vmem %s27, 16
    %v738 = vld [vmem:[%s737] sm:$0xff]
    %v740 = vsel %vm318, %v735, 0
    %742 = vmatpush.msra.mxu0 0.0
    %743 = vmatpush.msra.mxu0 0.0
    %744 = vmatpush.msra.mxu0 0.0
    %745 = vmatpush.msra.mxu0 0.0
    %746 = vmatpush.msra.mxu0 0.0
    %747 = vmatpush.msra.mxu0 0.0
    %748 = vmatpush.msra.mxu0 0.0
    %749 = vmatpush.msra.mxu0 0.0
    %750 = vmatpush.msra.mxu0 0.0
    %751 = vmatpush.msra.mxu0 0.0
    %752 = vmatpush.msra.mxu0 0.0
    %753 = vmatpush.msra.mxu0 0.0
    %754 = vmatpush.msra.mxu0 0.0
    %755 = vmatpush.msra.mxu0 0.0
    %756 = vmatpush.msra.mxu0 0.0
    %757 = vmatpush.msra.mxu0 %v738
    %758 = vmatmul.f32.gmra.mxu0 %v740
    %v759 = vpop.f32.mrf.mxu0
    %v760 = vadd.f32 0.0, %v759
    %761 = vdwg.mxu0
    %v762 = vadd.f32 %v583, %v760
    %s763 = scalar_lea.vmem %s15, 96
    %v764 = vld [vmem:[%s763] sm:$0xff]
    %v765 = vld [vmem:[%s763 + $0x8] sm:$0xff]
    %v766 = vld [vmem:[%s763 + $0x10] sm:$0xff]
    %v767 = vld [vmem:[%s763 + $0x18] sm:$0xff]
    %s768 = scalar_lea.vmem %s21, 3
    %v769 = vld [vmem:[%s768] sm:$0x1]
    %v771 = vperm.slane %v769, 0
    %773 = vmatpush.msra.mxu0 0.0
    %774 = vmatpush.msra.mxu0 0.0
    %775 = vmatpush.msra.mxu0 0.0
    %776 = vmatpush.msra.mxu0 0.0
    %777 = vmatpush.msra.mxu0 0.0
    %778 = vmatpush.msra.mxu0 0.0
    %779 = vmatpush.msra.mxu0 0.0
    %780 = vmatpush.msra.mxu0 0.0
    %781 = vmatpush.msra.mxu0 0.0
    %782 = vmatpush.msra.mxu0 0.0
    %783 = vmatpush.msra.mxu0 0.0
    %784 = vmatpush.msra.mxu0 0.0
    %785 = vmatpush.msra.mxu0 %v767
    %786 = vmatpush.msra.mxu0 %v766
    %787 = vmatpush.msra.mxu0 %v765
    %788 = vmatpush.msra.mxu0 %v764
    %789 = vmatmul.f32.gmra.mxu0 %v240
    %v790 = vpop.f32.mrf.mxu0
    %v791 = vadd.f32 %v771, %v790
    %792 = vdwg.mxu0
    %s793 = scalar_lea.vmem %s17, 96
    %v794 = vld [vmem:[%s793] sm:$0xff]
    %v795 = vld [vmem:[%s793 + $0x8] sm:$0xff]
    %v796 = vld [vmem:[%s793 + $0x10] sm:$0xff]
    %v797 = vld [vmem:[%s793 + $0x18] sm:$0xff]
    %s798 = scalar_lea.vmem %s23, 3
    %v799 = vld [vmem:[%s798] sm:$0x1]
    %v801 = vperm.slane %v799, 0
    %803 = vmatpush.msra.mxu0 0.0
    %804 = vmatpush.msra.mxu0 0.0
    %805 = vmatpush.msra.mxu0 0.0
    %806 = vmatpush.msra.mxu0 0.0
    %807 = vmatpush.msra.mxu0 0.0
    %808 = vmatpush.msra.mxu0 0.0
    %809 = vmatpush.msra.mxu0 0.0
    %810 = vmatpush.msra.mxu0 0.0
    %811 = vmatpush.msra.mxu0 0.0
    %812 = vmatpush.msra.mxu0 0.0
    %813 = vmatpush.msra.mxu0 0.0
    %814 = vmatpush.msra.mxu0 0.0
    %815 = vmatpush.msra.mxu0 %v797
    %816 = vmatpush.msra.mxu0 %v796
    %817 = vmatpush.msra.mxu0 %v795
    %818 = vmatpush.msra.mxu0 %v794
    %819 = vmatmul.f32.gmra.mxu0 %v240
    %v820 = vpop.f32.mrf.mxu0
    %v821 = vadd.f32 %v801, %v820
    %822 = vdwg.mxu0
    %s823 = scalar_lea.vmem %s19, 96
    %v824 = vld [vmem:[%s823] sm:$0xff]
    %v825 = vld [vmem:[%s823 + $0x8] sm:$0xff]
    %v826 = vld [vmem:[%s823 + $0x10] sm:$0xff]
    %v827 = vld [vmem:[%s823 + $0x18] sm:$0xff]
    %s828 = scalar_lea.vmem %s25, 3
    %v829 = vld [vmem:[%s828] sm:$0x1]
    %v831 = vperm.slane %v829, 0
    %833 = vmatpush.msra.mxu0 0.0
    %834 = vmatpush.msra.mxu0 0.0
    %835 = vmatpush.msra.mxu0 0.0
    %836 = vmatpush.msra.mxu0 0.0
    %837 = vmatpush.msra.mxu0 0.0
    %838 = vmatpush.msra.mxu0 0.0
    %839 = vmatpush.msra.mxu0 0.0
    %840 = vmatpush.msra.mxu0 0.0
    %841 = vmatpush.msra.mxu0 0.0
    %842 = vmatpush.msra.mxu0 0.0
    %843 = vmatpush.msra.mxu0 0.0
    %844 = vmatpush.msra.mxu0 0.0
    %845 = vmatpush.msra.mxu0 %v827
    %846 = vmatpush.msra.mxu0 %v826
    %847 = vmatpush.msra.mxu0 %v825
    %848 = vmatpush.msra.mxu0 %v824
    %849 = vmatmul.f32.gmra.mxu0 %v240
    %v850 = vpop.f32.mrf.mxu0
    %v851 = vadd.f32 %v831, %v850
    %852 = vdwg.mxu0
    %v854 = vsel %vm318, %v791, 0
    %v857 = vsel %vm318, %v821, 0
    %859 = vmatpush.xpose.msra.mxu0 0.0
    %860 = vmatpush.xpose.msra.mxu0 0.0
    %861 = vmatpush.xpose.msra.mxu0 0.0
    %862 = vmatpush.xpose.msra.mxu0 0.0
    %863 = vmatpush.xpose.msra.mxu0 0.0
    %864 = vmatpush.xpose.msra.mxu0 0.0
    %865 = vmatpush.xpose.msra.mxu0 0.0
    %866 = vmatpush.xpose.msra.mxu0 0.0
    %867 = vmatpush.xpose.msra.mxu0 0.0
    %868 = vmatpush.xpose.msra.mxu0 0.0
    %869 = vmatpush.xpose.msra.mxu0 0.0
    %870 = vmatpush.xpose.msra.mxu0 0.0
    %871 = vmatpush.xpose.msra.mxu0 0.0
    %872 = vmatpush.xpose.msra.mxu0 0.0
    %873 = vmatpush.xpose.msra.mxu0 0.0
    %874 = vmatpush.xpose.msra.mxu0 %v857
    %875 = vmatmul.f32.gmra.mxu0 %v854
    %v876 = vpop.f32.mrf.mxu0
    %v877 = vadd.f32 0.0, %v876
    %878 = vdwg.mxu0
    %v879 = vmul.f32 %v877, 0.35355338
    %v880 = vadd.f32 %v879, %v347
    %v881 = vsel %vm318, %v880, -inf
    %882 = vmax.xlane.f32.xlu0 %v881
    %v883 = vpop.xlane.xlu0 %882
    %v884 = vsub.f32 %v880, %v883
    %v885 = vmul.f32 %v884, 1.442695
    %v886 = vpow.pop %v885
    %v887 = vsel %vm318, %v886, 0.0
    %888 = vadd.xlane.f32.xlu0 %v887
    %v889 = vpop.xlane.xlu0 %888
    %v890 = vrcp.pop %v889
    %v891 = vmul.f32 %v886, %v890
    %v893 = vsel %vm318, %v891, 0
    %895 = vmatpush.msra.mxu0 0.0
    %896 = vmatpush.msra.mxu0 0.0
    %897 = vmatpush.msra.mxu0 0.0
    %898 = vmatpush.msra.mxu0 0.0
    %899 = vmatpush.msra.mxu0 0.0
    %900 = vmatpush.msra.mxu0 0.0
    %901 = vmatpush.msra.mxu0 0.0
    %902 = vmatpush.msra.mxu0 0.0
    %903 = vmatpush.msra.mxu0 0.0
    %904 = vmatpush.msra.mxu0 0.0
    %905 = vmatpush.msra.mxu0 0.0
    %906 = vmatpush.msra.mxu0 0.0
    %907 = vmatpush.msra.mxu0 0.0
    %908 = vmatpush.msra.mxu0 0.0
    %909 = vmatpush.msra.mxu0 0.0
    %910 = vmatpush.msra.mxu0 %v851
    %911 = vmatmul.f32.gmra.mxu0 %v893
    %v912 = vpop.f32.mrf.mxu0
    %v913 = vadd.f32 0.0, %v912
    %914 = vdwg.mxu0
    %s915 = scalar_lea.vmem %s27, 24
    %v916 = vld [vmem:[%s915] sm:$0xff]
    %v918 = vsel %vm318, %v913, 0
    %920 = vmatpush.msra.mxu0 0.0
    %921 = vmatpush.msra.mxu0 0.0
    %922 = vmatpush.msra.mxu0 0.0
    %923 = vmatpush.msra.mxu0 0.0
    %924 = vmatpush.msra.mxu0 0.0
    %925 = vmatpush.msra.mxu0 0.0
    %926 = vmatpush.msra.mxu0 0.0
    %927 = vmatpush.msra.mxu0 0.0
    %928 = vmatpush.msra.mxu0 0.0
    %929 = vmatpush.msra.mxu0 0.0
    %930 = vmatpush.msra.mxu0 0.0
    %931 = vmatpush.msra.mxu0 0.0
    %932 = vmatpush.msra.mxu0 0.0
    %933 = vmatpush.msra.mxu0 0.0
    %934 = vmatpush.msra.mxu0 0.0
    %935 = vmatpush.msra.mxu0 %v916
    %936 = vmatmul.f32.gmra.mxu0 %v918
    %v937 = vpop.f32.mrf.mxu0
    %v938 = vadd.f32 0.0, %v937
    %939 = vdwg.mxu0
    %v940 = vadd.f32 %v762, %v938
    %941 = vst.msk [vmem:[#allocation2] sm:$0xff] %vm238, %v940
    %s942 = scalar_lea.vmem %s7, 1
    %v943 = vld [vmem:[%s942] sm:$0x1]
    %v944 = vld [vmem:[%s15] sm:$0xff]
    %v945 = vld [vmem:[%s15 + $0x8] sm:$0xff]
    %v946 = vld [vmem:[%s15 + $0x10] sm:$0xff]
    %v947 = vld [vmem:[%s15 + $0x18] sm:$0xff]
    %v948 = vld [vmem:[%s21] sm:$0x1]
    %v950 = vperm.slane %v948, 0
    %v953 = vsel %vm238, %v228, 0
    %955 = vmatpush.msra.mxu0 0.0
    %956 = vmatpush.msra.mxu0 0.0
    %957 = vmatpush.msra.mxu0 0.0
    %958 = vmatpush.msra.mxu0 0.0
    %959 = vmatpush.msra.mxu0 0.0
    %960 = vmatpush.msra.mxu0 0.0
    %961 = vmatpush.msra.mxu0 0.0
    %962 = vmatpush.msra.mxu0 0.0
    %963 = vmatpush.msra.mxu0 0.0
    %964 = vmatpush.msra.mxu0 0.0
    %965 = vmatpush.msra.mxu0 0.0
    %966 = vmatpush.msra.mxu0 0.0
    %967 = vmatpush.msra.mxu0 %v947
    %968 = vmatpush.msra.mxu0 %v946
    %969 = vmatpush.msra.mxu0 %v945
    %970 = vmatpush.msra.mxu0 %v944
    %971 = vmatmul.f32.gmra.mxu0 %v953
    %v972 = vpop.f32.mrf.mxu0
    %v973 = vadd.f32 %v950, %v972
    %974 = vdwg.mxu0
    %v975 = vld [vmem:[%s17] sm:$0xff]
    %v976 = vld [vmem:[%s17 + $0x8] sm:$0xff]
    %v977 = vld [vmem:[%s17 + $0x10] sm:$0xff]
    %v978 = vld [vmem:[%s17 + $0x18] sm:$0xff]
    %v979 = vld [vmem:[%s23] sm:$0x1]
    %v981 = vperm.slane %v979, 0
    %983 = vmatpush.msra.mxu0 0.0
    %984 = vmatpush.msra.mxu0 0.0
    %985 = vmatpush.msra.mxu0 0.0
    %986 = vmatpush.msra.mxu0 0.0
    %987 = vmatpush.msra.mxu0 0.0
    %988 = vmatpush.msra.mxu0 0.0
    %989 = vmatpush.msra.mxu0 0.0
    %990 = vmatpush.msra.mxu0 0.0
    %991 = vmatpush.msra.mxu0 0.0
    %992 = vmatpush.msra.mxu0 0.0
    %993 = vmatpush.msra.mxu0 0.0
    %994 = vmatpush.msra.mxu0 0.0
    %995 = vmatpush.msra.mxu0 %v978
    %996 = vmatpush.msra.mxu0 %v977
    %997 = vmatpush.msra.mxu0 %v976
    %998 = vmatpush.msra.mxu0 %v975
    %999 = vmatmul.f32.gmra.mxu0 %v953
    %v1000 = vpop.f32.mrf.mxu0
    %v1001 = vadd.f32 %v981, %v1000
    %1002 = vdwg.mxu0
    %v1003 = vld [vmem:[%s19] sm:$0xff]
    %v1004 = vld [vmem:[%s19 + $0x8] sm:$0xff]
    %v1005 = vld [vmem:[%s19 + $0x10] sm:$0xff]
    %v1006 = vld [vmem:[%s19 + $0x18] sm:$0xff]
    %v1007 = vld [vmem:[%s25] sm:$0x1]
    %v1009 = vperm.slane %v1007, 0
    %1011 = vmatpush.msra.mxu0 0.0
    %1012 = vmatpush.msra.mxu0 0.0
    %1013 = vmatpush.msra.mxu0 0.0
    %1014 = vmatpush.msra.mxu0 0.0
    %1015 = vmatpush.msra.mxu0 0.0
    %1016 = vmatpush.msra.mxu0 0.0
    %1017 = vmatpush.msra.mxu0 0.0
    %1018 = vmatpush.msra.mxu0 0.0
    %1019 = vmatpush.msra.mxu0 0.0
    %1020 = vmatpush.msra.mxu0 0.0
    %1021 = vmatpush.msra.mxu0 0.0
    %1022 = vmatpush.msra.mxu0 0.0
    %1023 = vmatpush.msra.mxu0 %v1006
    %1024 = vmatpush.msra.mxu0 %v1005
    %1025 = vmatpush.msra.mxu0 %v1004
    %1026 = vmatpush.msra.mxu0 %v1003
    %1027 = vmatmul.f32.gmra.mxu0 %v953
    %v1028 = vpop.f32.mrf.mxu0
    %v1029 = vadd.f32 %v1009, %v1028
    %1030 = vdwg.mxu0
    %v1032 = vsel %vm318, %v973, 0
    %v1035 = vsel %vm318, %v1001, 0
    %1037 = vmatpush.xpose.msra.mxu0 0.0
    %1038 = vmatpush.xpose.msra.mxu0 0.0
    %1039 = vmatpush.xpose.msra.mxu0 0.0
    %1040 = vmatpush.xpose.msra.mxu0 0.0
    %1041 = vmatpush.xpose.msra.mxu0 0.0
    %1042 = vmatpush.xpose.msra.mxu0 0.0
    %1043 = vmatpush.xpose.msra.mxu0 0.0
    %1044 = vmatpush.xpose.msra.mxu0 0.0
    %1045 = vmatpush.xpose.msra.mxu0 0.0
    %1046 = vmatpush.xpose.msra.mxu0 0.0
    %1047 = vmatpush.xpose.msra.mxu0 0.0
    %1048 = vmatpush.xpose.msra.mxu0 0.0
    %1049 = vmatpush.xpose.msra.mxu0 0.0
    %1050 = vmatpush.xpose.msra.mxu0 0.0
    %1051 = vmatpush.xpose.msra.mxu0 0.0
    %1052 = vmatpush.xpose.msra.mxu0 %v1035
    %1053 = vmatmul.f32.gmra.mxu0 %v1032
    %v1054 = vpop.f32.mrf.mxu0
    %v1055 = vadd.f32 0.0, %v1054
    %1056 = vdwg.mxu0
    %v1057 = vmul.f32 %v1055, 0.35355338
    %v1059 = vperm.slane %v943, 0
    %v1061 = vadd.f32 %v1057, %v1059
    %v1062 = vsel %vm318, %v1061, -inf
    %1063 = vmax.xlane.f32.xlu0 %v1062
    %v1064 = vpop.xlane.xlu0 %1063
    %v1065 = vsub.f32 %v1061, %v1064
    %v1066 = vmul.f32 %v1065, 1.442695
    %v1067 = vpow.pop %v1066
    %v1068 = vsel %vm318, %v1067, 0.0
    %1069 = vadd.xlane.f32.xlu0 %v1068
    %v1070 = vpop.xlane.xlu0 %1069
    %v1071 = vrcp.pop %v1070
    %v1072 = vmul.f32 %v1067, %v1071
    %v1074 = vsel %vm318, %v1072, 0
    %1076 = vmatpush.msra.mxu0 0.0
    %1077 = vmatpush.msra.mxu0 0.0
    %1078 = vmatpush.msra.mxu0 0.0
    %1079 = vmatpush.msra.mxu0 0.0
    %1080 = vmatpush.msra.mxu0 0.0
    %1081 = vmatpush.msra.mxu0 0.0
    %1082 = vmatpush.msra.mxu0 0.0
    %1083 = vmatpush.msra.mxu0 0.0
    %1084 = vmatpush.msra.mxu0 0.0
    %1085 = vmatpush.msra.mxu0 0.0
    %1086 = vmatpush.msra.mxu0 0.0
    %1087 = vmatpush.msra.mxu0 0.0
    %1088 = vmatpush.msra.mxu0 0.0
    %1089 = vmatpush.msra.mxu0 0.0
    %1090 = vmatpush.msra.mxu0 0.0
    %1091 = vmatpush.msra.mxu0 %v1029
    %1092 = vmatmul.f32.gmra.mxu0 %v1074
    %v1093 = vpop.f32.mrf.mxu0
    %v1094 = vadd.f32 0.0, %v1093
    %1095 = vdwg.mxu0
    %v1096 = vld [vmem:[%s27] sm:$0xff]
    %v1097 = vld [vmem:[%s385] sm:$0xff]
    %v1098 = vld [vmem:[%s385 + $0x8] sm:$0xff]
    %v1099 = vld [vmem:[%s385 + $0x10] sm:$0xff]
    %v1100 = vld [vmem:[%s385 + $0x18] sm:$0xff]
    %v1101 = vld [vmem:[%s390] sm:$0x1]
    %v1103 = vperm.slane %v1101, 0
    %1105 = vmatpush.msra.mxu0 0.0
    %1106 = vmatpush.msra.mxu0 0.0
    %1107 = vmatpush.msra.mxu0 0.0
    %1108 = vmatpush.msra.mxu0 0.0
    %1109 = vmatpush.msra.mxu0 0.0
    %1110 = vmatpush.msra.mxu0 0.0
    %1111 = vmatpush.msra.mxu0 0.0
    %1112 = vmatpush.msra.mxu0 0.0
    %1113 = vmatpush.msra.mxu0 0.0
    %1114 = vmatpush.msra.mxu0 0.0
    %1115 = vmatpush.msra.mxu0 0.0
    %1116 = vmatpush.msra.mxu0 0.0
    %1117 = vmatpush.msra.mxu0 %v1100
    %1118 = vmatpush.msra.mxu0 %v1099
    %1119 = vmatpush.msra.mxu0 %v1098
    %1120 = vmatpush.msra.mxu0 %v1097
    %1121 = vmatmul.f32.gmra.mxu0 %v953
    %v1122 = vpop.f32.mrf.mxu0
    %v1123 = vadd.f32 %v1103, %v1122
    %1124 = vdwg.mxu0
    %v1125 = vld [vmem:[%s415] sm:$0xff]
    %v1126 = vld [vmem:[%s415 + $0x8] sm:$0xff]
    %v1127 = vld [vmem:[%s415 + $0x10] sm:$0xff]
    %v1128 = vld [vmem:[%s415 + $0x18] sm:$0xff]
    %v1129 = vld [vmem:[%s420] sm:$0x1]
    %v1131 = vperm.slane %v1129, 0
    %1133 = vmatpush.msra.mxu0 0.0
    %1134 = vmatpush.msra.mxu0 0.0
    %1135 = vmatpush.msra.mxu0 0.0
    %1136 = vmatpush.msra.mxu0 0.0
    %1137 = vmatpush.msra.mxu0 0.0
    %1138 = vmatpush.msra.mxu0 0.0
    %1139 = vmatpush.msra.mxu0 0.0
    %1140 = vmatpush.msra.mxu0 0.0
    %1141 = vmatpush.msra.mxu0 0.0
    %1142 = vmatpush.msra.mxu0 0.0
    %1143 = vmatpush.msra.mxu0 0.0
    %1144 = vmatpush.msra.mxu0 0.0
    %1145 = vmatpush.msra.mxu0 %v1128
    %1146 = vmatpush.msra.mxu0 %v1127
    %1147 = vmatpush.msra.mxu0 %v1126
    %1148 = vmatpush.msra.mxu0 %v1125
    %1149 = vmatmul.f32.gmra.mxu0 %v953
    %v1150 = vpop.f32.mrf.mxu0
    %v1151 = vadd.f32 %v1131, %v1150
    %1152 = vdwg.mxu0
    %v1153 = vld [vmem:[%s445] sm:$0xff]
    %v1154 = vld [vmem:[%s445 + $0x8] sm:$0xff]
    %v1155 = vld [vmem:[%s445 + $0x10] sm:$0xff]
    %v1156 = vld [vmem:[%s445 + $0x18] sm:$0xff]
    %v1157 = vld [vmem:[%s450] sm:$0x1]
    %v1159 = vperm.slane %v1157, 0
    %1161 = vmatpush.msra.mxu0 0.0
    %1162 = vmatpush.msra.mxu0 0.0
    %1163 = vmatpush.msra.mxu0 0.0
    %1164 = vmatpush.msra.mxu0 0.0
    %1165 = vmatpush.msra.mxu0 0.0
    %1166 = vmatpush.msra.mxu0 0.0
    %1167 = vmatpush.msra.mxu0 0.0
    %1168 = vmatpush.msra.mxu0 0.0
    %1169 = vmatpush.msra.mxu0 0.0
    %1170 = vmatpush.msra.mxu0 0.0
    %1171 = vmatpush.msra.mxu0 0.0
    %1172 = vmatpush.msra.mxu0 0.0
    %1173 = vmatpush.msra.mxu0 %v1156
    %1174 = vmatpush.msra.mxu0 %v1155
    %1175 = vmatpush.msra.mxu0 %v1154
    %1176 = vmatpush.msra.mxu0 %v1153
    %1177 = vmatmul.f32.gmra.mxu0 %v953
    %v1178 = vpop.f32.mrf.mxu0
    %v1179 = vadd.f32 %v1159, %v1178
    %1180 = vdwg.mxu0
    %v1182 = vsel %vm318, %v1123, 0
    %v1185 = vsel %vm318, %v1151, 0
    %1187 = vmatpush.xpose.msra.mxu0 0.0
    %1188 = vmatpush.xpose.msra.mxu0 0.0
    %1189 = vmatpush.xpose.msra.mxu0 0.0
    %1190 = vmatpush.xpose.msra.mxu0 0.0
    %1191 = vmatpush.xpose.msra.mxu0 0.0
    %1192 = vmatpush.xpose.msra.mxu0 0.0
    %1193 = vmatpush.xpose.msra.mxu0 0.0
    %1194 = vmatpush.xpose.msra.mxu0 0.0
    %1195 = vmatpush.xpose.msra.mxu0 0.0
    %1196 = vmatpush.xpose.msra.mxu0 0.0
    %1197 = vmatpush.xpose.msra.mxu0 0.0
    %1198 = vmatpush.xpose.msra.mxu0 0.0
    %1199 = vmatpush.xpose.msra.mxu0 0.0
    %1200 = vmatpush.xpose.msra.mxu0 0.0
    %1201 = vmatpush.xpose.msra.mxu0 0.0
    %1202 = vmatpush.xpose.msra.mxu0 %v1185
    %1203 = vmatmul.f32.gmra.mxu0 %v1182
    %v1204 = vpop.f32.mrf.mxu0
    %v1205 = vadd.f32 0.0, %v1204
    %1206 = vdwg.mxu0
    %v1207 = vmul.f32 %v1205, 0.35355338
    %v1208 = vadd.f32 %v1207, %v1059
    %v1209 = vsel %vm318, %v1208, -inf
    %1210 = vmax.xlane.f32.xlu0 %v1209
    %v1211 = vpop.xlane.xlu0 %1210
    %v1212 = vsub.f32 %v1208, %v1211
    %v1213 = vmul.f32 %v1212, 1.442695
    %v1214 = vpow.pop %v1213
    %v1215 = vsel %vm318, %v1214, 0.0
    %1216 = vadd.xlane.f32.xlu0 %v1215
    %v1217 = vpop.xlane.xlu0 %1216
    %v1218 = vrcp.pop %v1217
    %v1219 = vmul.f32 %v1214, %v1218
    %v1221 = vsel %vm318, %v1219, 0
    %1223 = vmatpush.msra.mxu0 0.0
    %1224 = vmatpush.msra.mxu0 0.0
    %1225 = vmatpush.msra.mxu0 0.0
    %1226 = vmatpush.msra.mxu0 0.0
    %1227 = vmatpush.msra.mxu0 0.0
    %1228 = vmatpush.msra.mxu0 0.0
    %1229 = vmatpush.msra.mxu0 0.0
    %1230 = vmatpush.msra.mxu0 0.0
    %1231 = vmatpush.msra.mxu0 0.0
    %1232 = vmatpush.msra.mxu0 0.0
    %1233 = vmatpush.msra.mxu0 0.0
    %1234 = vmatpush.msra.mxu0 0.0
    %1235 = vmatpush.msra.mxu0 0.0
    %1236 = vmatpush.msra.mxu0 0.0
    %1237 = vmatpush.msra.mxu0 0.0
    %1238 = vmatpush.msra.mxu0 %v1179
    %1239 = vmatmul.f32.gmra.mxu0 %v1221
    %v1240 = vpop.f32.mrf.mxu0
    %v1241 = vadd.f32 0.0, %v1240
    %1242 = vdwg.mxu0
    %v1243 = vld [vmem:[%s537] sm:$0xff]
    %v1245 = vsel %vm318, %v1241, 0
    %1247 = vmatpush.msra.mxu0 0.0
    %1248 = vmatpush.msra.mxu0 0.0
    %1249 = vmatpush.msra.mxu0 0.0
    %1250 = vmatpush.msra.mxu0 0.0
    %1251 = vmatpush.msra.mxu0 0.0
    %1252 = vmatpush.msra.mxu0 0.0
    %1253 = vmatpush.msra.mxu0 0.0
    %1254 = vmatpush.msra.mxu0 0.0
    %1255 = vmatpush.msra.mxu0 0.0
    %1256 = vmatpush.msra.mxu0 0.0
    %1257 = vmatpush.msra.mxu0 0.0
    %1258 = vmatpush.msra.mxu0 0.0
    %1259 = vmatpush.msra.mxu0 0.0
    %1260 = vmatpush.msra.mxu0 0.0
    %1261 = vmatpush.msra.mxu0 0.0
    %1262 = vmatpush.msra.mxu0 %v1243
    %1263 = vmatmul.f32.gmra.mxu0 %v1245
    %v1264 = vpop.f32.mrf.mxu0
    %v1265 = vadd.f32 0.0, %v1264
    %1266 = vdwg.mxu0
    %v1268 = vsel %vm318, %v1094, 0
    %1270 = vmatpush.msra.mxu0 0.0
    %1271 = vmatpush.msra.mxu0 0.0
    %1272 = vmatpush.msra.mxu0 0.0
    %1273 = vmatpush.msra.mxu0 0.0
    %1274 = vmatpush.msra.mxu0 0.0
    %1275 = vmatpush.msra.mxu0 0.0
    %1276 = vmatpush.msra.mxu0 0.0
    %1277 = vmatpush.msra.mxu0 0.0
    %1278 = vmatpush.msra.mxu0 0.0
    %1279 = vmatpush.msra.mxu0 0.0
    %1280 = vmatpush.msra.mxu0 0.0
    %1281 = vmatpush.msra.mxu0 0.0
    %1282 = vmatpush.msra.mxu0 0.0
    %1283 = vmatpush.msra.mxu0 0.0
    %1284 = vmatpush.msra.mxu0 0.0
    %1285 = vmatpush.msra.mxu0 %v1096
    %1286 = vmatmul.f32.gmra.mxu0 %v1268
    %v1287 = vpop.f32.mrf.mxu0
    %v1288 = vadd.f32 %v1265, %v1287
    %1289 = vdwg.mxu0
    %v1290 = vld [vmem:[%s585] sm:$0xff]
    %v1291 = vld [vmem:[%s585 + $0x8] sm:$0xff]
    %v1292 = vld [vmem:[%s585 + $0x10] sm:$0xff]
    %v1293 = vld [vmem:[%s585 + $0x18] sm:$0xff]
    %v1294 = vld [vmem:[%s590] sm:$0x1]
    %v1296 = vperm.slane %v1294, 0
    %1298 = vmatpush.msra.mxu0 0.0
    %1299 = vmatpush.msra.mxu0 0.0
    %1300 = vmatpush.msra.mxu0 0.0
    %1301 = vmatpush.msra.mxu0 0.0
    %1302 = vmatpush.msra.mxu0 0.0
    %1303 = vmatpush.msra.mxu0 0.0
    %1304 = vmatpush.msra.mxu0 0.0
    %1305 = vmatpush.msra.mxu0 0.0
    %1306 = vmatpush.msra.mxu0 0.0
    %1307 = vmatpush.msra.mxu0 0.0
    %1308 = vmatpush.msra.mxu0 0.0
    %1309 = vmatpush.msra.mxu0 0.0
    %1310 = vmatpush.msra.mxu0 %v1293
    %1311 = vmatpush.msra.mxu0 %v1292
    %1312 = vmatpush.msra.mxu0 %v1291
    %1313 = vmatpush.msra.mxu0 %v1290
    %1314 = vmatmul.f32.gmra.mxu0 %v953
    %v1315 = vpop.f32.mrf.mxu0
    %v1316 = vadd.f32 %v1296, %v1315
    %1317 = vdwg.mxu0
    %v1318 = vld [vmem:[%s615] sm:$0xff]
    %v1319 = vld [vmem:[%s615 + $0x8] sm:$0xff]
    %v1320 = vld [vmem:[%s615 + $0x10] sm:$0xff]
    %v1321 = vld [vmem:[%s615 + $0x18] sm:$0xff]
    %v1322 = vld [vmem:[%s620] sm:$0x1]
    %v1324 = vperm.slane %v1322, 0
    %1326 = vmatpush.msra.mxu0 0.0
    %1327 = vmatpush.msra.mxu0 0.0
    %1328 = vmatpush.msra.mxu0 0.0
    %1329 = vmatpush.msra.mxu0 0.0
    %1330 = vmatpush.msra.mxu0 0.0
    %1331 = vmatpush.msra.mxu0 0.0
    %1332 = vmatpush.msra.mxu0 0.0
    %1333 = vmatpush.msra.mxu0 0.0
    %1334 = vmatpush.msra.mxu0 0.0
    %1335 = vmatpush.msra.mxu0 0.0
    %1336 = vmatpush.msra.mxu0 0.0
    %1337 = vmatpush.msra.mxu0 0.0
    %1338 = vmatpush.msra.mxu0 %v1321
    %1339 = vmatpush.msra.mxu0 %v1320
    %1340 = vmatpush.msra.mxu0 %v1319
    %1341 = vmatpush.msra.mxu0 %v1318
    %1342 = vmatmul.f32.gmra.mxu0 %v953
    %v1343 = vpop.f32.mrf.mxu0
    %v1344 = vadd.f32 %v1324, %v1343
    %1345 = vdwg.mxu0
    %v1346 = vld [vmem:[%s645] sm:$0xff]
    %v1347 = vld [vmem:[%s645 + $0x8] sm:$0xff]
    %v1348 = vld [vmem:[%s645 + $0x10] sm:$0xff]
    %v1349 = vld [vmem:[%s645 + $0x18] sm:$0xff]
    %v1350 = vld [vmem:[%s650] sm:$0x1]
    %v1352 = vperm.slane %v1350, 0
    %1354 = vmatpush.msra.mxu0 0.0
    %1355 = vmatpush.msra.mxu0 0.0
    %1356 = vmatpush.msra.mxu0 0.0
    %1357 = vmatpush.msra.mxu0 0.0
    %1358 = vmatpush.msra.mxu0 0.0
    %1359 = vmatpush.msra.mxu0 0.0
    %1360 = vmatpush.msra.mxu0 0.0
    %1361 = vmatpush.msra.mxu0 0.0
    %1362 = vmatpush.msra.mxu0 0.0
    %1363 = vmatpush.msra.mxu0 0.0
    %1364 = vmatpush.msra.mxu0 0.0
    %1365 = vmatpush.msra.mxu0 0.0
    %1366 = vmatpush.msra.mxu0 %v1349
    %1367 = vmatpush.msra.mxu0 %v1348
    %1368 = vmatpush.msra.mxu0 %v1347
    %1369 = vmatpush.msra.mxu0 %v1346
    %1370 = vmatmul.f32.gmra.mxu0 %v953
    %v1371 = vpop.f32.mrf.mxu0
    %v1372 = vadd.f32 %v1352, %v1371
    %1373 = vdwg.mxu0
    %v1375 = vsel %vm318, %v1316, 0
    %v1378 = vsel %vm318, %v1344, 0
    %1380 = vmatpush.xpose.msra.mxu0 0.0
    %1381 = vmatpush.xpose.msra.mxu0 0.0
    %1382 = vmatpush.xpose.msra.mxu0 0.0
    %1383 = vmatpush.xpose.msra.mxu0 0.0
    %1384 = vmatpush.xpose.msra.mxu0 0.0
    %1385 = vmatpush.xpose.msra.mxu0 0.0
    %1386 = vmatpush.xpose.msra.mxu0 0.0
    %1387 = vmatpush.xpose.msra.mxu0 0.0
    %1388 = vmatpush.xpose.msra.mxu0 0.0
    %1389 = vmatpush.xpose.msra.mxu0 0.0
    %1390 = vmatpush.xpose.msra.mxu0 0.0
    %1391 = vmatpush.xpose.msra.mxu0 0.0
    %1392 = vmatpush.xpose.msra.mxu0 0.0
    %1393 = vmatpush.xpose.msra.mxu0 0.0
    %1394 = vmatpush.xpose.msra.mxu0 0.0
    %1395 = vmatpush.xpose.msra.mxu0 %v1378
    %1396 = vmatmul.f32.gmra.mxu0 %v1375
    %v1397 = vpop.f32.mrf.mxu0
    %v1398 = vadd.f32 0.0, %v1397
    %1399 = vdwg.mxu0
    %v1400 = vmul.f32 %v1398, 0.35355338
    %v1401 = vadd.f32 %v1400, %v1059
    %v1402 = vsel %vm318, %v1401, -inf
    %1403 = vmax.xlane.f32.xlu0 %v1402
    %v1404 = vpop.xlane.xlu0 %1403
    %v1405 = vsub.f32 %v1401, %v1404
    %v1406 = vmul.f32 %v1405, 1.442695
    %v1407 = vpow.pop %v1406
    %v1408 = vsel %vm318, %v1407, 0.0
    %1409 = vadd.xlane.f32.xlu0 %v1408
    %v1410 = vpop.xlane.xlu0 %1409
    %v1411 = vrcp.pop %v1410
    %v1412 = vmul.f32 %v1407, %v1411
    %v1414 = vsel %vm318, %v1412, 0
    %1416 = vmatpush.msra.mxu0 0.0
    %1417 = vmatpush.msra.mxu0 0.0
    %1418 = vmatpush.msra.mxu0 0.0
    %1419 = vmatpush.msra.mxu0 0.0
    %1420 = vmatpush.msra.mxu0 0.0
    %1421 = vmatpush.msra.mxu0 0.0
    %1422 = vmatpush.msra.mxu0 0.0
    %1423 = vmatpush.msra.mxu0 0.0
    %1424 = vmatpush.msra.mxu0 0.0
    %1425 = vmatpush.msra.mxu0 0.0
    %1426 = vmatpush.msra.mxu0 0.0
    %1427 = vmatpush.msra.mxu0 0.0
    %1428 = vmatpush.msra.mxu0 0.0
    %1429 = vmatpush.msra.mxu0 0.0
    %1430 = vmatpush.msra.mxu0 0.0
    %1431 = vmatpush.msra.mxu0 %v1372
    %1432 = vmatmul.f32.gmra.mxu0 %v1414
    %v1433 = vpop.f32.mrf.mxu0
    %v1434 = vadd.f32 0.0, %v1433
    %1435 = vdwg.mxu0
    %v1436 = vld [vmem:[%s737] sm:$0xff]
    %v1438 = vsel %vm318, %v1434, 0
    %1440 = vmatpush.msra.mxu0 0.0
    %1441 = vmatpush.msra.mxu0 0.0
    %1442 = vmatpush.msra.mxu0 0.0
    %1443 = vmatpush.msra.mxu0 0.0
    %1444 = vmatpush.msra.mxu0 0.0
    %1445 = vmatpush.msra.mxu0 0.0
    %1446 = vmatpush.msra.mxu0 0.0
    %1447 = vmatpush.msra.mxu0 0.0
    %1448 = vmatpush.msra.mxu0 0.0
    %1449 = vmatpush.msra.mxu0 0.0
    %1450 = vmatpush.msra.mxu0 0.0
    %1451 = vmatpush.msra.mxu0 0.0
    %1452 = vmatpush.msra.mxu0 0.0
    %1453 = vmatpush.msra.mxu0 0.0
    %1454 = vmatpush.msra.mxu0 0.0
    %1455 = vmatpush.msra.mxu0 %v1436
    %1456 = vmatmul.f32.gmra.mxu0 %v1438
    %v1457 = vpop.f32.mrf.mxu0
    %v1458 = vadd.f32 0.0, %v1457
    %1459 = vdwg.mxu0
    %v1460 = vadd.f32 %v1288, %v1458
    %v1461 = vld [vmem:[%s763] sm:$0xff]
    %v1462 = vld [vmem:[%s763 + $0x8] sm:$0xff]
    %v1463 = vld [vmem:[%s763 + $0x10] sm:$0xff]
    %v1464 = vld [vmem:[%s763 + $0x18] sm:$0xff]
    %v1465 = vld [vmem:[%s768] sm:$0x1]
    %v1467 = vperm.slane %v1465, 0
    %1469 = vmatpush.msra.mxu0 0.0
    %1470 = vmatpush.msra.mxu0 0.0
    %1471 = vmatpush.msra.mxu0 0.0
    %1472 = vmatpush.msra.mxu0 0.0
    %1473 = vmatpush.msra.mxu0 0.0
    %1474 = vmatpush.msra.mxu0 0.0
    %1475 = vmatpush.msra.mxu0 0.0
    %1476 = vmatpush.msra.mxu0 0.0
    %1477 = vmatpush.msra.mxu0 0.0
    %1478 = vmatpush.msra.mxu0 0.0
    %1479 = vmatpush.msra.mxu0 0.0
    %1480 = vmatpush.msra.mxu0 0.0
    %1481 = vmatpush.msra.mxu0 %v1464
    %1482 = vmatpush.msra.mxu0 %v1463
    %1483 = vmatpush.msra.mxu0 %v1462
    %1484 = vmatpush.msra.mxu0 %v1461
    %1485 = vmatmul.f32.gmra.mxu0 %v953
    %v1486 = vpop.f32.mrf.mxu0
    %v1487 = vadd.f32 %v1467, %v1486
    %1488 = vdwg.mxu0
    %v1489 = vld [vmem:[%s793] sm:$0xff]
    %v1490 = vld [vmem:[%s793 + $0x8] sm:$0xff]
    %v1491 = vld [vmem:[%s793 + $0x10] sm:$0xff]
    %v1492 = vld [vmem:[%s793 + $0x18] sm:$0xff]
    %v1493 = vld [vmem:[%s798] sm:$0x1]
    %v1495 = vperm.slane %v1493, 0
    %1497 = vmatpush.msra.mxu0 0.0
    %1498 = vmatpush.msra.mxu0 0.0
    %1499 = vmatpush.msra.mxu0 0.0
    %1500 = vmatpush.msra.mxu0 0.0
    %1501 = vmatpush.msra.mxu0 0.0
    %1502 = vmatpush.msra.mxu0 0.0
    %1503 = vmatpush.msra.mxu0 0.0
    %1504 = vmatpush.msra.mxu0 0.0
    %1505 = vmatpush.msra.mxu0 0.0
    %1506 = vmatpush.msra.mxu0 0.0
    %1507 = vmatpush.msra.mxu0 0.0
    %1508 = vmatpush.msra.mxu0 0.0
    %1509 = vmatpush.msra.mxu0 %v1492
    %1510 = vmatpush.msra.mxu0 %v1491
    %1511 = vmatpush.msra.mxu0 %v1490
    %1512 = vmatpush.msra.mxu0 %v1489
    %1513 = vmatmul.f32.gmra.mxu0 %v953
    %v1514 = vpop.f32.mrf.mxu0
    %v1515 = vadd.f32 %v1495, %v1514
    %1516 = vdwg.mxu0
    %v1517 = vld [vmem:[%s823] sm:$0xff]
    %v1518 = vld [vmem:[%s823 + $0x8] sm:$0xff]
    %v1519 = vld [vmem:[%s823 + $0x10] sm:$0xff]
    %v1520 = vld [vmem:[%s823 + $0x18] sm:$0xff]
    %v1521 = vld [vmem:[%s828] sm:$0x1]
    %v1523 = vperm.slane %v1521, 0
    %1525 = vmatpush.msra.mxu0 0.0
    %1526 = vmatpush.msra.mxu0 0.0
    %1527 = vmatpush.msra.mxu0 0.0
    %1528 = vmatpush.msra.mxu0 0.0
    %1529 = vmatpush.msra.mxu0 0.0
    %1530 = vmatpush.msra.mxu0 0.0
    %1531 = vmatpush.msra.mxu0 0.0
    %1532 = vmatpush.msra.mxu0 0.0
    %1533 = vmatpush.msra.mxu0 0.0
    %1534 = vmatpush.msra.mxu0 0.0
    %1535 = vmatpush.msra.mxu0 0.0
    %1536 = vmatpush.msra.mxu0 0.0
    %1537 = vmatpush.msra.mxu0 %v1520
    %1538 = vmatpush.msra.mxu0 %v1519
    %1539 = vmatpush.msra.mxu0 %v1518
    %1540 = vmatpush.msra.mxu0 %v1517
    %1541 = vmatmul.f32.gmra.mxu0 %v953
    %v1542 = vpop.f32.mrf.mxu0
    %v1543 = vadd.f32 %v1523, %v1542
    %1544 = vdwg.mxu0
    %v1546 = vsel %vm318, %v1487, 0
    %v1549 = vsel %vm318, %v1515, 0
    %1551 = vmatpush.xpose.msra.mxu0 0.0
    %1552 = vmatpush.xpose.msra.mxu0 0.0
    %1553 = vmatpush.xpose.msra.mxu0 0.0
    %1554 = vmatpush.xpose.msra.mxu0 0.0
    %1555 = vmatpush.xpose.msra.mxu0 0.0
    %1556 = vmatpush.xpose.msra.mxu0 0.0
    %1557 = vmatpush.xpose.msra.mxu0 0.0
    %1558 = vmatpush.xpose.msra.mxu0 0.0
    %1559 = vmatpush.xpose.msra.mxu0 0.0
    %1560 = vmatpush.xpose.msra.mxu0 0.0
    %1561 = vmatpush.xpose.msra.mxu0 0.0
    %1562 = vmatpush.xpose.msra.mxu0 0.0
    %1563 = vmatpush.xpose.msra.mxu0 0.0
    %1564 = vmatpush.xpose.msra.mxu0 0.0
    %1565 = vmatpush.xpose.msra.mxu0 0.0
    %1566 = vmatpush.xpose.msra.mxu0 %v1549
    %1567 = vmatmul.f32.gmra.mxu0 %v1546
    %v1568 = vpop.f32.mrf.mxu0
    %v1569 = vadd.f32 0.0, %v1568
    %1570 = vdwg.mxu0
    %v1571 = vmul.f32 %v1569, 0.35355338
    %v1572 = vadd.f32 %v1571, %v1059
    %v1573 = vsel %vm318, %v1572, -inf
    %1574 = vmax.xlane.f32.xlu0 %v1573
    %v1575 = vpop.xlane.xlu0 %1574
    %v1576 = vsub.f32 %v1572, %v1575
    %v1577 = vmul.f32 %v1576, 1.442695
    %v1578 = vpow.pop %v1577
    %v1579 = vsel %vm318, %v1578, 0.0
    %1580 = vadd.xlane.f32.xlu0 %v1579
    %v1581 = vpop.xlane.xlu0 %1580
    %v1582 = vrcp.pop %v1581
    %v1583 = vmul.f32 %v1578, %v1582
    %v1585 = vsel %vm318, %v1583, 0
    %1587 = vmatpush.msra.mxu0 0.0
    %1588 = vmatpush.msra.mxu0 0.0
    %1589 = vmatpush.msra.mxu0 0.0
    %1590 = vmatpush.msra.mxu0 0.0
    %1591 = vmatpush.msra.mxu0 0.0
    %1592 = vmatpush.msra.mxu0 0.0
    %1593 = vmatpush.msra.mxu0 0.0
    %1594 = vmatpush.msra.mxu0 0.0
    %1595 = vmatpush.msra.mxu0 0.0
    %1596 = vmatpush.msra.mxu0 0.0
    %1597 = vmatpush.msra.mxu0 0.0
    %1598 = vmatpush.msra.mxu0 0.0
    %1599 = vmatpush.msra.mxu0 0.0
    %1600 = vmatpush.msra.mxu0 0.0
    %1601 = vmatpush.msra.mxu0 0.0
    %1602 = vmatpush.msra.mxu0 %v1543
    %1603 = vmatmul.f32.gmra.mxu0 %v1585
    %v1604 = vpop.f32.mrf.mxu0
    %v1605 = vadd.f32 0.0, %v1604
    %1606 = vdwg.mxu0
    %v1607 = vld [vmem:[%s915] sm:$0xff]
    %v1609 = vsel %vm318, %v1605, 0
    %1611 = vmatpush.msra.mxu0 0.0
    %1612 = vmatpush.msra.mxu0 0.0
    %1613 = vmatpush.msra.mxu0 0.0
    %1614 = vmatpush.msra.mxu0 0.0
    %1615 = vmatpush.msra.mxu0 0.0
    %1616 = vmatpush.msra.mxu0 0.0
    %1617 = vmatpush.msra.mxu0 0.0
    %1618 = vmatpush.msra.mxu0 0.0
    %1619 = vmatpush.msra.mxu0 0.0
    %1620 = vmatpush.msra.mxu0 0.0
    %1621 = vmatpush.msra.mxu0 0.0
    %1622 = vmatpush.msra.mxu0 0.0
    %1623 = vmatpush.msra.mxu0 0.0
    %1624 = vmatpush.msra.mxu0 0.0
    %1625 = vmatpush.msra.mxu0 0.0
    %1626 = vmatpush.msra.mxu0 %v1607
    %1627 = vmatmul.f32.gmra.mxu0 %v1609
    %v1628 = vpop.f32.mrf.mxu0
    %v1629 = vadd.f32 0.0, %v1628
    %1630 = vdwg.mxu0
    %v1631 = vadd.f32 %v1460, %v1629
    %1632 = vst.msk [vmem:[#allocation2 + $0x8] sm:$0xff] %vm238, %v1631
    %v1633 = vld [vmem:[#allocation2] sm:$0xff]
    %v1634 = vld [vmem:[#allocation2 + $0x8] sm:$0xff]
    %v1635 = vld [vmem:[%s29] sm:$0x1]
    %v1637 = vperm.slane %v1635, 0
    %v1639 = vadd.f32 %v1633, %v1637
    %v1640 = vadd.f32 %v1634, %v1637
    %v1641 = vadd.f32 %v227, %v1639
    %v1642 = vadd.f32 %v228, %v1640
    %v1643 = vld [vmem:[%s31] sm:$0x1]
    %v1644 = vld [vmem:[%s33] sm:$0x1]
    %v1645 = vsel %vm238, %v1641, 0.0
    %1646 = vadd.xlane.f32.xlu0 %v1645
    %v1647 = vpop.xlane.xlu0 %1646
    %v1648 = vsel %vm238, %v1642, 0.0
    %1649 = vadd.xlane.f32.xlu0 %v1648
    %v1650 = vpop.xlane.xlu0 %1649
    %v1651 = vrcp.pop 32.0
    %v1652 = vmul.f32 32.0, %v1651
    %v1653 = vsub.f32 1.0, %v1652
    %v1654 = vmul.f32 %v1651, %v1653
    %v1655 = vadd.f32 %v1651, %v1654
    %vm1656 = vweird.f32 %v1651
    %v1657 = vsel %vm1656, %v1651, %v1655
    %v1658 = vmul.f32 %v1647, %v1657
    %v1659 = vmul.f32 %v1650, %v1657
    %v1660 = vsub.f32 %v1641, %v1658
    %v1661 = vsub.f32 %v1642, %v1659
    %v1662 = vmul.f32 %v1660, %v1660
    %v1663 = vmul.f32 %v1661, %v1661
    %v1664 = vsel %vm238, %v1662, 0.0
    %1665 = vadd.xlane.f32.xlu0 %v1664
    %v1666 = vpop.xlane.xlu0 %1665
    %v1667 = vsel %vm238, %v1663, 0.0
    %1668 = vadd.xlane.f32.xlu0 %v1667
    %v1669 = vpop.xlane.xlu0 %1668
    %v1670 = vmul.f32 %v1666, %v1657
    %v1671 = vmul.f32 %v1669, %v1657
    %v1672 = vadd.f32 %v1670, 1e-05
    %v1673 = vadd.f32 %v1671, 1e-05
    %v1674 = vrsqrt.pop %v1672
    %v1675 = vmul.f32 %v1674, %v1672
    %v1676 = vmul.f32 %v1675, %v1674
    %v1677 = vmul.f32 0.5, %v1676
    %v1678 = vsub.f32 1.5, %v1677
    %v1679 = vmul.f32 %v1674, %v1678
    %vm1680 = vweird.f32 %v1672
    %vm1681 = vweird.f32 %v1674
    %vm1682 = vmor %vm1680, %vm1681
    %v1683 = vsel %vm1682, %v1674, %v1679
    %v1684 = vrsqrt.pop %v1673
    %v1685 = vmul.f32 %v1684, %v1673
    %v1686 = vmul.f32 %v1685, %v1684
    %v1687 = vmul.f32 0.5, %v1686
    %v1688 = vsub.f32 1.5, %v1687
    %v1689 = vmul.f32 %v1684, %v1688
    %vm1690 = vweird.f32 %v1673
    %vm1691 = vweird.f32 %v1684
    %vm1692 = vmor %vm1690, %vm1691
    %v1693 = vsel %vm1692, %v1684, %v1689
    %v1694 = vmul.f32 %v1660, %v1683
    %v1695 = vmul.f32 %v1661, %v1693
    %v1697 = vperm.slane %v1643, 0
    %v1699 = vmul.f32 %v1694, %v1697
    %v1700 = vmul.f32 %v1695, %v1697
    %v1702 = vperm.slane %v1644, 0
    %v1704 = vadd.f32 %v1699, %v1702
    %v1705 = vadd.f32 %v1700, %v1702
    %v1706 = vld [vmem:[%s35] sm:$0xff]
    %v1707 = vld [vmem:[%s35 + $0x8] sm:$0xff]
    %v1708 = vld [vmem:[%s35 + $0x10] sm:$0xff]
    %v1709 = vld [vmem:[%s35 + $0x18] sm:$0xff]
    %v1710 = vld [vmem:[%s37] sm:$0x1]
    %v1712 = vperm.slane %v1710, 0
    %v1715 = vsel %vm238, %v1704, 0
    %v1718 = vsel %vm238, %v1705, 0
    %1720 = vmatpush.msra.mxu0 0.0
    %1721 = vmatpush.msra.mxu0 0.0
    %1722 = vmatpush.msra.mxu0 0.0
    %1723 = vmatpush.msra.mxu0 0.0
    %1724 = vmatpush.msra.mxu0 0.0
    %1725 = vmatpush.msra.mxu0 0.0
    %1726 = vmatpush.msra.mxu0 0.0
    %1727 = vmatpush.msra.mxu0 0.0
    %1728 = vmatpush.msra.mxu0 0.0
    %1729 = vmatpush.msra.mxu0 0.0
    %1730 = vmatpush.msra.mxu0 0.0
    %1731 = vmatpush.msra.mxu0 0.0
    %1732 = vmatpush.msra.mxu0 %v1709
    %1733 = vmatpush.msra.mxu0 %v1708
    %1734 = vmatpush.msra.mxu0 %v1707
    %1735 = vmatpush.msra.mxu0 %v1706
    %1736 = vmatmul.f32.gmra.mxu0 %v1715
    %v1737 = vpop.f32.mrf.mxu0
    %v1738 = vadd.f32 %v1712, %v1737
    %1739 = vmatmul.f32.gmra.mxu0 %v1718
    %v1740 = vpop.f32.mrf.mxu0
    %v1741 = vadd.f32 %v1712, %v1740
    %1742 = vdwg.mxu0
    %v1743 = vmax.f32 %v1738, 0.0
    %v1744 = vmax.f32 %v1741, 0.0
    %v1745 = vld [vmem:[%s39] sm:$0xff]
    %v1746 = vld [vmem:[%s39 + $0x8] sm:$0xff]
    %v1747 = vld [vmem:[%s39 + $0x10] sm:$0xff]
    %v1748 = vld [vmem:[%s39 + $0x18] sm:$0xff]
    %v1749 = vld [vmem:[%s39 + $0x20] sm:$0xff]
    %v1750 = vld [vmem:[%s39 + $0x28] sm:$0xff]
    %v1751 = vld [vmem:[%s39 + $0x30] sm:$0xff]
    %v1752 = vld [vmem:[%s39 + $0x38] sm:$0xff]
    %v1753 = vld [vmem:[%s41] sm:$0x1]
    %v1755 = vperm.slane %v1753, 0
    %vm1757 = vcmask 523264
    %v1759 = vsel %vm1757, %v1743, 0
    %v1762 = vsel %vm1757, %v1744, 0
    %1764 = vmatpush.msra.mxu0 0.0
    %1765 = vmatpush.msra.mxu0 0.0
    %1766 = vmatpush.msra.mxu0 0.0
    %1767 = vmatpush.msra.mxu0 0.0
    %1768 = vmatpush.msra.mxu0 0.0
    %1769 = vmatpush.msra.mxu0 0.0
    %1770 = vmatpush.msra.mxu0 0.0
    %1771 = vmatpush.msra.mxu0 0.0
    %1772 = vmatpush.msra.mxu0 %v1752
    %1773 = vmatpush.msra.mxu0 %v1751
    %1774 = vmatpush.msra.mxu0 %v1750
    %1775 = vmatpush.msra.mxu0 %v1749
    %1776 = vmatpush.msra.mxu0 %v1748
    %1777 = vmatpush.msra.mxu0 %v1747
    %1778 = vmatpush.msra.mxu0 %v1746
    %1779 = vmatpush.msra.mxu0 %v1745
    %1780 = vmatmul.f32.gmra.mxu0 %v1759
    %v1781 = vpop.f32.mrf.mxu0
    %v1782 = vadd.f32 %v1755, %v1781
    %1783 = vmatmul.f32.gmra.mxu0 %v1762
    %v1784 = vpop.f32.mrf.mxu0
    %v1785 = vadd.f32 %v1755, %v1784
    %1786 = vdwg.mxu0
    %v1787 = vadd.f32 %v1704, %v1782
    %v1788 = vadd.f32 %v1705, %v1785
    %v1789 = vld [vmem:[%s43] sm:$0x1]
    %v1790 = vld [vmem:[%s45] sm:$0x1]
    %v1791 = vsel %vm238, %v1787, 0.0
    %1792 = vadd.xlane.f32.xlu0 %v1791
    %v1793 = vpop.xlane.xlu0 %1792
    %v1794 = vsel %vm238, %v1788, 0.0
    %1795 = vadd.xlane.f32.xlu0 %v1794
    %v1796 = vpop.xlane.xlu0 %1795
    %v1797 = vmul.f32 %v1793, %v1657
    %v1798 = vmul.f32 %v1796, %v1657
    %v1799 = vsub.f32 %v1787, %v1797
    %v1800 = vsub.f32 %v1788, %v1798
    %v1801 = vmul.f32 %v1799, %v1799
    %v1802 = vmul.f32 %v1800, %v1800
    %v1803 = vsel %vm238, %v1801, 0.0
    %1804 = vadd.xlane.f32.xlu0 %v1803
    %v1805 = vpop.xlane.xlu0 %1804
    %v1806 = vsel %vm238, %v1802, 0.0
    %1807 = vadd.xlane.f32.xlu0 %v1806
    %v1808 = vpop.xlane.xlu0 %1807
    %v1809 = vmul.f32 %v1805, %v1657
    %v1810 = vmul.f32 %v1808, %v1657
    %v1811 = vadd.f32 %v1809, 1e-05
    %v1812 = vadd.f32 %v1810, 1e-05
    %v1813 = vrsqrt.pop %v1811
    %v1814 = vmul.f32 %v1813, %v1811
    %v1815 = vmul.f32 %v1814, %v1813
    %v1816 = vmul.f32 0.5, %v1815
    %v1817 = vsub.f32 1.5, %v1816
    %v1818 = vmul.f32 %v1813, %v1817
    %vm1819 = vweird.f32 %v1811
    %vm1820 = vweird.f32 %v1813
    %vm1821 = vmor %vm1819, %vm1820
    %v1822 = vsel %vm1821, %v1813, %v1818
    %v1823 = vrsqrt.pop %v1812
    %v1824 = vmul.f32 %v1823, %v1812
    %v1825 = vmul.f32 %v1824, %v1823
    %v1826 = vmul.f32 0.5, %v1825
    %v1827 = vsub.f32 1.5, %v1826
    %v1828 = vmul.f32 %v1823, %v1827
    %vm1829 = vweird.f32 %v1812
    %vm1830 = vweird.f32 %v1823
    %vm1831 = vmor %vm1829, %vm1830
    %v1832 = vsel %vm1831, %v1823, %v1828
    %v1833 = vmul.f32 %v1799, %v1822
    %v1834 = vmul.f32 %v1800, %v1832
    %v1836 = vperm.slane %v1789, 0
    %v1838 = vmul.f32 %v1833, %v1836
    %v1839 = vmul.f32 %v1834, %v1836
    %v1841 = vperm.slane %v1790, 0
    %v1843 = vadd.f32 %v1838, %v1841
    %v1844 = vadd.f32 %v1839, %v1841
    %v1845 = vld [vmem:[%s7] sm:$0x1]
    %s1846 = scalar_lea.vmem %s15, 128
    %v1847 = vld [vmem:[%s1846] sm:$0xff]
    %v1848 = vld [vmem:[%s1846 + $0x8] sm:$0xff]
    %v1849 = vld [vmem:[%s1846 + $0x10] sm:$0xff]
    %v1850 = vld [vmem:[%s1846 + $0x18] sm:$0xff]
    %s1851 = scalar_lea.vmem %s21, 4
    %v1852 = vld [vmem:[%s1851] sm:$0x1]
    %v1854 = vperm.slane %v1852, 0
    %v1857 = vsel %vm238, %v1843, 0
    %1859 = vmatpush.msra.mxu0 0.0
    %1860 = vmatpush.msra.mxu0 0.0
    %1861 = vmatpush.msra.mxu0 0.0
    %1862 = vmatpush.msra.mxu0 0.0
    %1863 = vmatpush.msra.mxu0 0.0
    %1864 = vmatpush.msra.mxu0 0.0
    %1865 = vmatpush.msra.mxu0 0.0
    %1866 = vmatpush.msra.mxu0 0.0
    %1867 = vmatpush.msra.mxu0 0.0
    %1868 = vmatpush.msra.mxu0 0.0
    %1869 = vmatpush.msra.mxu0 0.0
    %1870 = vmatpush.msra.mxu0 0.0
    %1871 = vmatpush.msra.mxu0 %v1850
    %1872 = vmatpush.msra.mxu0 %v1849
    %1873 = vmatpush.msra.mxu0 %v1848
    %1874 = vmatpush.msra.mxu0 %v1847
    %1875 = vmatmul.f32.gmra.mxu0 %v1857
    %v1876 = vpop.f32.mrf.mxu0
    %v1877 = vadd.f32 %v1854, %v1876
    %1878 = vdwg.mxu0
    %s1879 = scalar_lea.vmem %s17, 128
    %v1880 = vld [vmem:[%s1879] sm:$0xff]
    %v1881 = vld [vmem:[%s1879 + $0x8] sm:$0xff]
    %v1882 = vld [vmem:[%s1879 + $0x10] sm:$0xff]
    %v1883 = vld [vmem:[%s1879 + $0x18] sm:$0xff]
    %s1884 = scalar_lea.vmem %s23, 4
    %v1885 = vld [vmem:[%s1884] sm:$0x1]
    %v1887 = vperm.slane %v1885, 0
    %1889 = vmatpush.msra.mxu0 0.0
    %1890 = vmatpush.msra.mxu0 0.0
    %1891 = vmatpush.msra.mxu0 0.0
    %1892 = vmatpush.msra.mxu0 0.0
    %1893 = vmatpush.msra.mxu0 0.0
    %1894 = vmatpush.msra.mxu0 0.0
    %1895 = vmatpush.msra.mxu0 0.0
    %1896 = vmatpush.msra.mxu0 0.0
    %1897 = vmatpush.msra.mxu0 0.0
    %1898 = vmatpush.msra.mxu0 0.0
    %1899 = vmatpush.msra.mxu0 0.0
    %1900 = vmatpush.msra.mxu0 0.0
    %1901 = vmatpush.msra.mxu0 %v1883
    %1902 = vmatpush.msra.mxu0 %v1882
    %1903 = vmatpush.msra.mxu0 %v1881
    %1904 = vmatpush.msra.mxu0 %v1880
    %1905 = vmatmul.f32.gmra.mxu0 %v1857
    %v1906 = vpop.f32.mrf.mxu0
    %v1907 = vadd.f32 %v1887, %v1906
    %1908 = vdwg.mxu0
    %s1909 = scalar_lea.vmem %s19, 128
    %v1910 = vld [vmem:[%s1909] sm:$0xff]
    %v1911 = vld [vmem:[%s1909 + $0x8] sm:$0xff]
    %v1912 = vld [vmem:[%s1909 + $0x10] sm:$0xff]
    %v1913 = vld [vmem:[%s1909 + $0x18] sm:$0xff]
    %s1914 = scalar_lea.vmem %s25, 4
    %v1915 = vld [vmem:[%s1914] sm:$0x1]
    %v1917 = vperm.slane %v1915, 0
    %1919 = vmatpush.msra.mxu0 0.0
    %1920 = vmatpush.msra.mxu0 0.0
    %1921 = vmatpush.msra.mxu0 0.0
    %1922 = vmatpush.msra.mxu0 0.0
    %1923 = vmatpush.msra.mxu0 0.0
    %1924 = vmatpush.msra.mxu0 0.0
    %1925 = vmatpush.msra.mxu0 0.0
    %1926 = vmatpush.msra.mxu0 0.0
    %1927 = vmatpush.msra.mxu0 0.0
    %1928 = vmatpush.msra.mxu0 0.0
    %1929 = vmatpush.msra.mxu0 0.0
    %1930 = vmatpush.msra.mxu0 0.0
    %1931 = vmatpush.msra.mxu0 %v1913
    %1932 = vmatpush.msra.mxu0 %v1912
    %1933 = vmatpush.msra.mxu0 %v1911
    %1934 = vmatpush.msra.mxu0 %v1910
    %1935 = vmatmul.f32.gmra.mxu0 %v1857
    %v1936 = vpop.f32.mrf.mxu0
    %v1937 = vadd.f32 %v1917, %v1936
    %1938 = vdwg.mxu0
    %v1940 = vsel %vm318, %v1877, 0
    %v1943 = vsel %vm318, %v1907, 0
    %1945 = vmatpush.xpose.msra.mxu0 0.0
    %1946 = vmatpush.xpose.msra.mxu0 0.0
    %1947 = vmatpush.xpose.msra.mxu0 0.0
    %1948 = vmatpush.xpose.msra.mxu0 0.0
    %1949 = vmatpush.xpose.msra.mxu0 0.0
    %1950 = vmatpush.xpose.msra.mxu0 0.0
    %1951 = vmatpush.xpose.msra.mxu0 0.0
    %1952 = vmatpush.xpose.msra.mxu0 0.0
    %1953 = vmatpush.xpose.msra.mxu0 0.0
    %1954 = vmatpush.xpose.msra.mxu0 0.0
    %1955 = vmatpush.xpose.msra.mxu0 0.0
    %1956 = vmatpush.xpose.msra.mxu0 0.0
    %1957 = vmatpush.xpose.msra.mxu0 0.0
    %1958 = vmatpush.xpose.msra.mxu0 0.0
    %1959 = vmatpush.xpose.msra.mxu0 0.0
    %1960 = vmatpush.xpose.msra.mxu0 %v1943
    %1961 = vmatmul.f32.gmra.mxu0 %v1940
    %v1962 = vpop.f32.mrf.mxu0
    %v1963 = vadd.f32 0.0, %v1962
    %1964 = vdwg.mxu0
    %v1965 = vmul.f32 %v1963, 0.35355338
    %v1967 = vperm.slane %v1845, 0
    %v1969 = vadd.f32 %v1965, %v1967
    %v1970 = vsel %vm318, %v1969, -inf
    %1971 = vmax.xlane.f32.xlu0 %v1970
    %v1972 = vpop.xlane.xlu0 %1971
    %v1973 = vsub.f32 %v1969, %v1972
    %v1974 = vmul.f32 %v1973, 1.442695
    %v1975 = vpow.pop %v1974
    %v1976 = vsel %vm318, %v1975, 0.0
    %1977 = vadd.xlane.f32.xlu0 %v1976
    %v1978 = vpop.xlane.xlu0 %1977
    %v1979 = vrcp.pop %v1978
    %v1980 = vmul.f32 %v1975, %v1979
    %v1982 = vsel %vm318, %v1980, 0
    %1984 = vmatpush.msra.mxu0 0.0
    %1985 = vmatpush.msra.mxu0 0.0
    %1986 = vmatpush.msra.mxu0 0.0
    %1987 = vmatpush.msra.mxu0 0.0
    %1988 = vmatpush.msra.mxu0 0.0
    %1989 = vmatpush.msra.mxu0 0.0
    %1990 = vmatpush.msra.mxu0 0.0
    %1991 = vmatpush.msra.mxu0 0.0
    %1992 = vmatpush.msra.mxu0 0.0
    %1993 = vmatpush.msra.mxu0 0.0
    %1994 = vmatpush.msra.mxu0 0.0
    %1995 = vmatpush.msra.mxu0 0.0
    %1996 = vmatpush.msra.mxu0 0.0
    %1997 = vmatpush.msra.mxu0 0.0
    %1998 = vmatpush.msra.mxu0 0.0
    %1999 = vmatpush.msra.mxu0 %v1937
    %2000 = vmatmul.f32.gmra.mxu0 %v1982
    %v2001 = vpop.f32.mrf.mxu0
    %v2002 = vadd.f32 0.0, %v2001
    %2003 = vdwg.mxu0
    %s2004 = scalar_lea.vmem %s27, 32
    %v2005 = vld [vmem:[%s2004] sm:$0xff]
    %s2006 = scalar_lea.vmem %s15, 160
    %v2007 = vld [vmem:[%s2006] sm:$0xff]
    %v2008 = vld [vmem:[%s2006 + $0x8] sm:$0xff]
    %v2009 = vld [vmem:[%s2006 + $0x10] sm:$0xff]
    %v2010 = vld [vmem:[%s2006 + $0x18] sm:$0xff]
    %s2011 = scalar_lea.vmem %s21, 5
    %v2012 = vld [vmem:[%s2011] sm:$0x1]
    %v2014 = vperm.slane %v2012, 0
    %2016 = vmatpush.msra.mxu0 0.0
    %2017 = vmatpush.msra.mxu0 0.0
    %2018 = vmatpush.msra.mxu0 0.0
    %2019 = vmatpush.msra.mxu0 0.0
    %2020 = vmatpush.msra.mxu0 0.0
    %2021 = vmatpush.msra.mxu0 0.0
    %2022 = vmatpush.msra.mxu0 0.0
    %2023 = vmatpush.msra.mxu0 0.0
    %2024 = vmatpush.msra.mxu0 0.0
    %2025 = vmatpush.msra.mxu0 0.0
    %2026 = vmatpush.msra.mxu0 0.0
    %2027 = vmatpush.msra.mxu0 0.0
    %2028 = vmatpush.msra.mxu0 %v2010
    %2029 = vmatpush.msra.mxu0 %v2009
    %2030 = vmatpush.msra.mxu0 %v2008
    %2031 = vmatpush.msra.mxu0 %v2007
    %2032 = vmatmul.f32.gmra.mxu0 %v1857
    %v2033 = vpop.f32.mrf.mxu0
    %v2034 = vadd.f32 %v2014, %v2033
    %2035 = vdwg.mxu0
    %s2036 = scalar_lea.vmem %s17, 160
    %v2037 = vld [vmem:[%s2036] sm:$0xff]
    %v2038 = vld [vmem:[%s2036 + $0x8] sm:$0xff]
    %v2039 = vld [vmem:[%s2036 + $0x10] sm:$0xff]
    %v2040 = vld [vmem:[%s2036 + $0x18] sm:$0xff]
    %s2041 = scalar_lea.vmem %s23, 5
    %v2042 = vld [vmem:[%s2041] sm:$0x1]
    %v2044 = vperm.slane %v2042, 0
    %2046 = vmatpush.msra.mxu0 0.0
    %2047 = vmatpush.msra.mxu0 0.0
    %2048 = vmatpush.msra.mxu0 0.0
    %2049 = vmatpush.msra.mxu0 0.0
    %2050 = vmatpush.msra.mxu0 0.0
    %2051 = vmatpush.msra.mxu0 0.0
    %2052 = vmatpush.msra.mxu0 0.0
    %2053 = vmatpush.msra.mxu0 0.0
    %2054 = vmatpush.msra.mxu0 0.0
    %2055 = vmatpush.msra.mxu0 0.0
    %2056 = vmatpush.msra.mxu0 0.0
    %2057 = vmatpush.msra.mxu0 0.0
    %2058 = vmatpush.msra.mxu0 %v2040
    %2059 = vmatpush.msra.mxu0 %v2039
    %2060 = vmatpush.msra.mxu0 %v2038
    %2061 = vmatpush.msra.mxu0 %v2037
    %2062 = vmatmul.f32.gmra.mxu0 %v1857
    %v2063 = vpop.f32.mrf.mxu0
    %v2064 = vadd.f32 %v2044, %v2063
    %2065 = vdwg.mxu0
    %s2066 = scalar_lea.vmem %s19, 160
    %v2067 = vld [vmem:[%s2066] sm:$0xff]
    %v2068 = vld [vmem:[%s2066 + $0x8] sm:$0xff]
    %v2069 = vld [vmem:[%s2066 + $0x10] sm:$0xff]
    %v2070 = vld [vmem:[%s2066 + $0x18] sm:$0xff]
    %s2071 = scalar_lea.vmem %s25, 5
    %v2072 = vld [vmem:[%s2071] sm:$0x1]
    %v2074 = vperm.slane %v2072, 0
    %2076 = vmatpush.msra.mxu0 0.0
    %2077 = vmatpush.msra.mxu0 0.0
    %2078 = vmatpush.msra.mxu0 0.0
    %2079 = vmatpush.msra.mxu0 0.0
    %2080 = vmatpush.msra.mxu0 0.0
    %2081 = vmatpush.msra.mxu0 0.0
    %2082 = vmatpush.msra.mxu0 0.0
    %2083 = vmatpush.msra.mxu0 0.0
    %2084 = vmatpush.msra.mxu0 0.0
    %2085 = vmatpush.msra.mxu0 0.0
    %2086 = vmatpush.msra.mxu0 0.0
    %2087 = vmatpush.msra.mxu0 0.0
    %2088 = vmatpush.msra.mxu0 %v2070
    %2089 = vmatpush.msra.mxu0 %v2069
    %2090 = vmatpush.msra.mxu0 %v2068
    %2091 = vmatpush.msra.mxu0 %v2067
    %2092 = vmatmul.f32.gmra.mxu0 %v1857
    %v2093 = vpop.f32.mrf.mxu0
    %v2094 = vadd.f32 %v2074, %v2093
    %2095 = vdwg.mxu0
    %v2097 = vsel %vm318, %v2034, 0
    %v2100 = vsel %vm318, %v2064, 0
    %2102 = vmatpush.xpose.msra.mxu0 0.0
    %2103 = vmatpush.xpose.msra.mxu0 0.0
    %2104 = vmatpush.xpose.msra.mxu0 0.0
    %2105 = vmatpush.xpose.msra.mxu0 0.0
    %2106 = vmatpush.xpose.msra.mxu0 0.0
    %2107 = vmatpush.xpose.msra.mxu0 0.0
    %2108 = vmatpush.xpose.msra.mxu0 0.0
    %2109 = vmatpush.xpose.msra.mxu0 0.0
    %2110 = vmatpush.xpose.msra.mxu0 0.0
    %2111 = vmatpush.xpose.msra.mxu0 0.0
    %2112 = vmatpush.xpose.msra.mxu0 0.0
    %2113 = vmatpush.xpose.msra.mxu0 0.0
    %2114 = vmatpush.xpose.msra.mxu0 0.0
    %2115 = vmatpush.xpose.msra.mxu0 0.0
    %2116 = vmatpush.xpose.msra.mxu0 0.0
    %2117 = vmatpush.xpose.msra.mxu0 %v2100
    %2118 = vmatmul.f32.gmra.mxu0 %v2097
    %v2119 = vpop.f32.mrf.mxu0
    %v2120 = vadd.f32 0.0, %v2119
    %2121 = vdwg.mxu0
    %v2122 = vmul.f32 %v2120, 0.35355338
    %v2123 = vadd.f32 %v2122, %v1967
    %v2124 = vsel %vm318, %v2123, -inf
    %2125 = vmax.xlane.f32.xlu0 %v2124
    %v2126 = vpop.xlane.xlu0 %2125
    %v2127 = vsub.f32 %v2123, %v2126
    %v2128 = vmul.f32 %v2127, 1.442695
    %v2129 = vpow.pop %v2128
    %v2130 = vsel %vm318, %v2129, 0.0
    %2131 = vadd.xlane.f32.xlu0 %v2130
    %v2132 = vpop.xlane.xlu0 %2131
    %v2133 = vrcp.pop %v2132
    %v2134 = vmul.f32 %v2129, %v2133
    %v2136 = vsel %vm318, %v2134, 0
    %2138 = vmatpush.msra.mxu0 0.0
    %2139 = vmatpush.msra.mxu0 0.0
    %2140 = vmatpush.msra.mxu0 0.0
    %2141 = vmatpush.msra.mxu0 0.0
    %2142 = vmatpush.msra.mxu0 0.0
    %2143 = vmatpush.msra.mxu0 0.0
    %2144 = vmatpush.msra.mxu0 0.0
    %2145 = vmatpush.msra.mxu0 0.0
    %2146 = vmatpush.msra.mxu0 0.0
    %2147 = vmatpush.msra.mxu0 0.0
    %2148 = vmatpush.msra.mxu0 0.0
    %2149 = vmatpush.msra.mxu0 0.0
    %2150 = vmatpush.msra.mxu0 0.0
    %2151 = vmatpush.msra.mxu0 0.0
    %2152 = vmatpush.msra.mxu0 0.0
    %2153 = vmatpush.msra.mxu0 %v2094
    %2154 = vmatmul.f32.gmra.mxu0 %v2136
    %v2155 = vpop.f32.mrf.mxu0
    %v2156 = vadd.f32 0.0, %v2155
    %2157 = vdwg.mxu0
    %s2158 = scalar_lea.vmem %s27, 40
    %v2159 = vld [vmem:[%s2158] sm:$0xff]
    %v2161 = vsel %vm318, %v2156, 0
    %2163 = vmatpush.msra.mxu0 0.0
    %2164 = vmatpush.msra.mxu0 0.0
    %2165 = vmatpush.msra.mxu0 0.0
    %2166 = vmatpush.msra.mxu0 0.0
    %2167 = vmatpush.msra.mxu0 0.0
    %2168 = vmatpush.msra.mxu0 0.0
    %2169 = vmatpush.msra.mxu0 0.0
    %2170 = vmatpush.msra.mxu0 0.0
    %2171 = vmatpush.msra.mxu0 0.0
    %2172 = vmatpush.msra.mxu0 0.0
    %2173 = vmatpush.msra.mxu0 0.0
    %2174 = vmatpush.msra.mxu0 0.0
    %2175 = vmatpush.msra.mxu0 0.0
    %2176 = vmatpush.msra.mxu0 0.0
    %2177 = vmatpush.msra.mxu0 0.0
    %2178 = vmatpush.msra.mxu0 %v2159
    %2179 = vmatmul.f32.gmra.mxu0 %v2161
    %v2180 = vpop.f32.mrf.mxu0
    %v2181 = vadd.f32 0.0, %v2180
    %2182 = vdwg.mxu0
    %v2184 = vsel %vm318, %v2002, 0
    %2186 = vmatpush.msra.mxu0 0.0
    %2187 = vmatpush.msra.mxu0 0.0
    %2188 = vmatpush.msra.mxu0 0.0
    %2189 = vmatpush.msra.mxu0 0.0
    %2190 = vmatpush.msra.mxu0 0.0
    %2191 = vmatpush.msra.mxu0 0.0
    %2192 = vmatpush.msra.mxu0 0.0
    %2193 = vmatpush.msra.mxu0 0.0
    %2194 = vmatpush.msra.mxu0 0.0
    %2195 = vmatpush.msra.mxu0 0.0
    %2196 = vmatpush.msra.mxu0 0.0
    %2197 = vmatpush.msra.mxu0 0.0
    %2198 = vmatpush.msra.mxu0 0.0
    %2199 = vmatpush.msra.mxu0 0.0
    %2200 = vmatpush.msra.mxu0 0.0
    %2201 = vmatpush.msra.mxu0 %v2005
    %2202 = vmatmul.f32.gmra.mxu0 %v2184
    %v2203 = vpop.f32.mrf.mxu0
    %v2204 = vadd.f32 %v2181, %v2203
    %2205 = vdwg.mxu0
    %s2206 = scalar_lea.vmem %s15, 192
    %v2207 = vld [vmem:[%s2206] sm:$0xff]
    %v2208 = vld [vmem:[%s2206 + $0x8] sm:$0xff]
    %v2209 = vld [vmem:[%s2206 + $0x10] sm:$0xff]
    %v2210 = vld [vmem:[%s2206 + $0x18] sm:$0xff]
    %s2211 = scalar_lea.vmem %s21, 6
    %v2212 = vld [vmem:[%s2211] sm:$0x1]
    %v2214 = vperm.slane %v2212, 0
    %2216 = vmatpush.msra.mxu0 0.0
    %2217 = vmatpush.msra.mxu0 0.0
    %2218 = vmatpush.msra.mxu0 0.0
    %2219 = vmatpush.msra.mxu0 0.0
    %2220 = vmatpush.msra.mxu0 0.0
    %2221 = vmatpush.msra.mxu0 0.0
    %2222 = vmatpush.msra.mxu0 0.0
    %2223 = vmatpush.msra.mxu0 0.0
    %2224 = vmatpush.msra.mxu0 0.0
    %2225 = vmatpush.msra.mxu0 0.0
    %2226 = vmatpush.msra.mxu0 0.0
    %2227 = vmatpush.msra.mxu0 0.0
    %2228 = vmatpush.msra.mxu0 %v2210
    %2229 = vmatpush.msra.mxu0 %v2209
    %2230 = vmatpush.msra.mxu0 %v2208
    %2231 = vmatpush.msra.mxu0 %v2207
    %2232 = vmatmul.f32.gmra.mxu0 %v1857
    %v2233 = vpop.f32.mrf.mxu0
    %v2234 = vadd.f32 %v2214, %v2233
    %2235 = vdwg.mxu0
    %s2236 = scalar_lea.vmem %s17, 192
    %v2237 = vld [vmem:[%s2236] sm:$0xff]
    %v2238 = vld [vmem:[%s2236 + $0x8] sm:$0xff]
    %v2239 = vld [vmem:[%s2236 + $0x10] sm:$0xff]
    %v2240 = vld [vmem:[%s2236 + $0x18] sm:$0xff]
    %s2241 = scalar_lea.vmem %s23, 6
    %v2242 = vld [vmem:[%s2241] sm:$0x1]
    %v2244 = vperm.slane %v2242, 0
    %2246 = vmatpush.msra.mxu0 0.0
    %2247 = vmatpush.msra.mxu0 0.0
    %2248 = vmatpush.msra.mxu0 0.0
    %2249 = vmatpush.msra.mxu0 0.0
    %2250 = vmatpush.msra.mxu0 0.0
    %2251 = vmatpush.msra.mxu0 0.0
    %2252 = vmatpush.msra.mxu0 0.0
    %2253 = vmatpush.msra.mxu0 0.0
    %2254 = vmatpush.msra.mxu0 0.0
    %2255 = vmatpush.msra.mxu0 0.0
    %2256 = vmatpush.msra.mxu0 0.0
    %2257 = vmatpush.msra.mxu0 0.0
    %2258 = vmatpush.msra.mxu0 %v2240
    %2259 = vmatpush.msra.mxu0 %v2239
    %2260 = vmatpush.msra.mxu0 %v2238
    %2261 = vmatpush.msra.mxu0 %v2237
    %2262 = vmatmul.f32.gmra.mxu0 %v1857
    %v2263 = vpop.f32.mrf.mxu0
    %v2264 = vadd.f32 %v2244, %v2263
    %2265 = vdwg.mxu0
    %s2266 = scalar_lea.vmem %s19, 192
    %v2267 = vld [vmem:[%s2266] sm:$0xff]
    %v2268 = vld [vmem:[%s2266 + $0x8] sm:$0xff]
    %v2269 = vld [vmem:[%s2266 + $0x10] sm:$0xff]
    %v2270 = vld [vmem:[%s2266 + $0x18] sm:$0xff]
    %s2271 = scalar_lea.vmem %s25, 6
    %v2272 = vld [vmem:[%s2271] sm:$0x1]
    %v2274 = vperm.slane %v2272, 0
    %2276 = vmatpush.msra.mxu0 0.0
    %2277 = vmatpush.msra.mxu0 0.0
    %2278 = vmatpush.msra.mxu0 0.0
    %2279 = vmatpush.msra.mxu0 0.0
    %2280 = vmatpush.msra.mxu0 0.0
    %2281 = vmatpush.msra.mxu0 0.0
    %2282 = vmatpush.msra.mxu0 0.0
    %2283 = vmatpush.msra.mxu0 0.0
    %2284 = vmatpush.msra.mxu0 0.0
    %2285 = vmatpush.msra.mxu0 0.0
    %2286 = vmatpush.msra.mxu0 0.0
    %2287 = vmatpush.msra.mxu0 0.0
    %2288 = vmatpush.msra.mxu0 %v2270
    %2289 = vmatpush.msra.mxu0 %v2269
    %2290 = vmatpush.msra.mxu0 %v2268
    %2291 = vmatpush.msra.mxu0 %v2267
    %2292 = vmatmul.f32.gmra.mxu0 %v1857
    %v2293 = vpop.f32.mrf.mxu0
    %v2294 = vadd.f32 %v2274, %v2293
    %2295 = vdwg.mxu0
    %v2297 = vsel %vm318, %v2234, 0
    %v2300 = vsel %vm318, %v2264, 0
    %2302 = vmatpush.xpose.msra.mxu0 0.0
    %2303 = vmatpush.xpose.msra.mxu0 0.0
    %2304 = vmatpush.xpose.msra.mxu0 0.0
    %2305 = vmatpush.xpose.msra.mxu0 0.0
    %2306 = vmatpush.xpose.msra.mxu0 0.0
    %2307 = vmatpush.xpose.msra.mxu0 0.0
    %2308 = vmatpush.xpose.msra.mxu0 0.0
    %2309 = vmatpush.xpose.msra.mxu0 0.0
    %2310 = vmatpush.xpose.msra.mxu0 0.0
    %2311 = vmatpush.xpose.msra.mxu0 0.0
    %2312 = vmatpush.xpose.msra.mxu0 0.0
    %2313 = vmatpush.xpose.msra.mxu0 0.0
    %2314 = vmatpush.xpose.msra.mxu0 0.0
    %2315 = vmatpush.xpose.msra.mxu0 0.0
    %2316 = vmatpush.xpose.msra.mxu0 0.0
    %2317 = vmatpush.xpose.msra.mxu0 %v2300
    %2318 = vmatmul.f32.gmra.mxu0 %v2297
    %v2319 = vpop.f32.mrf.mxu0
    %v2320 = vadd.f32 0.0, %v2319
    %2321 = vdwg.mxu0
    %v2322 = vmul.f32 %v2320, 0.35355338
    %v2323 = vadd.f32 %v2322, %v1967
    %v2324 = vsel %vm318, %v2323, -inf
    %2325 = vmax.xlane.f32.xlu0 %v2324
    %v2326 = vpop.xlane.xlu0 %2325
    %v2327 = vsub.f32 %v2323, %v2326
    %v2328 = vmul.f32 %v2327, 1.442695
    %v2329 = vpow.pop %v2328
    %v2330 = vsel %vm318, %v2329, 0.0
    %2331 = vadd.xlane.f32.xlu0 %v2330
    %v2332 = vpop.xlane.xlu0 %2331
    %v2333 = vrcp.pop %v2332
    %v2334 = vmul.f32 %v2329, %v2333
    %v2336 = vsel %vm318, %v2334, 0
    %2338 = vmatpush.msra.mxu0 0.0
    %2339 = vmatpush.msra.mxu0 0.0
    %2340 = vmatpush.msra.mxu0 0.0
    %2341 = vmatpush.msra.mxu0 0.0
    %2342 = vmatpush.msra.mxu0 0.0
    %2343 = vmatpush.msra.mxu0 0.0
    %2344 = vmatpush.msra.mxu0 0.0
    %2345 = vmatpush.msra.mxu0 0.0
    %2346 = vmatpush.msra.mxu0 0.0
    %2347 = vmatpush.msra.mxu0 0.0
    %2348 = vmatpush.msra.mxu0 0.0
    %2349 = vmatpush.msra.mxu0 0.0
    %2350 = vmatpush.msra.mxu0 0.0
    %2351 = vmatpush.msra.mxu0 0.0
    %2352 = vmatpush.msra.mxu0 0.0
    %2353 = vmatpush.msra.mxu0 %v2294
    %2354 = vmatmul.f32.gmra.mxu0 %v2336
    %v2355 = vpop.f32.mrf.mxu0
    %v2356 = vadd.f32 0.0, %v2355
    %2357 = vdwg.mxu0
    %s2358 = scalar_lea.vmem %s27, 48
    %v2359 = vld [vmem:[%s2358] sm:$0xff]
    %v2361 = vsel %vm318, %v2356, 0
    %2363 = vmatpush.msra.mxu0 0.0
    %2364 = vmatpush.msra.mxu0 0.0
    %2365 = vmatpush.msra.mxu0 0.0
    %2366 = vmatpush.msra.mxu0 0.0
    %2367 = vmatpush.msra.mxu0 0.0
    %2368 = vmatpush.msra.mxu0 0.0
    %2369 = vmatpush.msra.mxu0 0.0
    %2370 = vmatpush.msra.mxu0 0.0
    %2371 = vmatpush.msra.mxu0 0.0
    %2372 = vmatpush.msra.mxu0 0.0
    %2373 = vmatpush.msra.mxu0 0.0
    %2374 = vmatpush.msra.mxu0 0.0
    %2375 = vmatpush.msra.mxu0 0.0
    %2376 = vmatpush.msra.mxu0 0.0
    %2377 = vmatpush.msra.mxu0 0.0
    %2378 = vmatpush.msra.mxu0 %v2359
    %2379 = vmatmul.f32.gmra.mxu0 %v2361
    %v2380 = vpop.f32.mrf.mxu0
    %v2381 = vadd.f32 0.0, %v2380
    %2382 = vdwg.mxu0
    %v2383 = vadd.f32 %v2204, %v2381
    %s2384 = scalar_lea.vmem %s15, 224
    %v2385 = vld [vmem:[%s2384] sm:$0xff]
    %v2386 = vld [vmem:[%s2384 + $0x8] sm:$0xff]
    %v2387 = vld [vmem:[%s2384 + $0x10] sm:$0xff]
    %v2388 = vld [vmem:[%s2384 + $0x18] sm:$0xff]
    %s2389 = scalar_lea.vmem %s21, 7
    %v2390 = vld [vmem:[%s2389] sm:$0x1]
    %v2392 = vperm.slane %v2390, 0
    %2394 = vmatpush.msra.mxu0 0.0
    %2395 = vmatpush.msra.mxu0 0.0
    %2396 = vmatpush.msra.mxu0 0.0
    %2397 = vmatpush.msra.mxu0 0.0
    %2398 = vmatpush.msra.mxu0 0.0
    %2399 = vmatpush.msra.mxu0 0.0
    %2400 = vmatpush.msra.mxu0 0.0
    %2401 = vmatpush.msra.mxu0 0.0
    %2402 = vmatpush.msra.mxu0 0.0
    %2403 = vmatpush.msra.mxu0 0.0
    %2404 = vmatpush.msra.mxu0 0.0
    %2405 = vmatpush.msra.mxu0 0.0
    %2406 = vmatpush.msra.mxu0 %v2388
    %2407 = vmatpush.msra.mxu0 %v2387
    %2408 = vmatpush.msra.mxu0 %v2386
    %2409 = vmatpush.msra.mxu0 %v2385
    %2410 = vmatmul.f32.gmra.mxu0 %v1857
    %v2411 = vpop.f32.mrf.mxu0
    %v2412 = vadd.f32 %v2392, %v2411
    %2413 = vdwg.mxu0
    %s2414 = scalar_lea.vmem %s17, 224
    %v2415 = vld [vmem:[%s2414] sm:$0xff]
    %v2416 = vld [vmem:[%s2414 + $0x8] sm:$0xff]
    %v2417 = vld [vmem:[%s2414 + $0x10] sm:$0xff]
    %v2418 = vld [vmem:[%s2414 + $0x18] sm:$0xff]
    %s2419 = scalar_lea.vmem %s23, 7
    %v2420 = vld [vmem:[%s2419] sm:$0x1]
    %v2422 = vperm.slane %v2420, 0
    %2424 = vmatpush.msra.mxu0 0.0
    %2425 = vmatpush.msra.mxu0 0.0
    %2426 = vmatpush.msra.mxu0 0.0
    %2427 = vmatpush.msra.mxu0 0.0
    %2428 = vmatpush.msra.mxu0 0.0
    %2429 = vmatpush.msra.mxu0 0.0
    %2430 = vmatpush.msra.mxu0 0.0
    %2431 = vmatpush.msra.mxu0 0.0
    %2432 = vmatpush.msra.mxu0 0.0
    %2433 = vmatpush.msra.mxu0 0.0
    %2434 = vmatpush.msra.mxu0 0.0
    %2435 = vmatpush.msra.mxu0 0.0
    %2436 = vmatpush.msra.mxu0 %v2418
    %2437 = vmatpush.msra.mxu0 %v2417
    %2438 = vmatpush.msra.mxu0 %v2416
    %2439 = vmatpush.msra.mxu0 %v2415
    %2440 = vmatmul.f32.gmra.mxu0 %v1857
    %v2441 = vpop.f32.mrf.mxu0
    %v2442 = vadd.f32 %v2422, %v2441
    %2443 = vdwg.mxu0
    %s2444 = scalar_lea.vmem %s19, 224
    %v2445 = vld [vmem:[%s2444] sm:$0xff]
    %v2446 = vld [vmem:[%s2444 + $0x8] sm:$0xff]
    %v2447 = vld [vmem:[%s2444 + $0x10] sm:$0xff]
    %v2448 = vld [vmem:[%s2444 + $0x18] sm:$0xff]
    %s2449 = scalar_lea.vmem %s25, 7
    %v2450 = vld [vmem:[%s2449] sm:$0x1]
    %v2452 = vperm.slane %v2450, 0
    %2454 = vmatpush.msra.mxu0 0.0
    %2455 = vmatpush.msra.mxu0 0.0
    %2456 = vmatpush.msra.mxu0 0.0
    %2457 = vmatpush.msra.mxu0 0.0
    %2458 = vmatpush.msra.mxu0 0.0
    %2459 = vmatpush.msra.mxu0 0.0
    %2460 = vmatpush.msra.mxu0 0.0
    %2461 = vmatpush.msra.mxu0 0.0
    %2462 = vmatpush.msra.mxu0 0.0
    %2463 = vmatpush.msra.mxu0 0.0
    %2464 = vmatpush.msra.mxu0 0.0
    %2465 = vmatpush.msra.mxu0 0.0
    %2466 = vmatpush.msra.mxu0 %v2448
    %2467 = vmatpush.msra.mxu0 %v2447
    %2468 = vmatpush.msra.mxu0 %v2446
    %2469 = vmatpush.msra.mxu0 %v2445
    %2470 = vmatmul.f32.gmra.mxu0 %v1857
    %v2471 = vpop.f32.mrf.mxu0
    %v2472 = vadd.f32 %v2452, %v2471
    %2473 = vdwg.mxu0
    %v2475 = vsel %vm318, %v2412, 0
    %v2478 = vsel %vm318, %v2442, 0
    %2480 = vmatpush.xpose.msra.mxu0 0.0
    %2481 = vmatpush.xpose.msra.mxu0 0.0
    %2482 = vmatpush.xpose.msra.mxu0 0.0
    %2483 = vmatpush.xpose.msra.mxu0 0.0
    %2484 = vmatpush.xpose.msra.mxu0 0.0
    %2485 = vmatpush.xpose.msra.mxu0 0.0
    %2486 = vmatpush.xpose.msra.mxu0 0.0
    %2487 = vmatpush.xpose.msra.mxu0 0.0
    %2488 = vmatpush.xpose.msra.mxu0 0.0
    %2489 = vmatpush.xpose.msra.mxu0 0.0
    %2490 = vmatpush.xpose.msra.mxu0 0.0
    %2491 = vmatpush.xpose.msra.mxu0 0.0
    %2492 = vmatpush.xpose.msra.mxu0 0.0
    %2493 = vmatpush.xpose.msra.mxu0 0.0
    %2494 = vmatpush.xpose.msra.mxu0 0.0
    %2495 = vmatpush.xpose.msra.mxu0 %v2478
    %2496 = vmatmul.f32.gmra.mxu0 %v2475
    %v2497 = vpop.f32.mrf.mxu0
    %v2498 = vadd.f32 0.0, %v2497
    %2499 = vdwg.mxu0
    %v2500 = vmul.f32 %v2498, 0.35355338
    %v2501 = vadd.f32 %v2500, %v1967
    %v2502 = vsel %vm318, %v2501, -inf
    %2503 = vmax.xlane.f32.xlu0 %v2502
    %v2504 = vpop.xlane.xlu0 %2503
    %v2505 = vsub.f32 %v2501, %v2504
    %v2506 = vmul.f32 %v2505, 1.442695
    %v2507 = vpow.pop %v2506
    %v2508 = vsel %vm318, %v2507, 0.0
    %2509 = vadd.xlane.f32.xlu0 %v2508
    %v2510 = vpop.xlane.xlu0 %2509
    %v2511 = vrcp.pop %v2510
    %v2512 = vmul.f32 %v2507, %v2511
    %v2514 = vsel %vm318, %v2512, 0
    %2516 = vmatpush.msra.mxu0 0.0
    %2517 = vmatpush.msra.mxu0 0.0
    %2518 = vmatpush.msra.mxu0 0.0
    %2519 = vmatpush.msra.mxu0 0.0
    %2520 = vmatpush.msra.mxu0 0.0
    %2521 = vmatpush.msra.mxu0 0.0
    %2522 = vmatpush.msra.mxu0 0.0
    %2523 = vmatpush.msra.mxu0 0.0
    %2524 = vmatpush.msra.mxu0 0.0
    %2525 = vmatpush.msra.mxu0 0.0
    %2526 = vmatpush.msra.mxu0 0.0
    %2527 = vmatpush.msra.mxu0 0.0
    %2528 = vmatpush.msra.mxu0 0.0
    %2529 = vmatpush.msra.mxu0 0.0
    %2530 = vmatpush.msra.mxu0 0.0
    %2531 = vmatpush.msra.mxu0 %v2472
    %2532 = vmatmul.f32.gmra.mxu0 %v2514
    %v2533 = vpop.f32.mrf.mxu0
    %v2534 = vadd.f32 0.0, %v2533
    %2535 = vdwg.mxu0
    %s2536 = scalar_lea.vmem %s27, 56
    %v2537 = vld [vmem:[%s2536] sm:$0xff]
    %v2539 = vsel %vm318, %v2534, 0
    %2541 = vmatpush.msra.mxu0 0.0
    %2542 = vmatpush.msra.mxu0 0.0
    %2543 = vmatpush.msra.mxu0 0.0
    %2544 = vmatpush.msra.mxu0 0.0
    %2545 = vmatpush.msra.mxu0 0.0
    %2546 = vmatpush.msra.mxu0 0.0
    %2547 = vmatpush.msra.mxu0 0.0
    %2548 = vmatpush.msra.mxu0 0.0
    %2549 = vmatpush.msra.mxu0 0.0
    %2550 = vmatpush.msra.mxu0 0.0
    %2551 = vmatpush.msra.mxu0 0.0
    %2552 = vmatpush.msra.mxu0 0.0
    %2553 = vmatpush.msra.mxu0 0.0
    %2554 = vmatpush.msra.mxu0 0.0
    %2555 = vmatpush.msra.mxu0 0.0
    %2556 = vmatpush.msra.mxu0 %v2537
    %2557 = vmatmul.f32.gmra.mxu0 %v2539
    %v2558 = vpop.f32.mrf.mxu0
    %v2559 = vadd.f32 0.0, %v2558
    %2560 = vdwg.mxu0
    %v2561 = vadd.f32 %v2383, %v2559
    %2562 = vst.msk [vmem:[#allocation2] sm:$0xff] %vm238, %v2561
    %v2563 = vld [vmem:[%s942] sm:$0x1]
    %v2564 = vld [vmem:[%s1846] sm:$0xff]
    %v2565 = vld [vmem:[%s1846 + $0x8] sm:$0xff]
    %v2566 = vld [vmem:[%s1846 + $0x10] sm:$0xff]
    %v2567 = vld [vmem:[%s1846 + $0x18] sm:$0xff]
    %v2568 = vld [vmem:[%s1851] sm:$0x1]
    %v2570 = vperm.slane %v2568, 0
    %v2573 = vsel %vm238, %v1844, 0
    %2575 = vmatpush.msra.mxu0 0.0
    %2576 = vmatpush.msra.mxu0 0.0
    %2577 = vmatpush.msra.mxu0 0.0
    %2578 = vmatpush.msra.mxu0 0.0
    %2579 = vmatpush.msra.mxu0 0.0
    %2580 = vmatpush.msra.mxu0 0.0
    %2581 = vmatpush.msra.mxu0 0.0
    %2582 = vmatpush.msra.mxu0 0.0
    %2583 = vmatpush.msra.mxu0 0.0
    %2584 = vmatpush.msra.mxu0 0.0
    %2585 = vmatpush.msra.mxu0 0.0
    %2586 = vmatpush.msra.mxu0 0.0
    %2587 = vmatpush.msra.mxu0 %v2567
    %2588 = vmatpush.msra.mxu0 %v2566
    %2589 = vmatpush.msra.mxu0 %v2565
    %2590 = vmatpush.msra.mxu0 %v2564
    %2591 = vmatmul.f32.gmra.mxu0 %v2573
    %v2592 = vpop.f32.mrf.mxu0
    %v2593 = vadd.f32 %v2570, %v2592
    %2594 = vdwg.mxu0
    %v2595 = vld [vmem:[%s1879] sm:$0xff]
    %v2596 = vld [vmem:[%s1879 + $0x8] sm:$0xff]
    %v2597 = vld [vmem:[%s1879 + $0x10] sm:$0xff]
    %v2598 = vld [vmem:[%s1879 + $0x18] sm:$0xff]
    %v2599 = vld [vmem:[%s1884] sm:$0x1]
    %v2601 = vperm.slane %v2599, 0
    %2603 = vmatpush.msra.mxu0 0.0
    %2604 = vmatpush.msra.mxu0 0.0
    %2605 = vmatpush.msra.mxu0 0.0
    %2606 = vmatpush.msra.mxu0 0.0
    %2607 = vmatpush.msra.mxu0 0.0
    %2608 = vmatpush.msra.mxu0 0.0
    %2609 = vmatpush.msra.mxu0 0.0
    %2610 = vmatpush.msra.mxu0 0.0
    %2611 = vmatpush.msra.mxu0 0.0
    %2612 = vmatpush.msra.mxu0 0.0
    %2613 = vmatpush.msra.mxu0 0.0
    %2614 = vmatpush.msra.mxu0 0.0
    %2615 = vmatpush.msra.mxu0 %v2598
    %2616 = vmatpush.msra.mxu0 %v2597
    %2617 = vmatpush.msra.mxu0 %v2596
    %2618 = vmatpush.msra.mxu0 %v2595
    %2619 = vmatmul.f32.gmra.mxu0 %v2573
    %v2620 = vpop.f32.mrf.mxu0
    %v2621 = vadd.f32 %v2601, %v2620
    %2622 = vdwg.mxu0
    %v2623 = vld [vmem:[%s1909] sm:$0xff]
    %v2624 = vld [vmem:[%s1909 + $0x8] sm:$0xff]
    %v2625 = vld [vmem:[%s1909 + $0x10] sm:$0xff]
    %v2626 = vld [vmem:[%s1909 + $0x18] sm:$0xff]
    %v2627 = vld [vmem:[%s1914] sm:$0x1]
    %v2629 = vperm.slane %v2627, 0
    %2631 = vmatpush.msra.mxu0 0.0
    %2632 = vmatpush.msra.mxu0 0.0
    %2633 = vmatpush.msra.mxu0 0.0
    %2634 = vmatpush.msra.mxu0 0.0
    %2635 = vmatpush.msra.mxu0 0.0
    %2636 = vmatpush.msra.mxu0 0.0
    %2637 = vmatpush.msra.mxu0 0.0
    %2638 = vmatpush.msra.mxu0 0.0
    %2639 = vmatpush.msra.mxu0 0.0
    %2640 = vmatpush.msra.mxu0 0.0
    %2641 = vmatpush.msra.mxu0 0.0
    %2642 = vmatpush.msra.mxu0 0.0
    %2643 = vmatpush.msra.mxu0 %v2626
    %2644 = vmatpush.msra.mxu0 %v2625
    %2645 = vmatpush.msra.mxu0 %v2624
    %2646 = vmatpush.msra.mxu0 %v2623
    %2647 = vmatmul.f32.gmra.mxu0 %v2573
    %v2648 = vpop.f32.mrf.mxu0
    %v2649 = vadd.f32 %v2629, %v2648
    %2650 = vdwg.mxu0
    %v2652 = vsel %vm318, %v2593, 0
    %v2655 = vsel %vm318, %v2621, 0
    %2657 = vmatpush.xpose.msra.mxu0 0.0
    %2658 = vmatpush.xpose.msra.mxu0 0.0
    %2659 = vmatpush.xpose.msra.mxu0 0.0
    %2660 = vmatpush.xpose.msra.mxu0 0.0
    %2661 = vmatpush.xpose.msra.mxu0 0.0
    %2662 = vmatpush.xpose.msra.mxu0 0.0
    %2663 = vmatpush.xpose.msra.mxu0 0.0
    %2664 = vmatpush.xpose.msra.mxu0 0.0
    %2665 = vmatpush.xpose.msra.mxu0 0.0
    %2666 = vmatpush.xpose.msra.mxu0 0.0
    %2667 = vmatpush.xpose.msra.mxu0 0.0
    %2668 = vmatpush.xpose.msra.mxu0 0.0
    %2669 = vmatpush.xpose.msra.mxu0 0.0
    %2670 = vmatpush.xpose.msra.mxu0 0.0
    %2671 = vmatpush.xpose.msra.mxu0 0.0
    %2672 = vmatpush.xpose.msra.mxu0 %v2655
    %2673 = vmatmul.f32.gmra.mxu0 %v2652
    %v2674 = vpop.f32.mrf.mxu0
    %v2675 = vadd.f32 0.0, %v2674
    %2676 = vdwg.mxu0
    %v2677 = vmul.f32 %v2675, 0.35355338
    %v2679 = vperm.slane %v2563, 0
    %v2681 = vadd.f32 %v2677, %v2679
    %v2682 = vsel %vm318, %v2681, -inf
    %2683 = vmax.xlane.f32.xlu0 %v2682
    %v2684 = vpop.xlane.xlu0 %2683
    %v2685 = vsub.f32 %v2681, %v2684
    %v2686 = vmul.f32 %v2685, 1.442695
    %v2687 = vpow.pop %v2686
    %v2688 = vsel %vm318, %v2687, 0.0
    %2689 = vadd.xlane.f32.xlu0 %v2688
    %v2690 = vpop.xlane.xlu0 %2689
    %v2691 = vrcp.pop %v2690
    %v2692 = vmul.f32 %v2687, %v2691
    %v2694 = vsel %vm318, %v2692, 0
    %2696 = vmatpush.msra.mxu0 0.0
    %2697 = vmatpush.msra.mxu0 0.0
    %2698 = vmatpush.msra.mxu0 0.0
    %2699 = vmatpush.msra.mxu0 0.0
    %2700 = vmatpush.msra.mxu0 0.0
    %2701 = vmatpush.msra.mxu0 0.0
    %2702 = vmatpush.msra.mxu0 0.0
    %2703 = vmatpush.msra.mxu0 0.0
    %2704 = vmatpush.msra.mxu0 0.0
    %2705 = vmatpush.msra.mxu0 0.0
    %2706 = vmatpush.msra.mxu0 0.0
    %2707 = vmatpush.msra.mxu0 0.0
    %2708 = vmatpush.msra.mxu0 0.0
    %2709 = vmatpush.msra.mxu0 0.0
    %2710 = vmatpush.msra.mxu0 0.0
    %2711 = vmatpush.msra.mxu0 %v2649
    %2712 = vmatmul.f32.gmra.mxu0 %v2694
    %v2713 = vpop.f32.mrf.mxu0
    %v2714 = vadd.f32 0.0, %v2713
    %2715 = vdwg.mxu0
    %v2716 = vld [vmem:[%s2004] sm:$0xff]
    %v2717 = vld [vmem:[%s2006] sm:$0xff]
    %v2718 = vld [vmem:[%s2006 + $0x8] sm:$0xff]
    %v2719 = vld [vmem:[%s2006 + $0x10] sm:$0xff]
    %v2720 = vld [vmem:[%s2006 + $0x18] sm:$0xff]
    %v2721 = vld [vmem:[%s2011] sm:$0x1]
    %v2723 = vperm.slane %v2721, 0
    %2725 = vmatpush.msra.mxu0 0.0
    %2726 = vmatpush.msra.mxu0 0.0
    %2727 = vmatpush.msra.mxu0 0.0
    %2728 = vmatpush.msra.mxu0 0.0
    %2729 = vmatpush.msra.mxu0 0.0
    %2730 = vmatpush.msra.mxu0 0.0
    %2731 = vmatpush.msra.mxu0 0.0
    %2732 = vmatpush.msra.mxu0 0.0
    %2733 = vmatpush.msra.mxu0 0.0
    %2734 = vmatpush.msra.mxu0 0.0
    %2735 = vmatpush.msra.mxu0 0.0
    %2736 = vmatpush.msra.mxu0 0.0
    %2737 = vmatpush.msra.mxu0 %v2720
    %2738 = vmatpush.msra.mxu0 %v2719
    %2739 = vmatpush.msra.mxu0 %v2718
    %2740 = vmatpush.msra.mxu0 %v2717
    %2741 = vmatmul.f32.gmra.mxu0 %v2573
    %v2742 = vpop.f32.mrf.mxu0
    %v2743 = vadd.f32 %v2723, %v2742
    %2744 = vdwg.mxu0
    %v2745 = vld [vmem:[%s2036] sm:$0xff]
    %v2746 = vld [vmem:[%s2036 + $0x8] sm:$0xff]
    %v2747 = vld [vmem:[%s2036 + $0x10] sm:$0xff]
    %v2748 = vld [vmem:[%s2036 + $0x18] sm:$0xff]
    %v2749 = vld [vmem:[%s2041] sm:$0x1]
    %v2751 = vperm.slane %v2749, 0
    %2753 = vmatpush.msra.mxu0 0.0
    %2754 = vmatpush.msra.mxu0 0.0
    %2755 = vmatpush.msra.mxu0 0.0
    %2756 = vmatpush.msra.mxu0 0.0
    %2757 = vmatpush.msra.mxu0 0.0
    %2758 = vmatpush.msra.mxu0 0.0
    %2759 = vmatpush.msra.mxu0 0.0
    %2760 = vmatpush.msra.mxu0 0.0
    %2761 = vmatpush.msra.mxu0 0.0
    %2762 = vmatpush.msra.mxu0 0.0
    %2763 = vmatpush.msra.mxu0 0.0
    %2764 = vmatpush.msra.mxu0 0.0
    %2765 = vmatpush.msra.mxu0 %v2748
    %2766 = vmatpush.msra.mxu0 %v2747
    %2767 = vmatpush.msra.mxu0 %v2746
    %2768 = vmatpush.msra.mxu0 %v2745
    %2769 = vmatmul.f32.gmra.mxu0 %v2573
    %v2770 = vpop.f32.mrf.mxu0
    %v2771 = vadd.f32 %v2751, %v2770
    %2772 = vdwg.mxu0
    %v2773 = vld [vmem:[%s2066] sm:$0xff]
    %v2774 = vld [vmem:[%s2066 + $0x8] sm:$0xff]
    %v2775 = vld [vmem:[%s2066 + $0x10] sm:$0xff]
    %v2776 = vld [vmem:[%s2066 + $0x18] sm:$0xff]
    %v2777 = vld [vmem:[%s2071] sm:$0x1]
    %v2779 = vperm.slane %v2777, 0
    %2781 = vmatpush.msra.mxu0 0.0
    %2782 = vmatpush.msra.mxu0 0.0
    %2783 = vmatpush.msra.mxu0 0.0
    %2784 = vmatpush.msra.mxu0 0.0
    %2785 = vmatpush.msra.mxu0 0.0
    %2786 = vmatpush.msra.mxu0 0.0
    %2787 = vmatpush.msra.mxu0 0.0
    %2788 = vmatpush.msra.mxu0 0.0
    %2789 = vmatpush.msra.mxu0 0.0
    %2790 = vmatpush.msra.mxu0 0.0
    %2791 = vmatpush.msra.mxu0 0.0
    %2792 = vmatpush.msra.mxu0 0.0
    %2793 = vmatpush.msra.mxu0 %v2776
    %2794 = vmatpush.msra.mxu0 %v2775
    %2795 = vmatpush.msra.mxu0 %v2774
    %2796 = vmatpush.msra.mxu0 %v2773
    %2797 = vmatmul.f32.gmra.mxu0 %v2573
    %v2798 = vpop.f32.mrf.mxu0
    %v2799 = vadd.f32 %v2779, %v2798
    %2800 = vdwg.mxu0
    %v2802 = vsel %vm318, %v2743, 0
    %v2805 = vsel %vm318, %v2771, 0
    %2807 = vmatpush.xpose.msra.mxu0 0.0
    %2808 = vmatpush.xpose.msra.mxu0 0.0
    %2809 = vmatpush.xpose.msra.mxu0 0.0
    %2810 = vmatpush.xpose.msra.mxu0 0.0
    %2811 = vmatpush.xpose.msra.mxu0 0.0
    %2812 = vmatpush.xpose.msra.mxu0 0.0
    %2813 = vmatpush.xpose.msra.mxu0 0.0
    %2814 = vmatpush.xpose.msra.mxu0 0.0
    %2815 = vmatpush.xpose.msra.mxu0 0.0
    %2816 = vmatpush.xpose.msra.mxu0 0.0
    %2817 = vmatpush.xpose.msra.mxu0 0.0
    %2818 = vmatpush.xpose.msra.mxu0 0.0
    %2819 = vmatpush.xpose.msra.mxu0 0.0
    %2820 = vmatpush.xpose.msra.mxu0 0.0
    %2821 = vmatpush.xpose.msra.mxu0 0.0
    %2822 = vmatpush.xpose.msra.mxu0 %v2805
    %2823 = vmatmul.f32.gmra.mxu0 %v2802
    %v2824 = vpop.f32.mrf.mxu0
    %v2825 = vadd.f32 0.0, %v2824
    %2826 = vdwg.mxu0
    %v2827 = vmul.f32 %v2825, 0.35355338
    %v2828 = vadd.f32 %v2827, %v2679
    %v2829 = vsel %vm318, %v2828, -inf
    %2830 = vmax.xlane.f32.xlu0 %v2829
    %v2831 = vpop.xlane.xlu0 %2830
    %v2832 = vsub.f32 %v2828, %v2831
    %v2833 = vmul.f32 %v2832, 1.442695
    %v2834 = vpow.pop %v2833
    %v2835 = vsel %vm318, %v2834, 0.0
    %2836 = vadd.xlane.f32.xlu0 %v2835
    %v2837 = vpop.xlane.xlu0 %2836
    %v2838 = vrcp.pop %v2837
    %v2839 = vmul.f32 %v2834, %v2838
    %v2841 = vsel %vm318, %v2839, 0
    %2843 = vmatpush.msra.mxu0 0.0
    %2844 = vmatpush.msra.mxu0 0.0
    %2845 = vmatpush.msra.mxu0 0.0
    %2846 = vmatpush.msra.mxu0 0.0
    %2847 = vmatpush.msra.mxu0 0.0
    %2848 = vmatpush.msra.mxu0 0.0
    %2849 = vmatpush.msra.mxu0 0.0
    %2850 = vmatpush.msra.mxu0 0.0
    %2851 = vmatpush.msra.mxu0 0.0
    %2852 = vmatpush.msra.mxu0 0.0
    %2853 = vmatpush.msra.mxu0 0.0
    %2854 = vmatpush.msra.mxu0 0.0
    %2855 = vmatpush.msra.mxu0 0.0
    %2856 = vmatpush.msra.mxu0 0.0
    %2857 = vmatpush.msra.mxu0 0.0
    %2858 = vmatpush.msra.mxu0 %v2799
    %2859 = vmatmul.f32.gmra.mxu0 %v2841
    %v2860 = vpop.f32.mrf.mxu0
    %v2861 = vadd.f32 0.0, %v2860
    %2862 = vdwg.mxu0
    %v2863 = vld [vmem:[%s2158] sm:$0xff]
    %v2865 = vsel %vm318, %v2861, 0
    %2867 = vmatpush.msra.mxu0 0.0
    %2868 = vmatpush.msra.mxu0 0.0
    %2869 = vmatpush.msra.mxu0 0.0
    %2870 = vmatpush.msra.mxu0 0.0
    %2871 = vmatpush.msra.mxu0 0.0
    %2872 = vmatpush.msra.mxu0 0.0
    %2873 = vmatpush.msra.mxu0 0.0
    %2874 = vmatpush.msra.mxu0 0.0
    %2875 = vmatpush.msra.mxu0 0.0
    %2876 = vmatpush.msra.mxu0 0.0
    %2877 = vmatpush.msra.mxu0 0.0
    %2878 = vmatpush.msra.mxu0 0.0
    %2879 = vmatpush.msra.mxu0 0.0
    %2880 = vmatpush.msra.mxu0 0.0
    %2881 = vmatpush.msra.mxu0 0.0
    %2882 = vmatpush.msra.mxu0 %v2863
    %2883 = vmatmul.f32.gmra.mxu0 %v2865
    %v2884 = vpop.f32.mrf.mxu0
    %v2885 = vadd.f32 0.0, %v2884
    %2886 = vdwg.mxu0
    %v2888 = vsel %vm318, %v2714, 0
    %2890 = vmatpush.msra.mxu0 0.0
    %2891 = vmatpush.msra.mxu0 0.0
    %2892 = vmatpush.msra.mxu0 0.0
    %2893 = vmatpush.msra.mxu0 0.0
    %2894 = vmatpush.msra.mxu0 0.0
    %2895 = vmatpush.msra.mxu0 0.0
    %2896 = vmatpush.msra.mxu0 0.0
    %2897 = vmatpush.msra.mxu0 0.0
    %2898 = vmatpush.msra.mxu0 0.0
    %2899 = vmatpush.msra.mxu0 0.0
    %2900 = vmatpush.msra.mxu0 0.0
    %2901 = vmatpush.msra.mxu0 0.0
    %2902 = vmatpush.msra.mxu0 0.0
    %2903 = vmatpush.msra.mxu0 0.0
    %2904 = vmatpush.msra.mxu0 0.0
    %2905 = vmatpush.msra.mxu0 %v2716
    %2906 = vmatmul.f32.gmra.mxu0 %v2888
    %v2907 = vpop.f32.mrf.mxu0
    %v2908 = vadd.f32 %v2885, %v2907
    %2909 = vdwg.mxu0
    %v2910 = vld [vmem:[%s2206] sm:$0xff]
    %v2911 = vld [vmem:[%s2206 + $0x8] sm:$0xff]
    %v2912 = vld [vmem:[%s2206 + $0x10] sm:$0xff]
    %v2913 = vld [vmem:[%s2206 + $0x18] sm:$0xff]
    %v2914 = vld [vmem:[%s2211] sm:$0x1]
    %v2916 = vperm.slane %v2914, 0
    %2918 = vmatpush.msra.mxu0 0.0
    %2919 = vmatpush.msra.mxu0 0.0
    %2920 = vmatpush.msra.mxu0 0.0
    %2921 = vmatpush.msra.mxu0 0.0
    %2922 = vmatpush.msra.mxu0 0.0
    %2923 = vmatpush.msra.mxu0 0.0
    %2924 = vmatpush.msra.mxu0 0.0
    %2925 = vmatpush.msra.mxu0 0.0
    %2926 = vmatpush.msra.mxu0 0.0
    %2927 = vmatpush.msra.mxu0 0.0
    %2928 = vmatpush.msra.mxu0 0.0
    %2929 = vmatpush.msra.mxu0 0.0
    %2930 = vmatpush.msra.mxu0 %v2913
    %2931 = vmatpush.msra.mxu0 %v2912
    %2932 = vmatpush.msra.mxu0 %v2911
    %2933 = vmatpush.msra.mxu0 %v2910
    %2934 = vmatmul.f32.gmra.mxu0 %v2573
    %v2935 = vpop.f32.mrf.mxu0
    %v2936 = vadd.f32 %v2916, %v2935
    %2937 = vdwg.mxu0
    %v2938 = vld [vmem:[%s2236] sm:$0xff]
    %v2939 = vld [vmem:[%s2236 + $0x8] sm:$0xff]
    %v2940 = vld [vmem:[%s2236 + $0x10] sm:$0xff]
    %v2941 = vld [vmem:[%s2236 + $0x18] sm:$0xff]
    %v2942 = vld [vmem:[%s2241] sm:$0x1]
    %v2944 = vperm.slane %v2942, 0
    %2946 = vmatpush.msra.mxu0 0.0
    %2947 = vmatpush.msra.mxu0 0.0
    %2948 = vmatpush.msra.mxu0 0.0
    %2949 = vmatpush.msra.mxu0 0.0
    %2950 = vmatpush.msra.mxu0 0.0
    %2951 = vmatpush.msra.mxu0 0.0
    %2952 = vmatpush.msra.mxu0 0.0
    %2953 = vmatpush.msra.mxu0 0.0
    %2954 = vmatpush.msra.mxu0 0.0
    %2955 = vmatpush.msra.mxu0 0.0
    %2956 = vmatpush.msra.mxu0 0.0
    %2957 = vmatpush.msra.mxu0 0.0
    %2958 = vmatpush.msra.mxu0 %v2941
    %2959 = vmatpush.msra.mxu0 %v2940
    %2960 = vmatpush.msra.mxu0 %v2939
    %2961 = vmatpush.msra.mxu0 %v2938
    %2962 = vmatmul.f32.gmra.mxu0 %v2573
    %v2963 = vpop.f32.mrf.mxu0
    %v2964 = vadd.f32 %v2944, %v2963
    %2965 = vdwg.mxu0
    %v2966 = vld [vmem:[%s2266] sm:$0xff]
    %v2967 = vld [vmem:[%s2266 + $0x8] sm:$0xff]
    %v2968 = vld [vmem:[%s2266 + $0x10] sm:$0xff]
    %v2969 = vld [vmem:[%s2266 + $0x18] sm:$0xff]
    %v2970 = vld [vmem:[%s2271] sm:$0x1]
    %v2972 = vperm.slane %v2970, 0
    %2974 = vmatpush.msra.mxu0 0.0
    %2975 = vmatpush.msra.mxu0 0.0
    %2976 = vmatpush.msra.mxu0 0.0
    %2977 = vmatpush.msra.mxu0 0.0
    %2978 = vmatpush.msra.mxu0 0.0
    %2979 = vmatpush.msra.mxu0 0.0
    %2980 = vmatpush.msra.mxu0 0.0
    %2981 = vmatpush.msra.mxu0 0.0
    %2982 = vmatpush.msra.mxu0 0.0
    %2983 = vmatpush.msra.mxu0 0.0
    %2984 = vmatpush.msra.mxu0 0.0
    %2985 = vmatpush.msra.mxu0 0.0
    %2986 = vmatpush.msra.mxu0 %v2969
    %2987 = vmatpush.msra.mxu0 %v2968
    %2988 = vmatpush.msra.mxu0 %v2967
    %2989 = vmatpush.msra.mxu0 %v2966
    %2990 = vmatmul.f32.gmra.mxu0 %v2573
    %v2991 = vpop.f32.mrf.mxu0
    %v2992 = vadd.f32 %v2972, %v2991
    %2993 = vdwg.mxu0
    %v2995 = vsel %vm318, %v2936, 0
    %v2998 = vsel %vm318, %v2964, 0
    %3000 = vmatpush.xpose.msra.mxu0 0.0
    %3001 = vmatpush.xpose.msra.mxu0 0.0
    %3002 = vmatpush.xpose.msra.mxu0 0.0
    %3003 = vmatpush.xpose.msra.mxu0 0.0
    %3004 = vmatpush.xpose.msra.mxu0 0.0
    %3005 = vmatpush.xpose.msra.mxu0 0.0
    %3006 = vmatpush.xpose.msra.mxu0 0.0
    %3007 = vmatpush.xpose.msra.mxu0 0.0
    %3008 = vmatpush.xpose.msra.mxu0 0.0
    %3009 = vmatpush.xpose.msra.mxu0 0.0
    %3010 = vmatpush.xpose.msra.mxu0 0.0
    %3011 = vmatpush.xpose.msra.mxu0 0.0
    %3012 = vmatpush.xpose.msra.mxu0 0.0
    %3013 = vmatpush.xpose.msra.mxu0 0.0
    %3014 = vmatpush.xpose.msra.mxu0 0.0
    %3015 = vmatpush.xpose.msra.mxu0 %v2998
    %3016 = vmatmul.f32.gmra.mxu0 %v2995
    %v3017 = vpop.f32.mrf.mxu0
    %v3018 = vadd.f32 0.0, %v3017
    %3019 = vdwg.mxu0
    %v3020 = vmul.f32 %v3018, 0.35355338
    %v3021 = vadd.f32 %v3020, %v2679
    %v3022 = vsel %vm318, %v3021, -inf
    %3023 = vmax.xlane.f32.xlu0 %v3022
    %v3024 = vpop.xlane.xlu0 %3023
    %v3025 = vsub.f32 %v3021, %v3024
    %v3026 = vmul.f32 %v3025, 1.442695
    %v3027 = vpow.pop %v3026
    %v3028 = vsel %vm318, %v3027, 0.0
    %3029 = vadd.xlane.f32.xlu0 %v3028
    %v3030 = vpop.xlane.xlu0 %3029
    %v3031 = vrcp.pop %v3030
    %v3032 = vmul.f32 %v3027, %v3031
    %v3034 = vsel %vm318, %v3032, 0
    %3036 = vmatpush.msra.mxu0 0.0
    %3037 = vmatpush.msra.mxu0 0.0
    %3038 = vmatpush.msra.mxu0 0.0
    %3039 = vmatpush.msra.mxu0 0.0
    %3040 = vmatpush.msra.mxu0 0.0
    %3041 = vmatpush.msra.mxu0 0.0
    %3042 = vmatpush.msra.mxu0 0.0
    %3043 = vmatpush.msra.mxu0 0.0
    %3044 = vmatpush.msra.mxu0 0.0
    %3045 = vmatpush.msra.mxu0 0.0
    %3046 = vmatpush.msra.mxu0 0.0
    %3047 = vmatpush.msra.mxu0 0.0
    %3048 = vmatpush.msra.mxu0 0.0
    %3049 = vmatpush.msra.mxu0 0.0
    %3050 = vmatpush.msra.mxu0 0.0
    %3051 = vmatpush.msra.mxu0 %v2992
    %3052 = vmatmul.f32.gmra.mxu0 %v3034
    %v3053 = vpop.f32.mrf.mxu0
    %v3054 = vadd.f32 0.0, %v3053
    %3055 = vdwg.mxu0
    %v3056 = vld [vmem:[%s2358] sm:$0xff]
    %v3058 = vsel %vm318, %v3054, 0
    %3060 = vmatpush.msra.mxu0 0.0
    %3061 = vmatpush.msra.mxu0 0.0
    %3062 = vmatpush.msra.mxu0 0.0
    %3063 = vmatpush.msra.mxu0 0.0
    %3064 = vmatpush.msra.mxu0 0.0
    %3065 = vmatpush.msra.mxu0 0.0
    %3066 = vmatpush.msra.mxu0 0.0
    %3067 = vmatpush.msra.mxu0 0.0
    %3068 = vmatpush.msra.mxu0 0.0
    %3069 = vmatpush.msra.mxu0 0.0
    %3070 = vmatpush.msra.mxu0 0.0
    %3071 = vmatpush.msra.mxu0 0.0
    %3072 = vmatpush.msra.mxu0 0.0
    %3073 = vmatpush.msra.mxu0 0.0
    %3074 = vmatpush.msra.mxu0 0.0
    %3075 = vmatpush.msra.mxu0 %v3056
    %3076 = vmatmul.f32.gmra.mxu0 %v3058
    %v3077 = vpop.f32.mrf.mxu0
    %v3078 = vadd.f32 0.0, %v3077
    %3079 = vdwg.mxu0
    %v3080 = vadd.f32 %v2908, %v3078
    %v3081 = vld [vmem:[%s2384] sm:$0xff]
    %v3082 = vld [vmem:[%s2384 + $0x8] sm:$0xff]
    %v3083 = vld [vmem:[%s2384 + $0x10] sm:$0xff]
    %v3084 = vld [vmem:[%s2384 + $0x18] sm:$0xff]
    %v3085 = vld [vmem:[%s2389] sm:$0x1]
    %v3087 = vperm.slane %v3085, 0
    %3089 = vmatpush.msra.mxu0 0.0
    %3090 = vmatpush.msra.mxu0 0.0
    %3091 = vmatpush.msra.mxu0 0.0
    %3092 = vmatpush.msra.mxu0 0.0
    %3093 = vmatpush.msra.mxu0 0.0
    %3094 = vmatpush.msra.mxu0 0.0
    %3095 = vmatpush.msra.mxu0 0.0
    %3096 = vmatpush.msra.mxu0 0.0
    %3097 = vmatpush.msra.mxu0 0.0
    %3098 = vmatpush.msra.mxu0 0.0
    %3099 = vmatpush.msra.mxu0 0.0
    %3100 = vmatpush.msra.mxu0 0.0
    %3101 = vmatpush.msra.mxu0 %v3084
    %3102 = vmatpush.msra.mxu0 %v3083
    %3103 = vmatpush.msra.mxu0 %v3082
    %3104 = vmatpush.msra.mxu0 %v3081
    %3105 = vmatmul.f32.gmra.mxu0 %v2573
    %v3106 = vpop.f32.mrf.mxu0
    %v3107 = vadd.f32 %v3087, %v3106
    %3108 = vdwg.mxu0
    %v3109 = vld [vmem:[%s2414] sm:$0xff]
    %v3110 = vld [vmem:[%s2414 + $0x8] sm:$0xff]
    %v3111 = vld [vmem:[%s2414 + $0x10] sm:$0xff]
    %v3112 = vld [vmem:[%s2414 + $0x18] sm:$0xff]
    %v3113 = vld [vmem:[%s2419] sm:$0x1]
    %v3115 = vperm.slane %v3113, 0
    %3117 = vmatpush.msra.mxu0 0.0
    %3118 = vmatpush.msra.mxu0 0.0
    %3119 = vmatpush.msra.mxu0 0.0
    %3120 = vmatpush.msra.mxu0 0.0
    %3121 = vmatpush.msra.mxu0 0.0
    %3122 = vmatpush.msra.mxu0 0.0
    %3123 = vmatpush.msra.mxu0 0.0
    %3124 = vmatpush.msra.mxu0 0.0
    %3125 = vmatpush.msra.mxu0 0.0
    %3126 = vmatpush.msra.mxu0 0.0
    %3127 = vmatpush.msra.mxu0 0.0
    %3128 = vmatpush.msra.mxu0 0.0
    %3129 = vmatpush.msra.mxu0 %v3112
    %3130 = vmatpush.msra.mxu0 %v3111
    %3131 = vmatpush.msra.mxu0 %v3110
    %3132 = vmatpush.msra.mxu0 %v3109
    %3133 = vmatmul.f32.gmra.mxu0 %v2573
    %v3134 = vpop.f32.mrf.mxu0
    %v3135 = vadd.f32 %v3115, %v3134
    %3136 = vdwg.mxu0
    %v3137 = vld [vmem:[%s2444] sm:$0xff]
    %v3138 = vld [vmem:[%s2444 + $0x8] sm:$0xff]
    %v3139 = vld [vmem:[%s2444 + $0x10] sm:$0xff]
    %v3140 = vld [vmem:[%s2444 + $0x18] sm:$0xff]
    %v3141 = vld [vmem:[%s2449] sm:$0x1]
    %v3143 = vperm.slane %v3141, 0
    %3145 = vmatpush.msra.mxu0 0.0
    %3146 = vmatpush.msra.mxu0 0.0
    %3147 = vmatpush.msra.mxu0 0.0
    %3148 = vmatpush.msra.mxu0 0.0
    %3149 = vmatpush.msra.mxu0 0.0
    %3150 = vmatpush.msra.mxu0 0.0
    %3151 = vmatpush.msra.mxu0 0.0
    %3152 = vmatpush.msra.mxu0 0.0
    %3153 = vmatpush.msra.mxu0 0.0
    %3154 = vmatpush.msra.mxu0 0.0
    %3155 = vmatpush.msra.mxu0 0.0
    %3156 = vmatpush.msra.mxu0 0.0
    %3157 = vmatpush.msra.mxu0 %v3140
    %3158 = vmatpush.msra.mxu0 %v3139
    %3159 = vmatpush.msra.mxu0 %v3138
    %3160 = vmatpush.msra.mxu0 %v3137
    %3161 = vmatmul.f32.gmra.mxu0 %v2573
    %v3162 = vpop.f32.mrf.mxu0
    %v3163 = vadd.f32 %v3143, %v3162
    %3164 = vdwg.mxu0
    %v3166 = vsel %vm318, %v3107, 0
    %v3169 = vsel %vm318, %v3135, 0
    %3171 = vmatpush.xpose.msra.mxu0 0.0
    %3172 = vmatpush.xpose.msra.mxu0 0.0
    %3173 = vmatpush.xpose.msra.mxu0 0.0
    %3174 = vmatpush.xpose.msra.mxu0 0.0
    %3175 = vmatpush.xpose.msra.mxu0 0.0
    %3176 = vmatpush.xpose.msra.mxu0 0.0
    %3177 = vmatpush.xpose.msra.mxu0 0.0
    %3178 = vmatpush.xpose.msra.mxu0 0.0
    %3179 = vmatpush.xpose.msra.mxu0 0.0
    %3180 = vmatpush.xpose.msra.mxu0 0.0
    %3181 = vmatpush.xpose.msra.mxu0 0.0
    %3182 = vmatpush.xpose.msra.mxu0 0.0
    %3183 = vmatpush.xpose.msra.mxu0 0.0
    %3184 = vmatpush.xpose.msra.mxu0 0.0
    %3185 = vmatpush.xpose.msra.mxu0 0.0
    %3186 = vmatpush.xpose.msra.mxu0 %v3169
    %3187 = vmatmul.f32.gmra.mxu0 %v3166
    %v3188 = vpop.f32.mrf.mxu0
    %v3189 = vadd.f32 0.0, %v3188
    %3190 = vdwg.mxu0
    %v3191 = vmul.f32 %v3189, 0.35355338
    %v3192 = vadd.f32 %v3191, %v2679
    %v3193 = vsel %vm318, %v3192, -inf
    %3194 = vmax.xlane.f32.xlu0 %v3193
    %v3195 = vpop.xlane.xlu0 %3194
    %v3196 = vsub.f32 %v3192, %v3195
    %v3197 = vmul.f32 %v3196, 1.442695
    %v3198 = vpow.pop %v3197
    %v3199 = vsel %vm318, %v3198, 0.0
    %3200 = vadd.xlane.f32.xlu0 %v3199
    %v3201 = vpop.xlane.xlu0 %3200
    %v3202 = vrcp.pop %v3201
    %v3203 = vmul.f32 %v3198, %v3202
    %v3205 = vsel %vm318, %v3203, 0
    %3207 = vmatpush.msra.mxu0 0.0
    %3208 = vmatpush.msra.mxu0 0.0
    %3209 = vmatpush.msra.mxu0 0.0
    %3210 = vmatpush.msra.mxu0 0.0
    %3211 = vmatpush.msra.mxu0 0.0
    %3212 = vmatpush.msra.mxu0 0.0
    %3213 = vmatpush.msra.mxu0 0.0
    %3214 = vmatpush.msra.mxu0 0.0
    %3215 = vmatpush.msra.mxu0 0.0
    %3216 = vmatpush.msra.mxu0 0.0
    %3217 = vmatpush.msra.mxu0 0.0
    %3218 = vmatpush.msra.mxu0 0.0
    %3219 = vmatpush.msra.mxu0 0.0
    %3220 = vmatpush.msra.mxu0 0.0
    %3221 = vmatpush.msra.mxu0 0.0
    %3222 = vmatpush.msra.mxu0 %v3163
    %3223 = vmatmul.f32.gmra.mxu0 %v3205
    %v3224 = vpop.f32.mrf.mxu0
    %v3225 = vadd.f32 0.0, %v3224
    %3226 = vdwg.mxu0
    %v3227 = vld [vmem:[%s2536] sm:$0xff]
    %v3229 = vsel %vm318, %v3225, 0
    %3231 = vmatpush.msra.mxu0 0.0
    %3232 = vmatpush.msra.mxu0 0.0
    %3233 = vmatpush.msra.mxu0 0.0
    %3234 = vmatpush.msra.mxu0 0.0
    %3235 = vmatpush.msra.mxu0 0.0
    %3236 = vmatpush.msra.mxu0 0.0
    %3237 = vmatpush.msra.mxu0 0.0
    %3238 = vmatpush.msra.mxu0 0.0
    %3239 = vmatpush.msra.mxu0 0.0
    %3240 = vmatpush.msra.mxu0 0.0
    %3241 = vmatpush.msra.mxu0 0.0
    %3242 = vmatpush.msra.mxu0 0.0
    %3243 = vmatpush.msra.mxu0 0.0
    %3244 = vmatpush.msra.mxu0 0.0
    %3245 = vmatpush.msra.mxu0 0.0
    %3246 = vmatpush.msra.mxu0 %v3227
    %3247 = vmatmul.f32.gmra.mxu0 %v3229
    %v3248 = vpop.f32.mrf.mxu0
    %v3249 = vadd.f32 0.0, %v3248
    %3250 = vdwg.mxu0
    %v3251 = vadd.f32 %v3080, %v3249
    %3252 = vst.msk [vmem:[#allocation2 + $0x8] sm:$0xff] %vm238, %v3251
    %v3253 = vld [vmem:[#allocation2] sm:$0xff]
    %v3254 = vld [vmem:[#allocation2 + $0x8] sm:$0xff]
    %s3255 = scalar_lea.vmem %s29, 1
    %v3256 = vld [vmem:[%s3255] sm:$0x1]
    %v3258 = vperm.slane %v3256, 0
    %v3260 = vadd.f32 %v3253, %v3258
    %v3261 = vadd.f32 %v3254, %v3258
    %v3262 = vadd.f32 %v1843, %v3260
    %v3263 = vadd.f32 %v1844, %v3261
    %s3264 = scalar_lea.vmem %s31, 1
    %v3265 = vld [vmem:[%s3264] sm:$0x1]
    %s3266 = scalar_lea.vmem %s33, 1
    %v3267 = vld [vmem:[%s3266] sm:$0x1]
    %v3268 = vsel %vm238, %v3262, 0.0
    %3269 = vadd.xlane.f32.xlu0 %v3268
    %v3270 = vpop.xlane.xlu0 %3269
    %v3271 = vsel %vm238, %v3263, 0.0
    %3272 = vadd.xlane.f32.xlu0 %v3271
    %v3273 = vpop.xlane.xlu0 %3272
    %v3274 = vmul.f32 %v3270, %v1657
    %v3275 = vmul.f32 %v3273, %v1657
    %v3276 = vsub.f32 %v3262, %v3274
    %v3277 = vsub.f32 %v3263, %v3275
    %v3278 = vmul.f32 %v3276, %v3276
    %v3279 = vmul.f32 %v3277, %v3277
    %v3280 = vsel %vm238, %v3278, 0.0
    %3281 = vadd.xlane.f32.xlu0 %v3280
    %v3282 = vpop.xlane.xlu0 %3281
    %v3283 = vsel %vm238, %v3279, 0.0
    %3284 = vadd.xlane.f32.xlu0 %v3283
    %v3285 = vpop.xlane.xlu0 %3284
    %v3286 = vmul.f32 %v3282, %v1657
    %v3287 = vmul.f32 %v3285, %v1657
    %v3288 = vadd.f32 %v3286, 1e-05
    %v3289 = vadd.f32 %v3287, 1e-05
    %v3290 = vrsqrt.pop %v3288
    %v3291 = vmul.f32 %v3290, %v3288
    %v3292 = vmul.f32 %v3291, %v3290
    %v3293 = vmul.f32 0.5, %v3292
    %v3294 = vsub.f32 1.5, %v3293
    %v3295 = vmul.f32 %v3290, %v3294
    %vm3296 = vweird.f32 %v3288
    %vm3297 = vweird.f32 %v3290
    %vm3298 = vmor %vm3296, %vm3297
    %v3299 = vsel %vm3298, %v3290, %v3295
    %v3300 = vrsqrt.pop %v3289
    %v3301 = vmul.f32 %v3300, %v3289
    %v3302 = vmul.f32 %v3301, %v3300
    %v3303 = vmul.f32 0.5, %v3302
    %v3304 = vsub.f32 1.5, %v3303
    %v3305 = vmul.f32 %v3300, %v3304
    %vm3306 = vweird.f32 %v3289
    %vm3307 = vweird.f32 %v3300
    %vm3308 = vmor %vm3306, %vm3307
    %v3309 = vsel %vm3308, %v3300, %v3305
    %v3310 = vmul.f32 %v3276, %v3299
    %v3311 = vmul.f32 %v3277, %v3309
    %v3313 = vperm.slane %v3265, 0
    %v3315 = vmul.f32 %v3310, %v3313
    %v3316 = vmul.f32 %v3311, %v3313
    %v3318 = vperm.slane %v3267, 0
    %v3320 = vadd.f32 %v3315, %v3318
    %v3321 = vadd.f32 %v3316, %v3318
    %s3322 = scalar_lea.vmem %s35, 32
    %v3323 = vld [vmem:[%s3322] sm:$0xff]
    %v3324 = vld [vmem:[%s3322 + $0x8] sm:$0xff]
    %v3325 = vld [vmem:[%s3322 + $0x10] sm:$0xff]
    %v3326 = vld [vmem:[%s3322 + $0x18] sm:$0xff]
    %s3327 = scalar_lea.vmem %s37, 1
    %v3328 = vld [vmem:[%s3327] sm:$0x1]
    %v3330 = vperm.slane %v3328, 0
    %v3333 = vsel %vm238, %v3320, 0
    %v3336 = vsel %vm238, %v3321, 0
    %3338 = vmatpush.msra.mxu0 0.0
    %3339 = vmatpush.msra.mxu0 0.0
    %3340 = vmatpush.msra.mxu0 0.0
    %3341 = vmatpush.msra.mxu0 0.0
    %3342 = vmatpush.msra.mxu0 0.0
    %3343 = vmatpush.msra.mxu0 0.0
    %3344 = vmatpush.msra.mxu0 0.0
    %3345 = vmatpush.msra.mxu0 0.0
    %3346 = vmatpush.msra.mxu0 0.0
    %3347 = vmatpush.msra.mxu0 0.0
    %3348 = vmatpush.msra.mxu0 0.0
    %3349 = vmatpush.msra.mxu0 0.0
    %3350 = vmatpush.msra.mxu0 %v3326
    %3351 = vmatpush.msra.mxu0 %v3325
    %3352 = vmatpush.msra.mxu0 %v3324
    %3353 = vmatpush.msra.mxu0 %v3323
    %3354 = vmatmul.f32.gmra.mxu0 %v3333
    %v3355 = vpop.f32.mrf.mxu0
    %v3356 = vadd.f32 %v3330, %v3355
    %3357 = vmatmul.f32.gmra.mxu0 %v3336
    %v3358 = vpop.f32.mrf.mxu0
    %v3359 = vadd.f32 %v3330, %v3358
    %3360 = vdwg.mxu0
    %v3361 = vmax.f32 %v3356, 0.0
    %v3362 = vmax.f32 %v3359, 0.0
    %s3363 = scalar_lea.vmem %s39, 64
    %v3364 = vld [vmem:[%s3363] sm:$0xff]
    %v3365 = vld [vmem:[%s3363 + $0x8] sm:$0xff]
    %v3366 = vld [vmem:[%s3363 + $0x10] sm:$0xff]
    %v3367 = vld [vmem:[%s3363 + $0x18] sm:$0xff]
    %v3368 = vld [vmem:[%s3363 + $0x20] sm:$0xff]
    %v3369 = vld [vmem:[%s3363 + $0x28] sm:$0xff]
    %v3370 = vld [vmem:[%s3363 + $0x30] sm:$0xff]
    %v3371 = vld [vmem:[%s3363 + $0x38] sm:$0xff]
    %s3372 = scalar_lea.vmem %s41, 1
    %v3373 = vld [vmem:[%s3372] sm:$0x1]
    %v3375 = vperm.slane %v3373, 0
    %v3378 = vsel %vm1757, %v3361, 0
    %v3381 = vsel %vm1757, %v3362, 0
    %3383 = vmatpush.msra.mxu0 0.0
    %3384 = vmatpush.msra.mxu0 0.0
    %3385 = vmatpush.msra.mxu0 0.0
    %3386 = vmatpush.msra.mxu0 0.0
    %3387 = vmatpush.msra.mxu0 0.0
    %3388 = vmatpush.msra.mxu0 0.0
    %3389 = vmatpush.msra.mxu0 0.0
    %3390 = vmatpush.msra.mxu0 0.0
    %3391 = vmatpush.msra.mxu0 %v3371
    %3392 = vmatpush.msra.mxu0 %v3370
    %3393 = vmatpush.msra.mxu0 %v3369
    %3394 = vmatpush.msra.mxu0 %v3368
    %3395 = vmatpush.msra.mxu0 %v3367
    %3396 = vmatpush.msra.mxu0 %v3366
    %3397 = vmatpush.msra.mxu0 %v3365
    %3398 = vmatpush.msra.mxu0 %v3364
    %3399 = vmatmul.f32.gmra.mxu0 %v3378
    %v3400 = vpop.f32.mrf.mxu0
    %v3401 = vadd.f32 %v3375, %v3400
    %3402 = vmatmul.f32.gmra.mxu0 %v3381
    %v3403 = vpop.f32.mrf.mxu0
    %v3404 = vadd.f32 %v3375, %v3403
    %3405 = vdwg.mxu0
    %v3406 = vadd.f32 %v3320, %v3401
    %v3407 = vadd.f32 %v3321, %v3404
    %s3408 = scalar_lea.vmem %s43, 1
    %v3409 = vld [vmem:[%s3408] sm:$0x1]
    %s3410 = scalar_lea.vmem %s45, 1
    %v3411 = vld [vmem:[%s3410] sm:$0x1]
    %v3412 = vsel %vm238, %v3406, 0.0
    %3413 = vadd.xlane.f32.xlu0 %v3412
    %v3414 = vpop.xlane.xlu0 %3413
    %v3415 = vsel %vm238, %v3407, 0.0
    %3416 = vadd.xlane.f32.xlu0 %v3415
    %v3417 = vpop.xlane.xlu0 %3416
    %v3418 = vmul.f32 %v3414, %v1657
    %v3419 = vmul.f32 %v3417, %v1657
    %v3420 = vsub.f32 %v3406, %v3418
    %v3421 = vsub.f32 %v3407, %v3419
    %v3422 = vmul.f32 %v3420, %v3420
    %v3423 = vmul.f32 %v3421, %v3421
    %v3424 = vsel %vm238, %v3422, 0.0
    %3425 = vadd.xlane.f32.xlu0 %v3424
    %v3426 = vpop.xlane.xlu0 %3425
    %v3427 = vsel %vm238, %v3423, 0.0
    %3428 = vadd.xlane.f32.xlu0 %v3427
    %v3429 = vpop.xlane.xlu0 %3428
    %v3430 = vmul.f32 %v3426, %v1657
    %v3431 = vmul.f32 %v3429, %v1657
    %v3432 = vadd.f32 %v3430, 1e-05
    %v3433 = vadd.f32 %v3431, 1e-05
    %v3434 = vrsqrt.pop %v3432
    %v3435 = vmul.f32 %v3434, %v3432
    %v3436 = vmul.f32 %v3435, %v3434
    %v3437 = vmul.f32 0.5, %v3436
    %v3438 = vsub.f32 1.5, %v3437
    %v3439 = vmul.f32 %v3434, %v3438
    %vm3440 = vweird.f32 %v3432
    %vm3441 = vweird.f32 %v3434
    %vm3442 = vmor %vm3440, %vm3441
    %v3443 = vsel %vm3442, %v3434, %v3439
    %v3444 = vrsqrt.pop %v3433
    %v3445 = vmul.f32 %v3444, %v3433
    %v3446 = vmul.f32 %v3445, %v3444
    %v3447 = vmul.f32 0.5, %v3446
    %v3448 = vsub.f32 1.5, %v3447
    %v3449 = vmul.f32 %v3444, %v3448
    %vm3450 = vweird.f32 %v3433
    %vm3451 = vweird.f32 %v3444
    %vm3452 = vmor %vm3450, %vm3451
    %v3453 = vsel %vm3452, %v3444, %v3449
    %v3454 = vmul.f32 %v3420, %v3443
    %v3455 = vmul.f32 %v3421, %v3453
    %v3457 = vperm.slane %v3409, 0
    %v3459 = vmul.f32 %v3454, %v3457
    %v3460 = vmul.f32 %v3455, %v3457
    %v3462 = vperm.slane %v3411, 0
    %v3464 = vadd.f32 %v3459, %v3462
    %v3465 = vadd.f32 %v3460, %v3462
    %v3466 = vld [vmem:[%s9] sm:$0xff]
    %v3467 = vld [vmem:[%s9 + $0x8] sm:$0xff]
    %vm3468 = vcmp.eq.f32.partialorder %v3466, 0.0
    %vm3469 = vcmp.eq.f32.partialorder %v3467, 0.0
    %v3470 = vsel %vm3468, 1, 0
    %v3471 = vsel %vm3469, 1, 0
    %3472 = vset.pattern.permute.xlu0 0
    %3473 = vperm.xlu0 %3472, %v3470
    %v3474 = vpop.permute.xlu0 %3473
    %3475 = vset.pattern.permute.xlu0 0
    %3476 = vperm.xlu0 %3475, %v3471
    %v3477 = vpop.permute.xlu0 %3476
    %vm3478 = vcmp.eq.s32.totalorder %v3474, 1
    %vm3479 = vcmp.eq.s32.totalorder %v3477, 1
    %v3480 = vsel %vm3478, 0.0, %v3464
    %v3481 = vsel %vm3479, 0.0, %v3465
    %v3482 = vld [vmem:[%s47] sm:$0xff]
    %v3483 = vld [vmem:[%s47 + $0x8] sm:$0xff]
    %v3484 = vld [vmem:[%s47 + $0x10] sm:$0xff]
    %v3485 = vld [vmem:[%s47 + $0x18] sm:$0xff]
    %v3486 = vld [vmem:[%s49] sm:$0x1]
    %v3488 = vperm.slane %v3486, 0
    %v3491 = vsel %vm238, %v3480, 0
    %v3494 = vsel %vm238, %v3481, 0
    %3496 = vmatpush.msra.mxu0 0.0
    %3497 = vmatpush.msra.mxu0 0.0
    %3498 = vmatpush.msra.mxu0 0.0
    %3499 = vmatpush.msra.mxu0 0.0
    %3500 = vmatpush.msra.mxu0 0.0
    %3501 = vmatpush.msra.mxu0 0.0
    %3502 = vmatpush.msra.mxu0 0.0
    %3503 = vmatpush.msra.mxu0 0.0
    %3504 = vmatpush.msra.mxu0 0.0
    %3505 = vmatpush.msra.mxu0 0.0
    %3506 = vmatpush.msra.mxu0 0.0
    %3507 = vmatpush.msra.mxu0 0.0
    %3508 = vmatpush.msra.mxu0 %v3485
    %3509 = vmatpush.msra.mxu0 %v3484
    %3510 = vmatpush.msra.mxu0 %v3483
    %3511 = vmatpush.msra.mxu0 %v3482
    %3512 = vmatmul.f32.gmra.mxu0 %v3491
    %v3513 = vpop.f32.mrf.mxu0
    %v3514 = vadd.f32 %v3488, %v3513
    %3515 = vmatmul.f32.gmra.mxu0 %v3494
    %v3516 = vpop.f32.mrf.mxu0
    %v3517 = vadd.f32 %v3488, %v3516
    %3518 = vdwg.mxu0
    %vm3519 = vcmp.ge.f32.partialorder %v3514, 0.0
    %vm3520 = vcmp.ge.f32.partialorder %v3517, 0.0
    %v3521 = vmul.f32 %v3514, 0.01
    %v3522 = vmul.f32 %v3517, 0.01
    %v3523 = vsel %vm3519, %v3514, %v3521
    %v3524 = vsel %vm3520, %v3517, %v3522
    %v3525 = vld [vmem:[%s51] sm:$0xff]
    %v3526 = vld [vmem:[%s51 + $0x8] sm:$0xff]
    %v3527 = vld [vmem:[%s51 + $0x10] sm:$0xff]
    %v3528 = vld [vmem:[%s51 + $0x18] sm:$0xff]
    %3529 = vmatpush.msra.mxu0 0.0
    %3530 = vmatpush.msra.mxu0 0.0
    %3531 = vmatpush.msra.mxu0 0.0
    %3532 = vmatpush.msra.mxu0 0.0
    %3533 = vmatpush.msra.mxu0 0.0
    %3534 = vmatpush.msra.mxu0 0.0
    %3535 = vmatpush.msra.mxu0 0.0
    %3536 = vmatpush.msra.mxu0 0.0
    %3537 = vmatpush.msra.mxu0 0.0
    %3538 = vmatpush.msra.mxu0 0.0
    %3539 = vmatpush.msra.mxu0 0.0
    %3540 = vmatpush.msra.mxu0 0.0
    %3541 = vmatpush.msra.mxu0 %v3528
    %3542 = vmatpush.msra.mxu0 %v3527
    %3543 = vmatpush.msra.mxu0 %v3526
    %3544 = vmatpush.msra.mxu0 %v3525
    %3545 = vmatmul.f32.gmra.mxu0 %v3491
    %v3546 = vpop.f32.mrf.mxu0
    %v3547 = vadd.f32 0.0, %v3546
    %3548 = vmatmul.f32.gmra.mxu0 %v3494
    %v3549 = vpop.f32.mrf.mxu0
    %v3550 = vadd.f32 0.0, %v3549
    %3551 = vdwg.mxu0
    %v3552 = vadd.f32 %v3523, %v3547
    %v3553 = vadd.f32 %v3524, %v3550
    %v3554 = vld [vmem:[%s53] sm:$0xff]
    %v3555 = vld [vmem:[%s53 + $0x8] sm:$0xff]
    %v3556 = vld [vmem:[%s53 + $0x10] sm:$0xff]
    %v3557 = vld [vmem:[%s53 + $0x18] sm:$0xff]
    %v3558 = vld [vmem:[%s53 + $0x20] sm:$0xff]
    %v3559 = vld [vmem:[%s53 + $0x28] sm:$0xff]
    %v3560 = vld [vmem:[%s53 + $0x30] sm:$0xff]
    %v3561 = vld [vmem:[%s53 + $0x38] sm:$0xff]
    %v3562 = vld [vmem:[%s55] sm:$0x1]
    %v3564 = vperm.slane %v3562, 0
    %v3567 = vsel %vm1757, %v3552, 0
    %v3570 = vsel %vm1757, %v3553, 0
    %3572 = vmatpush.msra.mxu0 0.0
    %3573 = vmatpush.msra.mxu0 0.0
    %3574 = vmatpush.msra.mxu0 0.0
    %3575 = vmatpush.msra.mxu0 0.0
    %3576 = vmatpush.msra.mxu0 0.0
    %3577 = vmatpush.msra.mxu0 0.0
    %3578 = vmatpush.msra.mxu0 0.0
    %3579 = vmatpush.msra.mxu0 0.0
    %3580 = vmatpush.msra.mxu0 %v3561
    %3581 = vmatpush.msra.mxu0 %v3560
    %3582 = vmatpush.msra.mxu0 %v3559
    %3583 = vmatpush.msra.mxu0 %v3558
    %3584 = vmatpush.msra.mxu0 %v3557
    %3585 = vmatpush.msra.mxu0 %v3556
    %3586 = vmatpush.msra.mxu0 %v3555
    %3587 = vmatpush.msra.mxu0 %v3554
    %3588 = vmatmul.f32.gmra.mxu0 %v3567
    %v3589 = vpop.f32.mrf.mxu0
    %v3590 = vadd.f32 %v3564, %v3589
    %3591 = vmatmul.f32.gmra.mxu0 %v3570
    %v3592 = vpop.f32.mrf.mxu0
    %v3593 = vadd.f32 %v3564, %v3592
    %3594 = vdwg.mxu0
    %vm3595 = vcmp.ge.f32.partialorder %v3590, 0.0
    %vm3596 = vcmp.ge.f32.partialorder %v3593, 0.0
    %v3597 = vmul.f32 %v3590, 0.01
    %v3598 = vmul.f32 %v3593, 0.01
    %v3599 = vsel %vm3595, %v3590, %v3597
    %v3600 = vsel %vm3596, %v3593, %v3598
    %v3601 = vld [vmem:[%s57] sm:$0xff]
    %v3602 = vld [vmem:[%s57 + $0x8] sm:$0xff]
    %v3603 = vld [vmem:[%s57 + $0x10] sm:$0xff]
    %v3604 = vld [vmem:[%s57 + $0x18] sm:$0xff]
    %v3605 = vld [vmem:[%s57 + $0x20] sm:$0xff]
    %v3606 = vld [vmem:[%s57 + $0x28] sm:$0xff]
    %v3607 = vld [vmem:[%s57 + $0x30] sm:$0xff]
    %v3608 = vld [vmem:[%s57 + $0x38] sm:$0xff]
    %3609 = vmatpush.msra.mxu0 0.0
    %3610 = vmatpush.msra.mxu0 0.0
    %3611 = vmatpush.msra.mxu0 0.0
    %3612 = vmatpush.msra.mxu0 0.0
    %3613 = vmatpush.msra.mxu0 0.0
    %3614 = vmatpush.msra.mxu0 0.0
    %3615 = vmatpush.msra.mxu0 0.0
    %3616 = vmatpush.msra.mxu0 0.0
    %3617 = vmatpush.msra.mxu0 %v3608
    %3618 = vmatpush.msra.mxu0 %v3607
    %3619 = vmatpush.msra.mxu0 %v3606
    %3620 = vmatpush.msra.mxu0 %v3605
    %3621 = vmatpush.msra.mxu0 %v3604
    %3622 = vmatpush.msra.mxu0 %v3603
    %3623 = vmatpush.msra.mxu0 %v3602
    %3624 = vmatpush.msra.mxu0 %v3601
    %3625 = vmatmul.f32.gmra.mxu0 %v3567
    %v3626 = vpop.f32.mrf.mxu0
    %v3627 = vadd.f32 0.0, %v3626
    %3628 = vmatmul.f32.gmra.mxu0 %v3570
    %v3629 = vpop.f32.mrf.mxu0
    %v3630 = vadd.f32 0.0, %v3629
    %3631 = vdwg.mxu0
    %v3632 = vadd.f32 %v3599, %v3627
    %v3633 = vadd.f32 %v3600, %v3630
    %v3634 = vld [vmem:[%s59] sm:$0xff]
    %v3635 = vld [vmem:[%s59 + $0x8] sm:$0xff]
    %v3636 = vld [vmem:[%s59 + $0x10] sm:$0xff]
    %v3637 = vld [vmem:[%s59 + $0x18] sm:$0xff]
    %v3638 = vld [vmem:[%s61] sm:$0x1]
    %v3640 = vperm.slane %v3638, 0
    %v3643 = vsel %vm238, %v3632, 0
    %v3646 = vsel %vm238, %v3633, 0
    %3648 = vmatpush.msra.mxu0 0.0
    %3649 = vmatpush.msra.mxu0 0.0
    %3650 = vmatpush.msra.mxu0 0.0
    %3651 = vmatpush.msra.mxu0 0.0
    %3652 = vmatpush.msra.mxu0 0.0
    %3653 = vmatpush.msra.mxu0 0.0
    %3654 = vmatpush.msra.mxu0 0.0
    %3655 = vmatpush.msra.mxu0 0.0
    %3656 = vmatpush.msra.mxu0 0.0
    %3657 = vmatpush.msra.mxu0 0.0
    %3658 = vmatpush.msra.mxu0 0.0
    %3659 = vmatpush.msra.mxu0 0.0
    %3660 = vmatpush.msra.mxu0 %v3637
    %3661 = vmatpush.msra.mxu0 %v3636
    %3662 = vmatpush.msra.mxu0 %v3635
    %3663 = vmatpush.msra.mxu0 %v3634
    %3664 = vmatmul.f32.gmra.mxu0 %v3643
    %v3665 = vpop.f32.mrf.mxu0
    %v3666 = vadd.f32 %v3640, %v3665
    %3667 = vmatmul.f32.gmra.mxu0 %v3646
    %v3668 = vpop.f32.mrf.mxu0
    %v3669 = vadd.f32 %v3640, %v3668
    %3670 = vdwg.mxu0
    %vm3671 = vcmp.ge.f32.partialorder %v3666, 0.0
    %vm3672 = vcmp.ge.f32.partialorder %v3669, 0.0
    %v3673 = vmul.f32 %v3666, 0.01
    %v3674 = vmul.f32 %v3669, 0.01
    %v3675 = vsel %vm3671, %v3666, %v3673
    %v3676 = vsel %vm3672, %v3669, %v3674
    %v3677 = vld [vmem:[%s63] sm:$0xff]
    %v3678 = vld [vmem:[%s63 + $0x8] sm:$0xff]
    %v3679 = vld [vmem:[%s63 + $0x10] sm:$0xff]
    %v3680 = vld [vmem:[%s63 + $0x18] sm:$0xff]
    %3681 = vmatpush.msra.mxu0 0.0
    %3682 = vmatpush.msra.mxu0 0.0
    %3683 = vmatpush.msra.mxu0 0.0
    %3684 = vmatpush.msra.mxu0 0.0
    %3685 = vmatpush.msra.mxu0 0.0
    %3686 = vmatpush.msra.mxu0 0.0
    %3687 = vmatpush.msra.mxu0 0.0
    %3688 = vmatpush.msra.mxu0 0.0
    %3689 = vmatpush.msra.mxu0 0.0
    %3690 = vmatpush.msra.mxu0 0.0
    %3691 = vmatpush.msra.mxu0 0.0
    %3692 = vmatpush.msra.mxu0 0.0
    %3693 = vmatpush.msra.mxu0 %v3680
    %3694 = vmatpush.msra.mxu0 %v3679
    %3695 = vmatpush.msra.mxu0 %v3678
    %3696 = vmatpush.msra.mxu0 %v3677
    %3697 = vmatmul.f32.gmra.mxu0 %v3643
    %v3698 = vpop.f32.mrf.mxu0
    %v3699 = vadd.f32 0.0, %v3698
    %3700 = vmatmul.f32.gmra.mxu0 %v3646
    %v3701 = vpop.f32.mrf.mxu0
    %v3702 = vadd.f32 0.0, %v3701
    %3703 = vdwg.mxu0
    %v3704 = vadd.f32 %v3675, %v3699
    %v3705 = vadd.f32 %v3676, %v3702
    %v3706 = vld [vmem:[%s65] sm:$0xff]
    %v3707 = vld [vmem:[%s65 + $0x8] sm:$0xff]
    %v3708 = vld [vmem:[#allocation4] sm:$0x1]
    %v3710 = vperm.slane %v3708, 0
    %v3713 = vsel %vm191, %v3704, 0
    %v3716 = vsel %vm191, %v3705, 0
    %3718 = vmatpush.msra.mxu0 0.0
    %3719 = vmatpush.msra.mxu0 0.0
    %3720 = vmatpush.msra.mxu0 0.0
    %3721 = vmatpush.msra.mxu0 0.0
    %3722 = vmatpush.msra.mxu0 0.0
    %3723 = vmatpush.msra.mxu0 0.0
    %3724 = vmatpush.msra.mxu0 0.0
    %3725 = vmatpush.msra.mxu0 0.0
    %3726 = vmatpush.msra.mxu0 0.0
    %3727 = vmatpush.msra.mxu0 0.0
    %3728 = vmatpush.msra.mxu0 0.0
    %3729 = vmatpush.msra.mxu0 0.0
    %3730 = vmatpush.msra.mxu0 0.0
    %3731 = vmatpush.msra.mxu0 0.0
    %3732 = vmatpush.msra.mxu0 %v3707
    %3733 = vmatpush.msra.mxu0 %v3706
    %3734 = vmatmul.f32.gmra.mxu0 %v3713
    %v3735 = vpop.f32.mrf.mxu0
    %v3736 = vadd.f32 %v3710, %v3735
    %3737 = vmatmul.f32.gmra.mxu0 %v3716
    %v3738 = vpop.f32.mrf.mxu0
    %v3739 = vadd.f32 %v3710, %v3738
    %3740 = vdwg.mxu0
    %vm3741 = vcmp.ge.f32.partialorder %v3736, 0.0
    %vm3742 = vcmp.ge.f32.partialorder %v3739, 0.0
    %v3743 = vmul.f32 %v3736, 0.01
    %v3744 = vmul.f32 %v3739, 0.01
    %v3745 = vsel %vm3741, %v3736, %v3743
    %v3746 = vsel %vm3742, %v3739, %v3744
    %v3747 = vld [vmem:[%s69] sm:$0xff]
    %v3748 = vld [vmem:[%s69 + $0x8] sm:$0xff]
    %3749 = vmatpush.msra.mxu0 0.0
    %3750 = vmatpush.msra.mxu0 0.0
    %3751 = vmatpush.msra.mxu0 0.0
    %3752 = vmatpush.msra.mxu0 0.0
    %3753 = vmatpush.msra.mxu0 0.0
    %3754 = vmatpush.msra.mxu0 0.0
    %3755 = vmatpush.msra.mxu0 0.0
    %3756 = vmatpush.msra.mxu0 0.0
    %3757 = vmatpush.msra.mxu0 0.0
    %3758 = vmatpush.msra.mxu0 0.0
    %3759 = vmatpush.msra.mxu0 0.0
    %3760 = vmatpush.msra.mxu0 0.0
    %3761 = vmatpush.msra.mxu0 0.0
    %3762 = vmatpush.msra.mxu0 0.0
    %3763 = vmatpush.msra.mxu0 %v3748
    %3764 = vmatpush.msra.mxu0 %v3747
    %3765 = vmatmul.f32.gmra.mxu0 %v3713
    %v3766 = vpop.f32.mrf.mxu0
    %v3767 = vadd.f32 0.0, %v3766
    %3768 = vmatmul.f32.gmra.mxu0 %v3716
    %v3769 = vpop.f32.mrf.mxu0
    %v3770 = vadd.f32 0.0, %v3769
    %3771 = vdwg.mxu0
    %v3772 = vadd.f32 %v3745, %v3767
    %v3773 = vadd.f32 %v3746, %v3770
    %v3774 = vld [vmem:[%s71] sm:$0xff]
    %v3775 = vld [vmem:[#allocation6] sm:$0x1]
    %v3777 = vperm.slane %v3775, 0
    %v3780 = vsel %vm318, %v3772, 0
    %v3783 = vsel %vm318, %v3773, 0
    %3785 = vmatpush.msra.mxu0 0.0
    %3786 = vmatpush.msra.mxu0 0.0
    %3787 = vmatpush.msra.mxu0 0.0
    %3788 = vmatpush.msra.mxu0 0.0
    %3789 = vmatpush.msra.mxu0 0.0
    %3790 = vmatpush.msra.mxu0 0.0
    %3791 = vmatpush.msra.mxu0 0.0
    %3792 = vmatpush.msra.mxu0 0.0
    %3793 = vmatpush.msra.mxu0 0.0
    %3794 = vmatpush.msra.mxu0 0.0
    %3795 = vmatpush.msra.mxu0 0.0
    %3796 = vmatpush.msra.mxu0 0.0
    %3797 = vmatpush.msra.mxu0 0.0
    %3798 = vmatpush.msra.mxu0 0.0
    %3799 = vmatpush.msra.mxu0 0.0
    %3800 = vmatpush.msra.mxu0 %v3774
    %3801 = vmatmul.f32.gmra.mxu0 %v3780
    %v3802 = vpop.f32.mrf.mxu0
    %v3803 = vadd.f32 %v3777, %v3802
    %3804 = vmatmul.f32.gmra.mxu0 %v3783
    %v3805 = vpop.f32.mrf.mxu0
    %v3806 = vadd.f32 %v3777, %v3805
    %3807 = vdwg.mxu0
    %vm3808 = vcmask 23552
    %3809 = vst.msk [vmem:[%s75] sm:$0xff] %vm3808, %v3803
    %3810 = vst.msk [vmem:[%s75 + $0x8] sm:$0xff] %vm3808, %v3806
    // Predicated region
    $region158: #{crabnet_forward.1} parent=1 // pred_check
      _
    $region159: #{crabnet_forward.1} parent=1 // pred_check_branch
      %3812 = sbr.rel (0) target = $region161
    $region160: #{crabnet_forward.1} parent=1 // pred_region
      _
    $region161: #{crabnet_forward.1} parent=1 // pred_fallthru
      _
    // Predicated region
    $region162: #{crabnet_forward.1} parent=1 // pred_check
      _
    $region163: #{crabnet_forward.1} parent=1 // pred_check_branch
      %3814 = sbr.rel (0) target = $region165
    $region164: #{crabnet_forward.1} parent=1 // pred_region
      _
    $region165: #{crabnet_forward.1} parent=1 // pred_fallthru
      _
    %3815 = vsyncpa [#allocation5], 1
    %3816 = vsyncpa [#allocation7], 1

</llo_original>
